<compile_context>
chip_gen: v7x
topology: tpu7x:2x2x1
jax: 0.10.0
libtpu: 0.0.40
codegen_flags: <defaults>
</compile_context>

<pallas_src>
import functools
import math

import jax
import jax.numpy as jnp
from jax.experimental import pallas as pl
from jax.experimental.pallas import tpu as pltpu


# ----------------------------- kernel helpers --------------------------------
def _silu(x):
    return x * (1.0 / (1.0 + jnp.exp(-x)))


def _softplus(x):
    # numerically safe softplus
    return jnp.where(x > 20.0, x, jnp.log(1.0 + jnp.exp(jnp.minimum(x, 20.0))))


# ------------------------------ Pallas kernel --------------------------------
def _mamba_kernel(hs_ref, w_in_ref, conv_w_ref, conv_b_ref, w_bc_ref, w_xdt_ref,
                  w_dt_ref, dt_bias_ref, a_ref, d_skip_ref, w_out_ref,
                  out_ref,
                  delta_scr, dxd_scr, b_scr, c_scr, y_scr, h_scr, carry_scr,
                  *, scan_chunk):
    l_chunk, d_inner = delta_scr.shape
    d_state = h_scr.shape[0]
    d_conv = conv_w_ref.shape[0]
    n_scan_chunks = l_chunk // scan_chunk
    lane_w = min(128, d_inner)

    # Reset carried state at the first L-chunk of every sequence.
    @pl.when(pl.program_id(1) == 0)
    def _():
        h_scr[...] = jnp.zeros_like(h_scr)
        carry_scr[...] = jnp.zeros_like(carry_scr)

    hs = hs_ref[0]                                            # (Lc, D) bf16

    # ---- fused in_proj: one MXU pass for [x | z] ----
    xz = jnp.dot(hs, w_in_ref[...],
                 preferred_element_type=jnp.float32)          # (Lc, 2*d_inner)
    x = xz[:, :d_inner]
    z = xz[:, d_inner:]

    # ---- causal depthwise conv1d with (d_conv-1)-row halo across L-chunks ----
    x_ext = jnp.concatenate([carry_scr[...], x], axis=0)      # (Lc+d_conv-1, d_inner)
    xc = conv_b_ref[...]
    for k in range(d_conv):                                   # static, d_conv=4
        xc = xc + x_ext[k:k + l_chunk] * conv_w_ref[k:k + 1, :]
    carry_scr[...] = x_ext[l_chunk:]                          # halo for next chunk
    x_act = _silu(xc)                                         # (Lc, d_inner) f32

    # ---- B / C projection (bf16 MXU); dt path kept f32 (tiny low-rank matmuls) ----
    bc = jnp.dot(x_act.astype(jnp.bfloat16), w_bc_ref[...],
                 preferred_element_type=jnp.float32)          # (Lc, 2*d_state)
    b_scr[...] = bc[:, :d_state]
    c_scr[...] = bc[:, d_state:]

    dt_low = jnp.dot(x_act, w_xdt_ref[...],
                     preferred_element_type=jnp.float32)      # (Lc, dt_rank) f32
    dt = jnp.dot(dt_low, w_dt_ref[...],
                 preferred_element_type=jnp.float32)          # (Lc, d_inner) f32
    delta = _softplus(dt + dt_bias_ref[...])
    delta_scr[...] = delta
    dxd_scr[...] = delta * x_act

    a_neg = a_ref[...]                                        # (d_state, d_inner) = -exp(A_log)
    ones_lane = jnp.ones((1, 1, lane_w), jnp.float32)

    # ---- chunked selective scan: no (T,N,d_inner) temps, fused per-step C-reduce ----
    def scan_chunk_body(ci, carry):
        off = pl.multiple_of(ci * scan_chunk, scan_chunk)
        delta_c = delta_scr[pl.ds(off, scan_chunk), :]        # (T, d_inner)
        dxd_c = dxd_scr[pl.ds(off, scan_chunk), :]            # (T, d_inner)
        b_c = b_scr[pl.ds(off, scan_chunk), :]                # (T, d_state)
        c_c = c_scr[pl.ds(off, scan_chunk), :]                # (T, d_state)
        # Tiny (T, N, 128) relayout blocks: move B / C values onto the sublane
        # axis once per chunk so the per-step use is a cheap (N,1) lane-broadcast.
        bS = b_c[:, :, None] * ones_lane                      # (T, N, 128)
        cS = c_c[:, :, None] * ones_lane                      # (T, N, 128)

        h = h_scr[...]                                        # (N, d_inner)
        y_rows = []
        for t in range(scan_chunk):    # static unroll: EUP exp overlaps VPU chain
            dA_t = jnp.exp(delta_c[t:t + 1, :] * a_neg)       # (N, d_inner)  EUP
            dBu_t = bS[t][:, 0:1] * dxd_c[t:t + 1, :]         # (N, d_inner)  VPU
            h = h * dA_t + dBu_t                              # serial FMA chain
            y_rows.append(jnp.sum(h * cS[t][:, 0:1],          # fused C-reduce (XLU)
                                  axis=0, keepdims=True))     # (1, d_inner)
        h_scr[...] = h
        y_scr[pl.ds(off, scan_chunk), :] = jnp.concatenate(y_rows, axis=0)
        return carry

    jax.lax.fori_loop(0, n_scan_chunks, scan_chunk_body, 0)

    # ---- skip, gate, out_proj ----
    y = y_scr[...] + x_act * d_skip_ref[...]
    y = y * _silu(z)
    out = jnp.dot(y.astype(jnp.bfloat16), w_out_ref[...],
                  preferred_element_type=jnp.float32)         # (Lc, D)
    out_ref[0] = out.astype(out_ref.dtype)


# ------------------------------ wrapper ---------------------------------------
def mamba_forward_pallas(hidden_states, params, l_chunk=None, scan_chunk=8):
    B, L, D = hidden_states.shape
    d_inner = params['D'].shape[0]
    d_state = params['A_log'].shape[1]
    dt_rank = params['dt_proj_w'].shape[1]
    d_conv = params['conv_w'].shape[-1]

    if l_chunk is None:
        l_chunk = min(128, L)
    l_chunk = min(l_chunk, L)
    scan_chunk = min(scan_chunk, l_chunk)
    assert L % l_chunk == 0, "seqlen must be a multiple of l_chunk"
    assert l_chunk % scan_chunk == 0
    assert l_chunk % 8 == 0 and scan_chunk % 8 == 0
    assert l_chunk >= d_conv - 1

    f32, bf16 = jnp.float32, jnp.bfloat16
    w_in_t = params['in_proj_w'].astype(f32).T.astype(bf16)       # (D, 2*d_inner)
    conv_w = params['conv_w'][:, 0, :].T.astype(f32)              # (d_conv, d_inner)
    conv_b = params['conv_b'][None, :].astype(f32)                # (1, d_inner)
    xp = params['x_proj_w'].astype(f32)                           # (dt_rank+2N, d_inner)
    w_xdt_t = xp[:dt_rank].T                                      # (d_inner, dt_rank) f32
    w_bc_t = xp[dt_rank:].T.astype(bf16)                          # (d_inner, 2N) bf16
    w_dt_t = params['dt_proj_w'].astype(f32).T                    # (dt_rank, d_inner)
    dt_bias = params['dt_proj_b'][None, :].astype(f32)            # (1, d_inner)
    a_neg = (-jnp.exp(params['A_log'].astype(f32))).T             # (d_state, d_inner)
    d_skip = params['D'][None, :].astype(f32)                     # (1, d_inner)
    w_out_t = params['out_proj_w'].astype(f32).T.astype(bf16)     # (d_inner, D)

    weights = [w_in_t, conv_w, conv_b, w_bc_t, w_xdt_t, w_dt_t, dt_bias,
               a_neg, d_skip, w_out_t]

    scratch_shapes = [
        pltpu.VMEM((l_chunk, d_inner), f32),        # delta
        pltpu.VMEM((l_chunk, d_inner), f32),        # delta * x_act
        pltpu.VMEM((l_chunk, d_state), f32),        # B
        pltpu.VMEM((l_chunk, d_state), f32),        # C
        pltpu.VMEM((l_chunk, d_inner), f32),        # y (scan output)
        pltpu.VMEM((d_state, d_inner), f32),        # h carried across L-chunks
        pltpu.VMEM((d_conv - 1, d_inner), f32),     # conv halo carried across L-chunks
    ]

    kernel = functools.partial(_mamba_kernel, scan_chunk=scan_chunk)

    def build(use_buffered):
        def wspec(shape):
            nd = len(shape)
            imap = (lambda b, l, _nd=nd: (0,) * _nd)
            if use_buffered:
                # grid-invariant weights: no need to double-buffer
                return pl.BlockSpec(shape, imap, pipeline_mode=pl.Buffered(1))
            return pl.BlockSpec(shape, imap)

        in_specs = [pl.BlockSpec((1, l_chunk, D), lambda b, l: (b, l, 0))]
        in_specs += [wspec(w.shape) for w in weights]
        out_spec = pl.BlockSpec((1, l_chunk, D), lambda b, l: (b, l, 0))

        return pl.pallas_call(
            kernel,
            out_shape=jax.ShapeDtypeStruct((B, L, D), jnp.float32),
            grid=(B, L // l_chunk),
            in_specs=in_specs,
            out_specs=out_spec,
            scratch_shapes=scratch_shapes,
            compiler_params=pltpu.CompilerParams(
                dimension_semantics=("parallel", "arbitrary"),
                vmem_limit_bytes=48 * 1024 * 1024),
        )

    args = (hidden_states.astype(bf16), *weights)
    if hasattr(pl, "Buffered"):
        try:
            return build(True)(*args)
        except Exception:
            pass  # pipeline_mode unsupported in this JAX build -> default buffering
    return build(False)(*args)


# -------------------------- deterministic params ------------------------------
def init_params(key, d_model, d_state=16, d_conv=4, expand=2,
                dt_min=0.001, dt_max=0.1, dt_init_floor=1e-4):
    d_inner = int(expand * d_model)
    dt_rank = math.ceil(d_model / 16)
    ks = jax.random.split(key, 7)

    def uni(k, shape, bound):
        return jax.random.uniform(k, shape, jnp.float32, -bound, bound)

    in_proj_w = uni(ks[0], (2 * d_inner, d_model), 1.0 / math.sqrt(d_model))
    conv_w = uni(ks[1], (d_inner, 1, d_conv), 1.0 / math.sqrt(d_conv))
    conv_b = uni(ks[2], (d_inner,), 1.0 / math.sqrt(d_conv))
    x_proj_w = uni(ks[3], (dt_rank + 2 * d_state, d_inner), 1.0 / math.sqrt(d_inner))
    dt_init_std = dt_rank ** -0.5
    dt_proj_w = uni(ks[4], (d_inner, dt_rank), dt_init_std)
    dt = jnp.exp(jax.random.uniform(ks[5], (d_inner,), jnp.float32) *
                 (math.log(dt_max) - math.log(dt_min)) + math.log(dt_min))
    dt = jnp.maximum(dt, dt_init_floor)
    inv_dt = dt + jnp.log(-jnp.expm1(-dt))                    # dt_proj bias
    A = jnp.tile(jnp.arange(1, d_state + 1, dtype=jnp.float32)[None, :], (d_inner, 1))
    A_log = jnp.log(A)
    D = jnp.ones((d_inner,), jnp.float32)
    out_proj_w = uni(ks[6], (d_model, d_inner), 1.0 / math.sqrt(d_inner))
    return dict(in_proj_w=in_proj_w, conv_w=conv_w, conv_b=conv_b,
                x_proj_w=x_proj_w, dt_proj_w=dt_proj_w, dt_proj_b=inv_dt,
                A_log=A_log, D=D, out_proj_w=out_proj_w)


# ---------------------------- pure-JAX reference ------------------------------
def mamba_forward_ref(hidden_states, params):
    B, L, _ = hidden_states.shape
    d_inner = params['D'].shape[0]
    d_state = params['A_log'].shape[1]
    d_conv = params['conv_w'].shape[-1]
    dt_rank = params['dt_proj_w'].shape[1]
    hs = hidden_states.astype(jnp.float32)

    xz = hs @ params['in_proj_w'].T
    x, z = xz[..., :d_inner], xz[..., d_inner:]
    conv_w = params['conv_w'][:, 0, :]                        # (d_inner, d_conv)
    xpad = jnp.pad(x, ((0, 0), (d_conv - 1, 0), (0, 0)))
    xc = params['conv_b'][None, None, :]
    for k in range(d_conv):
        xc = xc + xpad[:, k:k + L, :] * conv_w[:, k][None, None, :]
    x_act = xc * jax.nn.sigmoid(xc)

    x_dbl = x_act @ params['x_proj_w'].T
    dt_r = x_dbl[..., :dt_rank]
    Bm = x_dbl[..., dt_rank:dt_rank + d_state]
    Cm = x_dbl[..., dt_rank + d_state:]
    dt = dt_r @ params['dt_proj_w'].T
    delta = jax.nn.softplus(dt + params['dt_proj_b'][None, None, :])
    A = -jnp.exp(params['A_log'])                             # (d_inner, d_state)

    def step(h, inp):
        delta_t, x_t, B_t, C_t = inp
        dA = jnp.exp(delta_t[..., None] * A[None])
        dBu = delta_t[..., None] * x_t[..., None] * B_t[:, None, :]
        h = h * dA + dBu
        return h, jnp.sum(h * C_t[:, None, :], axis=-1)

    h0 = jnp.zeros((B, d_inner, d_state), jnp.float32)
    xs = (jnp.moveaxis(delta, 1, 0), jnp.moveaxis(x_act, 1, 0),
          jnp.moveaxis(Bm, 1, 0), jnp.moveaxis(Cm, 1, 0))
    _, ys = jax.lax.scan(step, h0, xs)
    y = jnp.moveaxis(ys, 0, 1)
    y = y + x_act * params['D'][None, None, :]
    y = y * (z * jax.nn.sigmoid(z))
    return y @ params['out_proj_w'].T


# ---------------------------------- main --------------------------------------
if __name__ == "__main__":
    key = jax.random.PRNGKey(0)
    k_param, k_x = jax.random.split(key)
    d_model = 64                    # -> d_inner=128, dt_rank=4, d_state=16, d_conv=4
    B, L = 2, 16                    # L=16 with l_chunk=8 exercises the h / conv-halo carry
    params = init_params(k_param, d_model)
    hidden_states = jax.random.normal(k_x, (B, L, d_model), jnp.float32).astype(jnp.bfloat16)

    out = mamba_forward_pallas(hidden_states, params, l_chunk=8, scan_chunk=8)
    out = jax.block_until_ready(out)

    ref = mamba_forward_ref(hidden_states.astype(jnp.float32), params)
    assert out.shape == (B, L, d_model)
    assert bool(jnp.all(jnp.isfinite(out)))
    max_err = float(jnp.max(jnp.abs(out - ref)))
    # bf16 MXU operands (f32 accumulate) vs. pure-f32 reference -> ~1e-2-level tolerance.
    assert max_err < 2e-2, f"mismatch vs reference: {max_err}"
    print("KERNEL_OK")
</pallas_src>

<mosaic_0001>
module attributes {stable_mosaic.version = 11 : i64} {
  func.func @_mamba_kernel(%arg0: i32, %arg1: i32, %arg2: memref<1x8x64xbf16, #tpu.memory_space<vmem>>, %arg3: memref<64x256xbf16, #tpu.memory_space<vmem>>, %arg4: memref<4x128xf32, #tpu.memory_space<vmem>>, %arg5: memref<1x128xf32, #tpu.memory_space<vmem>>, %arg6: memref<128x32xbf16, #tpu.memory_space<vmem>>, %arg7: memref<128x4xf32, #tpu.memory_space<vmem>>, %arg8: memref<4x128xf32, #tpu.memory_space<vmem>>, %arg9: memref<1x128xf32, #tpu.memory_space<vmem>>, %arg10: memref<16x128xf32, #tpu.memory_space<vmem>>, %arg11: memref<1x128xf32, #tpu.memory_space<vmem>>, %arg12: memref<128x64xbf16, #tpu.memory_space<vmem>>, %arg13: memref<1x8x64xf32, #tpu.memory_space<vmem>>, %arg14: memref<8x128xf32, #tpu.memory_space<vmem>>, %arg15: memref<8x128xf32, #tpu.memory_space<vmem>>, %arg16: memref<8x16xf32, #tpu.memory_space<vmem>>, %arg17: memref<8x16xf32, #tpu.memory_space<vmem>>, %arg18: memref<8x128xf32, #tpu.memory_space<vmem>>, %arg19: memref<16x128xf32, #tpu.memory_space<vmem>>, %arg20: memref<3x128xf32, #tpu.memory_space<vmem>>) attributes {dimension_semantics = [#tpu.dimension_semantics<parallel>, #tpu.dimension_semantics<arbitrary>], iteration_bounds = array<i64: 2, 2>, scalar_prefetch = 0 : i64, scratch_operands = 7 : i64, tpu.core_type = #tpu.core_type<tc>, window_params = [{transform_indices = @transform_0, window_bounds = array<i64: 1, 8, 64>}, {pipeline_mode = #tpu.pipeline_mode<synchronous>, transform_indices = @transform_1, window_bounds = array<i64: 64, 256>}, {pipeline_mode = #tpu.pipeline_mode<synchronous>, transform_indices = @transform_2, window_bounds = array<i64: 4, 128>}, {pipeline_mode = #tpu.pipeline_mode<synchronous>, transform_indices = @transform_3, window_bounds = array<i64: 1, 128>}, {pipeline_mode = #tpu.pipeline_mode<synchronous>, transform_indices = @transform_4, window_bounds = array<i64: 128, 32>}, {pipeline_mode = #tpu.pipeline_mode<synchronous>, transform_indices = @transform_5, window_bounds = array<i64: 128, 4>}, {pipeline_mode = #tpu.pipeline_mode<synchronous>, transform_indices = @transform_6, window_bounds = array<i64: 4, 128>}, {pipeline_mode = #tpu.pipeline_mode<synchronous>, transform_indices = @transform_7, window_bounds = array<i64: 1, 128>}, {pipeline_mode = #tpu.pipeline_mode<synchronous>, transform_indices = @transform_8, window_bounds = array<i64: 16, 128>}, {pipeline_mode = #tpu.pipeline_mode<synchronous>, transform_indices = @transform_9, window_bounds = array<i64: 1, 128>}, {pipeline_mode = #tpu.pipeline_mode<synchronous>, transform_indices = @transform_10, window_bounds = array<i64: 128, 64>}, {transform_indices = @transform_11, window_bounds = array<i64: 1, 8, 64>}]} {
    %c0_i32 = arith.constant 0 : i32
    %0 = arith.cmpi eq, %arg1, %c0_i32 : i32
    %1 = arith.extui %0 : i1 to i32
    %c0_i32_0 = arith.constant 0 : i32
    %2 = arith.cmpi ne, %1, %c0_i32_0 : i32
    scf.if %2 {
      %cst_75 = arith.constant 0.000000e+00 : f32
      %274 = vector.broadcast %cst_75 : f32 to vector<16x128xf32>
      %c0_76 = arith.constant 0 : index
      %c0_77 = arith.constant 0 : index
      %275 = vector.load %arg19[%c0_76, %c0_77] : memref<16x128xf32, #tpu.memory_space<vmem>>, vector<16x128xf32>
      tpu.vector_store %arg19[%c0_76, %c0_77], %274 {strides = array<i32>} : memref<16x128xf32, #tpu.memory_space<vmem>>, vector<16x128xf32>,
      %cst_78 = arith.constant 0.000000e+00 : f32
      %276 = vector.broadcast %cst_78 : f32 to vector<3x128xf32>
      %c0_79 = arith.constant 0 : index
      %c0_80 = arith.constant 0 : index
      %277 = vector.load %arg20[%c0_79, %c0_80] : memref<3x128xf32, #tpu.memory_space<vmem>>, vector<3x128xf32>
      tpu.vector_store %arg20[%c0_79, %c0_80], %276 {strides = array<i32>} : memref<3x128xf32, #tpu.memory_space<vmem>>, vector<3x128xf32>,
    } else {
    }
    %c0 = arith.constant 0 : index
    %c0_1 = arith.constant 0 : index
    %c0_2 = arith.constant 0 : index
    %3 = vector.load %arg2[%c0, %c0_1, %c0_2] : memref<1x8x64xbf16, #tpu.memory_space<vmem>>, vector<1x8x64xbf16>
    %4 = vector.shape_cast %3 : vector<1x8x64xbf16> to vector<8x64xbf16>
    %c0_3 = arith.constant 0 : index
    %c0_4 = arith.constant 0 : index
    %5 = vector.load %arg3[%c0_3, %c0_4] : memref<64x256xbf16, #tpu.memory_space<vmem>>, vector<64x256xbf16>
    %cst = arith.constant dense<0.000000e+00> : vector<8x256xf32>
    %6 = tpu.matmul %4, %5, %cst {dimension_numbers = #tpu.dot_dimension_numbers<[1], [0], [0], [1], [0, 0, 1, 1], [], []>} : vector<8x64xbf16>, vector<64x256xbf16>, vector<8x256xf32> -> vector<8x256xf32>
    %7 = vector.extract_strided_slice %6 {offsets = [0, 0], sizes = [8, 128], strides = [1, 1]} : vector<8x256xf32> to vector<8x128xf32>
    %8 = vector.extract_strided_slice %6 {offsets = [0, 128], sizes = [8, 128], strides = [1, 1]} : vector<8x256xf32> to vector<8x128xf32>
    %c0_5 = arith.constant 0 : index
    %c0_6 = arith.constant 0 : index
    %9 = vector.load %arg20[%c0_5, %c0_6] : memref<3x128xf32, #tpu.memory_space<vmem>>, vector<3x128xf32>
    %10 = tpu.concatenate %9, %7 in 0 : vector<3x128xf32>, vector<8x128xf32> -> vector<11x128xf32>
    %c0_7 = arith.constant 0 : index
    %c0_8 = arith.constant 0 : index
    %11 = vector.load %arg5[%c0_7, %c0_8] : memref<1x128xf32, #tpu.memory_space<vmem>>, vector<1x128xf32>
    %12 = vector.extract_strided_slice %10 {offsets = [0, 0], sizes = [8, 128], strides = [1, 1]} : vector<11x128xf32> to vector<8x128xf32>
    %c0_9 = arith.constant 0 : index
    %c0_10 = arith.constant 0 : index
    %13 = vector.load %arg4[%c0_9, %c0_10] : memref<4x128xf32, #tpu.memory_space<vmem>>, vector<1x128xf32>
    %14 = vector.broadcast %13 : vector<1x128xf32> to vector<8x128xf32>
    %15 = arith.mulf %12, %14 : vector<8x128xf32>
    %16 = vector.broadcast %11 : vector<1x128xf32> to vector<8x128xf32>
    %17 = arith.addf %16, %15 : vector<8x128xf32>
    %18 = vector.extract_strided_slice %10 {offsets = [1, 0], sizes = [8, 128], strides = [1, 1]} : vector<11x128xf32> to vector<8x128xf32>
    %c1 = arith.constant 1 : index
    %c0_11 = arith.constant 0 : index
    %19 = vector.load %arg4[%c1, %c0_11] : memref<4x128xf32, #tpu.memory_space<vmem>>, vector<1x128xf32>
    %20 = vector.broadcast %19 : vector<1x128xf32> to vector<8x128xf32>
    %21 = arith.mulf %18, %20 : vector<8x128xf32>
    %22 = arith.addf %17, %21 : vector<8x128xf32>
    %23 = vector.extract_strided_slice %10 {offsets = [2, 0], sizes = [8, 128], strides = [1, 1]} : vector<11x128xf32> to vector<8x128xf32>
    %c2 = arith.constant 2 : index
    %c0_12 = arith.constant 0 : index
    %24 = vector.load %arg4[%c2, %c0_12] : memref<4x128xf32, #tpu.memory_space<vmem>>, vector<1x128xf32>
    %25 = vector.broadcast %24 : vector<1x128xf32> to vector<8x128xf32>
    %26 = arith.mulf %23, %25 : vector<8x128xf32>
    %27 = arith.addf %22, %26 : vector<8x128xf32>
    %28 = vector.extract_strided_slice %10 {offsets = [3, 0], sizes = [8, 128], strides = [1, 1]} : vector<11x128xf32> to vector<8x128xf32>
    %c3 = arith.constant 3 : index
    %c0_13 = arith.constant 0 : index
    %29 = vector.load %arg4[%c3, %c0_13] : memref<4x128xf32, #tpu.memory_space<vmem>>, vector<1x128xf32>
    %30 = vector.broadcast %29 : vector<1x128xf32> to vector<8x128xf32>
    %31 = arith.mulf %28, %30 : vector<8x128xf32>
    %32 = arith.addf %27, %31 : vector<8x128xf32>
    %33 = vector.extract_strided_slice %10 {offsets = [8, 0], sizes = [3, 128], strides = [1, 1]} : vector<11x128xf32> to vector<3x128xf32>
    %c0_14 = arith.constant 0 : index
    %c0_15 = arith.constant 0 : index
    %34 = vector.load %arg20[%c0_14, %c0_15] : memref<3x128xf32, #tpu.memory_space<vmem>>, vector<3x128xf32>
    tpu.vector_store %arg20[%c0_14, %c0_15], %33 {strides = array<i32>} : memref<3x128xf32, #tpu.memory_space<vmem>>, vector<3x128xf32>,
    %cst_16 = arith.constant 0.000000e+00 : f32
    %35 = vector.broadcast %cst_16 : f32 to vector<8x128xf32>
    %36 = arith.subf %35, %32 : vector<8x128xf32>
    %37 = math.exp %36 : vector<8x128xf32>
    %cst_17 = arith.constant 1.000000e+00 : f32
    %38 = vector.broadcast %cst_17 : f32 to vector<8x128xf32>
    %39 = arith.addf %38, %37 : vector<8x128xf32>
    %cst_18 = arith.constant 1.000000e+00 : f32
    %40 = vector.broadcast %cst_18 : f32 to vector<8x128xf32>
    %41 = arith.divf %40, %39 : vector<8x128xf32>
    %42 = arith.mulf %32, %41 : vector<8x128xf32>
    %43 = arith.truncf %42 : vector<8x128xf32> to vector<8x128xbf16>
    %c0_19 = arith.constant 0 : index
    %c0_20 = arith.constant 0 : index
    %44 = vector.load %arg6[%c0_19, %c0_20] : memref<128x32xbf16, #tpu.memory_space<vmem>>, vector<128x32xbf16>
    %cst_21 = arith.constant dense<0.000000e+00> : vector<8x32xf32>
    %45 = tpu.matmul %43, %44, %cst_21 {dimension_numbers = #tpu.dot_dimension_numbers<[1], [0], [0], [1], [0, 0, 1, 1], [], []>} : vector<8x128xbf16>, vector<128x32xbf16>, vector<8x32xf32> -> vector<8x32xf32>
    %46 = vector.extract_strided_slice %45 {offsets = [0, 0], sizes = [8, 16], strides = [1, 1]} : vector<8x32xf32> to vector<8x16xf32>
    %c0_22 = arith.constant 0 : index
    %c0_23 = arith.constant 0 : index
    %47 = vector.load %arg16[%c0_22, %c0_23] : memref<8x16xf32, #tpu.memory_space<vmem>>, vector<8x16xf32>
    tpu.vector_store %arg16[%c0_22, %c0_23], %46 {strides = array<i32>} : memref<8x16xf32, #tpu.memory_space<vmem>>, vector<8x16xf32>,
    %48 = vector.extract_strided_slice %45 {offsets = [0, 16], sizes = [8, 16], strides = [1, 1]} : vector<8x32xf32> to vector<8x16xf32>
    %c0_24 = arith.constant 0 : index
    %c0_25 = arith.constant 0 : index
    %49 = vector.load %arg17[%c0_24, %c0_25] : memref<8x16xf32, #tpu.memory_space<vmem>>, vector<8x16xf32>
    tpu.vector_store %arg17[%c0_24, %c0_25], %48 {strides = array<i32>} : memref<8x16xf32, #tpu.memory_space<vmem>>, vector<8x16xf32>,
    %c0_26 = arith.constant 0 : index
    %c0_27 = arith.constant 0 : index
    %50 = vector.load %arg7[%c0_26, %c0_27] : memref<128x4xf32, #tpu.memory_space<vmem>>, vector<128x4xf32>
    %cst_28 = arith.constant dense<0.000000e+00> : vector<8x4xf32>
    %51 = tpu.matmul %42, %50, %cst_28 {dimension_numbers = #tpu.dot_dimension_numbers<[1], [0], [0], [1], [0, 0, 1, 1], [], []>} : vector<8x128xf32>, vector<128x4xf32>, vector<8x4xf32> -> vector<8x4xf32>
    %c0_29 = arith.constant 0 : index
    %c0_30 = arith.constant 0 : index
    %52 = vector.load %arg8[%c0_29, %c0_30] : memref<4x128xf32, #tpu.memory_space<vmem>>, vector<4x128xf32>
    %cst_31 = arith.constant dense<0.000000e+00> : vector<8x128xf32>
    %53 = tpu.matmul %51, %52, %cst_31 {dimension_numbers = #tpu.dot_dimension_numbers<[1], [0], [0], [1], [0, 0, 1, 1], [], []>} : vector<8x4xf32>, vector<4x128xf32>, vector<8x128xf32> -> vector<8x128xf32>
    %c0_32 = arith.constant 0 : index
    %c0_33 = arith.constant 0 : index
    %54 = vector.load %arg9[%c0_32, %c0_33] : memref<1x128xf32, #tpu.memory_space<vmem>>, vector<1x128xf32>
    %55 = vector.broadcast %54 : vector<1x128xf32> to vector<8x128xf32>
    %56 = arith.addf %53, %55 : vector<8x128xf32>
    %cst_34 = arith.constant 2.000000e+01 : f32
    %57 = vector.broadcast %cst_34 : f32 to vector<8x128xf32>
    %58 = arith.cmpf ogt, %56, %57 : vector<8x128xf32>
    %cst_35 = arith.constant 2.000000e+01 : f32
    %59 = vector.broadcast %cst_35 : f32 to vector<8x128xf32>
    %60 = arith.minimumf %56, %59 : vector<8x128xf32>
    %61 = math.exp %60 : vector<8x128xf32>
    %cst_36 = arith.constant 1.000000e+00 : f32
    %62 = vector.broadcast %cst_36 : f32 to vector<8x128xf32>
    %63 = arith.addf %62, %61 : vector<8x128xf32>
    %64 = math.log %63 : vector<8x128xf32>
    %65 = arith.select %58, %56, %64 : vector<8x128xi1>, vector<8x128xf32>
    %c0_37 = arith.constant 0 : index
    %c0_38 = arith.constant 0 : index
    %66 = vector.load %arg14[%c0_37, %c0_38] : memref<8x128xf32, #tpu.memory_space<vmem>>, vector<8x128xf32>
    tpu.vector_store %arg14[%c0_37, %c0_38], %65 {strides = array<i32>} : memref<8x128xf32, #tpu.memory_space<vmem>>, vector<8x128xf32>,
    %67 = arith.mulf %65, %42 : vector<8x128xf32>
    %c0_39 = arith.constant 0 : index
    %c0_40 = arith.constant 0 : index
    %68 = vector.load %arg15[%c0_39, %c0_40] : memref<8x128xf32, #tpu.memory_space<vmem>>, vector<8x128xf32>
    tpu.vector_store %arg15[%c0_39, %c0_40], %67 {strides = array<i32>} : memref<8x128xf32, #tpu.memory_space<vmem>>, vector<8x128xf32>,
    %c0_41 = arith.constant 0 : index
    %c0_42 = arith.constant 0 : index
    %69 = vector.load %arg10[%c0_41, %c0_42] : memref<16x128xf32, #tpu.memory_space<vmem>>, vector<16x128xf32>
    %cst_43 = arith.constant 1.000000e+00 : f32
    %70 = vector.broadcast %cst_43 : f32 to vector<1x1x128xf32>
    %c0_i32_44 = arith.constant 0 : i32
    %c8_i32 = arith.constant 8 : i32
    %71 = arith.muli %c0_i32_44, %c8_i32 : i32
    %72 = tpu.assume_multiple %71, 8 : i32
    %73 = arith.index_cast %72 : i32 to index
    %c0_45 = arith.constant 0 : index
    %74 = vector.load %arg14[%73, %c0_45] : memref<8x128xf32, #tpu.memory_space<vmem>>, vector<8x128xf32>
    %75 = arith.index_cast %72 : i32 to index
    %c0_46 = arith.constant 0 : index
    %76 = vector.load %arg15[%75, %c0_46] : memref<8x128xf32, #tpu.memory_space<vmem>>, vector<8x128xf32>
    %77 = arith.index_cast %72 : i32 to index
    %c0_47 = arith.constant 0 : index
    %78 = vector.load %arg16[%77, %c0_47] : memref<8x16xf32, #tpu.memory_space<vmem>>, vector<8x16xf32>
    %79 = arith.index_cast %72 : i32 to index
    %c0_48 = arith.constant 0 : index
    %80 = vector.load %arg17[%79, %c0_48] : memref<8x16xf32, #tpu.memory_space<vmem>>, vector<8x16xf32>
    %81 = vector.shape_cast %78 : vector<8x16xf32> to vector<8x16x1xf32>
    %82 = vector.broadcast %81 : vector<8x16x1xf32> to vector<8x16x128xf32>
    %83 = vector.broadcast %70 : vector<1x1x128xf32> to vector<8x16x128xf32>
    %84 = arith.mulf %82, %83 : vector<8x16x128xf32>
    %85 = vector.shape_cast %80 : vector<8x16xf32> to vector<8x16x1xf32>
    %86 = vector.broadcast %85 : vector<8x16x1xf32> to vector<8x16x128xf32>
    %87 = vector.broadcast %70 : vector<1x1x128xf32> to vector<8x16x128xf32>
    %88 = arith.mulf %86, %87 : vector<8x16x128xf32>
    %c0_49 = arith.constant 0 : index
    %c0_50 = arith.constant 0 : index
    %89 = vector.load %arg19[%c0_49, %c0_50] : memref<16x128xf32, #tpu.memory_space<vmem>>, vector<16x128xf32>
    %90 = vector.extract_strided_slice %74 {offsets = [0, 0], sizes = [1, 128], strides = [1, 1]} : vector<8x128xf32> to vector<1x128xf32>
    %91 = vector.broadcast %90 : vector<1x128xf32> to vector<16x128xf32>
    %92 = arith.mulf %91, %69 : vector<16x128xf32>
    %93 = math.exp %92 : vector<16x128xf32>
    %94 = vector.extract_strided_slice %84 {offsets = [0, 0, 0], sizes = [1, 16, 128], strides = [1, 1, 1]} : vector<8x16x128xf32> to vector<1x16x128xf32>
    %95 = vector.shape_cast %94 : vector<1x16x128xf32> to vector<16x128xf32>
    %96 = vector.extract_strided_slice %95 {offsets = [0, 0], sizes = [16, 1], strides = [1, 1]} : vector<16x128xf32> to vector<16x1xf32>
    %97 = vector.extract_strided_slice %76 {offsets = [0, 0], sizes = [1, 128], strides = [1, 1]} : vector<8x128xf32> to vector<1x128xf32>
    %98 = vector.broadcast %96 : vector<16x1xf32> to vector<16x128xf32>
    %99 = vector.broadcast %97 : vector<1x128xf32> to vector<16x128xf32>
    %100 = arith.mulf %98, %99 : vector<16x128xf32>
    %101 = arith.mulf %89, %93 : vector<16x128xf32>
    %102 = arith.addf %101, %100 : vector<16x128xf32>
    %103 = vector.extract_strided_slice %88 {offsets = [0, 0, 0], sizes = [1, 16, 128], strides = [1, 1, 1]} : vector<8x16x128xf32> to vector<1x16x128xf32>
    %104 = vector.shape_cast %103 : vector<1x16x128xf32> to vector<16x128xf32>
    %105 = vector.extract_strided_slice %104 {offsets = [0, 0], sizes = [16, 1], strides = [1, 1]} : vector<16x128xf32> to vector<16x1xf32>
    %106 = vector.broadcast %105 : vector<16x1xf32> to vector<16x128xf32>
    %107 = arith.mulf %102, %106 : vector<16x128xf32>
    %cst_51 = arith.constant dense<0.000000e+00> : vector<128xf32>
    %108 = vector.multi_reduction <add>, %107, %cst_51 [0] : vector<16x128xf32> to vector<128xf32>
    %109 = vector.shape_cast %108 : vector<128xf32> to vector<1x128xf32>
    %110 = vector.extract_strided_slice %74 {offsets = [1, 0], sizes = [1, 128], strides = [1, 1]} : vector<8x128xf32> to vector<1x128xf32>
    %111 = vector.broadcast %110 : vector<1x128xf32> to vector<16x128xf32>
    %112 = arith.mulf %111, %69 : vector<16x128xf32>
    %113 = math.exp %112 : vector<16x128xf32>
    %114 = vector.extract_strided_slice %84 {offsets = [1, 0, 0], sizes = [1, 16, 128], strides = [1, 1, 1]} : vector<8x16x128xf32> to vector<1x16x128xf32>
    %115 = vector.shape_cast %114 : vector<1x16x128xf32> to vector<16x128xf32>
    %116 = vector.extract_strided_slice %115 {offsets = [0, 0], sizes = [16, 1], strides = [1, 1]} : vector<16x128xf32> to vector<16x1xf32>
    %117 = vector.extract_strided_slice %76 {offsets = [1, 0], sizes = [1, 128], strides = [1, 1]} : vector<8x128xf32> to vector<1x128xf32>
    %118 = vector.broadcast %116 : vector<16x1xf32> to vector<16x128xf32>
    %119 = vector.broadcast %117 : vector<1x128xf32> to vector<16x128xf32>
    %120 = arith.mulf %118, %119 : vector<16x128xf32>
    %121 = arith.mulf %102, %113 : vector<16x128xf32>
    %122 = arith.addf %121, %120 : vector<16x128xf32>
    %123 = vector.extract_strided_slice %88 {offsets = [1, 0, 0], sizes = [1, 16, 128], strides = [1, 1, 1]} : vector<8x16x128xf32> to vector<1x16x128xf32>
    %124 = vector.shape_cast %123 : vector<1x16x128xf32> to vector<16x128xf32>
    %125 = vector.extract_strided_slice %124 {offsets = [0, 0], sizes = [16, 1], strides = [1, 1]} : vector<16x128xf32> to vector<16x1xf32>
    %126 = vector.broadcast %125 : vector<16x1xf32> to vector<16x128xf32>
    %127 = arith.mulf %122, %126 : vector<16x128xf32>
    %cst_52 = arith.constant dense<0.000000e+00> : vector<128xf32>
    %128 = vector.multi_reduction <add>, %127, %cst_52 [0] : vector<16x128xf32> to vector<128xf32>
    %129 = vector.shape_cast %128 : vector<128xf32> to vector<1x128xf32>
    %130 = vector.extract_strided_slice %74 {offsets = [2, 0], sizes = [1, 128], strides = [1, 1]} : vector<8x128xf32> to vector<1x128xf32>
    %131 = vector.broadcast %130 : vector<1x128xf32> to vector<16x128xf32>
    %132 = arith.mulf %131, %69 : vector<16x128xf32>
    %133 = math.exp %132 : vector<16x128xf32>
    %134 = vector.extract_strided_slice %84 {offsets = [2, 0, 0], sizes = [1, 16, 128], strides = [1, 1, 1]} : vector<8x16x128xf32> to vector<1x16x128xf32>
    %135 = vector.shape_cast %134 : vector<1x16x128xf32> to vector<16x128xf32>
    %136 = vector.extract_strided_slice %135 {offsets = [0, 0], sizes = [16, 1], strides = [1, 1]} : vector<16x128xf32> to vector<16x1xf32>
    %137 = vector.extract_strided_slice %76 {offsets = [2, 0], sizes = [1, 128], strides = [1, 1]} : vector<8x128xf32> to vector<1x128xf32>
    %138 = vector.broadcast %136 : vector<16x1xf32> to vector<16x128xf32>
    %139 = vector.broadcast %137 : vector<1x128xf32> to vector<16x128xf32>
    %140 = arith.mulf %138, %139 : vector<16x128xf32>
    %141 = arith.mulf %122, %133 : vector<16x128xf32>
    %142 = arith.addf %141, %140 : vector<16x128xf32>
    %143 = vector.extract_strided_slice %88 {offsets = [2, 0, 0], sizes = [1, 16, 128], strides = [1, 1, 1]} : vector<8x16x128xf32> to vector<1x16x128xf32>
    %144 = vector.shape_cast %143 : vector<1x16x128xf32> to vector<16x128xf32>
    %145 = vector.extract_strided_slice %144 {offsets = [0, 0], sizes = [16, 1], strides = [1, 1]} : vector<16x128xf32> to vector<16x1xf32>
    %146 = vector.broadcast %145 : vector<16x1xf32> to vector<16x128xf32>
    %147 = arith.mulf %142, %146 : vector<16x128xf32>
    %cst_53 = arith.constant dense<0.000000e+00> : vector<128xf32>
    %148 = vector.multi_reduction <add>, %147, %cst_53 [0] : vector<16x128xf32> to vector<128xf32>
    %149 = vector.shape_cast %148 : vector<128xf32> to vector<1x128xf32>
    %150 = vector.extract_strided_slice %74 {offsets = [3, 0], sizes = [1, 128], strides = [1, 1]} : vector<8x128xf32> to vector<1x128xf32>
    %151 = vector.broadcast %150 : vector<1x128xf32> to vector<16x128xf32>
    %152 = arith.mulf %151, %69 : vector<16x128xf32>
    %153 = math.exp %152 : vector<16x128xf32>
    %154 = vector.extract_strided_slice %84 {offsets = [3, 0, 0], sizes = [1, 16, 128], strides = [1, 1, 1]} : vector<8x16x128xf32> to vector<1x16x128xf32>
    %155 = vector.shape_cast %154 : vector<1x16x128xf32> to vector<16x128xf32>
    %156 = vector.extract_strided_slice %155 {offsets = [0, 0], sizes = [16, 1], strides = [1, 1]} : vector<16x128xf32> to vector<16x1xf32>
    %157 = vector.extract_strided_slice %76 {offsets = [3, 0], sizes = [1, 128], strides = [1, 1]} : vector<8x128xf32> to vector<1x128xf32>
    %158 = vector.broadcast %156 : vector<16x1xf32> to vector<16x128xf32>
    %159 = vector.broadcast %157 : vector<1x128xf32> to vector<16x128xf32>
    %160 = arith.mulf %158, %159 : vector<16x128xf32>
    %161 = arith.mulf %142, %153 : vector<16x128xf32>
    %162 = arith.addf %161, %160 : vector<16x128xf32>
    %163 = vector.extract_strided_slice %88 {offsets = [3, 0, 0], sizes = [1, 16, 128], strides = [1, 1, 1]} : vector<8x16x128xf32> to vector<1x16x128xf32>
    %164 = vector.shape_cast %163 : vector<1x16x128xf32> to vector<16x128xf32>
    %165 = vector.extract_strided_slice %164 {offsets = [0, 0], sizes = [16, 1], strides = [1, 1]} : vector<16x128xf32> to vector<16x1xf32>
    %166 = vector.broadcast %165 : vector<16x1xf32> to vector<16x128xf32>
    %167 = arith.mulf %162, %166 : vector<16x128xf32>
    %cst_54 = arith.constant dense<0.000000e+00> : vector<128xf32>
    %168 = vector.multi_reduction <add>, %167, %cst_54 [0] : vector<16x128xf32> to vector<128xf32>
    %169 = vector.shape_cast %168 : vector<128xf32> to vector<1x128xf32>
    %170 = vector.extract_strided_slice %74 {offsets = [4, 0], sizes = [1, 128], strides = [1, 1]} : vector<8x128xf32> to vector<1x128xf32>
    %171 = vector.broadcast %170 : vector<1x128xf32> to vector<16x128xf32>
    %172 = arith.mulf %171, %69 : vector<16x128xf32>
    %173 = math.exp %172 : vector<16x128xf32>
    %174 = vector.extract_strided_slice %84 {offsets = [4, 0, 0], sizes = [1, 16, 128], strides = [1, 1, 1]} : vector<8x16x128xf32> to vector<1x16x128xf32>
    %175 = vector.shape_cast %174 : vector<1x16x128xf32> to vector<16x128xf32>
    %176 = vector.extract_strided_slice %175 {offsets = [0, 0], sizes = [16, 1], strides = [1, 1]} : vector<16x128xf32> to vector<16x1xf32>
    %177 = vector.extract_strided_slice %76 {offsets = [4, 0], sizes = [1, 128], strides = [1, 1]} : vector<8x128xf32> to vector<1x128xf32>
    %178 = vector.broadcast %176 : vector<16x1xf32> to vector<16x128xf32>
    %179 = vector.broadcast %177 : vector<1x128xf32> to vector<16x128xf32>
    %180 = arith.mulf %178, %179 : vector<16x128xf32>
    %181 = arith.mulf %162, %173 : vector<16x128xf32>
    %182 = arith.addf %181, %180 : vector<16x128xf32>
    %183 = vector.extract_strided_slice %88 {offsets = [4, 0, 0], sizes = [1, 16, 128], strides = [1, 1, 1]} : vector<8x16x128xf32> to vector<1x16x128xf32>
    %184 = vector.shape_cast %183 : vector<1x16x128xf32> to vector<16x128xf32>
    %185 = vector.extract_strided_slice %184 {offsets = [0, 0], sizes = [16, 1], strides = [1, 1]} : vector<16x128xf32> to vector<16x1xf32>
    %186 = vector.broadcast %185 : vector<16x1xf32> to vector<16x128xf32>
    %187 = arith.mulf %182, %186 : vector<16x128xf32>
    %cst_55 = arith.constant dense<0.000000e+00> : vector<128xf32>
    %188 = vector.multi_reduction <add>, %187, %cst_55 [0] : vector<16x128xf32> to vector<128xf32>
    %189 = vector.shape_cast %188 : vector<128xf32> to vector<1x128xf32>
    %190 = vector.extract_strided_slice %74 {offsets = [5, 0], sizes = [1, 128], strides = [1, 1]} : vector<8x128xf32> to vector<1x128xf32>
    %191 = vector.broadcast %190 : vector<1x128xf32> to vector<16x128xf32>
    %192 = arith.mulf %191, %69 : vector<16x128xf32>
    %193 = math.exp %192 : vector<16x128xf32>
    %194 = vector.extract_strided_slice %84 {offsets = [5, 0, 0], sizes = [1, 16, 128], strides = [1, 1, 1]} : vector<8x16x128xf32> to vector<1x16x128xf32>
    %195 = vector.shape_cast %194 : vector<1x16x128xf32> to vector<16x128xf32>
    %196 = vector.extract_strided_slice %195 {offsets = [0, 0], sizes = [16, 1], strides = [1, 1]} : vector<16x128xf32> to vector<16x1xf32>
    %197 = vector.extract_strided_slice %76 {offsets = [5, 0], sizes = [1, 128], strides = [1, 1]} : vector<8x128xf32> to vector<1x128xf32>
    %198 = vector.broadcast %196 : vector<16x1xf32> to vector<16x128xf32>
    %199 = vector.broadcast %197 : vector<1x128xf32> to vector<16x128xf32>
    %200 = arith.mulf %198, %199 : vector<16x128xf32>
    %201 = arith.mulf %182, %193 : vector<16x128xf32>
    %202 = arith.addf %201, %200 : vector<16x128xf32>
    %203 = vector.extract_strided_slice %88 {offsets = [5, 0, 0], sizes = [1, 16, 128], strides = [1, 1, 1]} : vector<8x16x128xf32> to vector<1x16x128xf32>
    %204 = vector.shape_cast %203 : vector<1x16x128xf32> to vector<16x128xf32>
    %205 = vector.extract_strided_slice %204 {offsets = [0, 0], sizes = [16, 1], strides = [1, 1]} : vector<16x128xf32> to vector<16x1xf32>
    %206 = vector.broadcast %205 : vector<16x1xf32> to vector<16x128xf32>
    %207 = arith.mulf %202, %206 : vector<16x128xf32>
    %cst_56 = arith.constant dense<0.000000e+00> : vector<128xf32>
    %208 = vector.multi_reduction <add>, %207, %cst_56 [0] : vector<16x128xf32> to vector<128xf32>
    %209 = vector.shape_cast %208 : vector<128xf32> to vector<1x128xf32>
    %210 = vector.extract_strided_slice %74 {offsets = [6, 0], sizes = [1, 128], strides = [1, 1]} : vector<8x128xf32> to vector<1x128xf32>
    %211 = vector.broadcast %210 : vector<1x128xf32> to vector<16x128xf32>
    %212 = arith.mulf %211, %69 : vector<16x128xf32>
    %213 = math.exp %212 : vector<16x128xf32>
    %214 = vector.extract_strided_slice %84 {offsets = [6, 0, 0], sizes = [1, 16, 128], strides = [1, 1, 1]} : vector<8x16x128xf32> to vector<1x16x128xf32>
    %215 = vector.shape_cast %214 : vector<1x16x128xf32> to vector<16x128xf32>
    %216 = vector.extract_strided_slice %215 {offsets = [0, 0], sizes = [16, 1], strides = [1, 1]} : vector<16x128xf32> to vector<16x1xf32>
    %217 = vector.extract_strided_slice %76 {offsets = [6, 0], sizes = [1, 128], strides = [1, 1]} : vector<8x128xf32> to vector<1x128xf32>
    %218 = vector.broadcast %216 : vector<16x1xf32> to vector<16x128xf32>
    %219 = vector.broadcast %217 : vector<1x128xf32> to vector<16x128xf32>
    %220 = arith.mulf %218, %219 : vector<16x128xf32>
    %221 = arith.mulf %202, %213 : vector<16x128xf32>
    %222 = arith.addf %221, %220 : vector<16x128xf32>
    %223 = vector.extract_strided_slice %88 {offsets = [6, 0, 0], sizes = [1, 16, 128], strides = [1, 1, 1]} : vector<8x16x128xf32> to vector<1x16x128xf32>
    %224 = vector.shape_cast %223 : vector<1x16x128xf32> to vector<16x128xf32>
    %225 = vector.extract_strided_slice %224 {offsets = [0, 0], sizes = [16, 1], strides = [1, 1]} : vector<16x128xf32> to vector<16x1xf32>
    %226 = vector.broadcast %225 : vector<16x1xf32> to vector<16x128xf32>
    %227 = arith.mulf %222, %226 : vector<16x128xf32>
    %cst_57 = arith.constant dense<0.000000e+00> : vector<128xf32>
    %228 = vector.multi_reduction <add>, %227, %cst_57 [0] : vector<16x128xf32> to vector<128xf32>
    %229 = vector.shape_cast %228 : vector<128xf32> to vector<1x128xf32>
    %230 = vector.extract_strided_slice %74 {offsets = [7, 0], sizes = [1, 128], strides = [1, 1]} : vector<8x128xf32> to vector<1x128xf32>
    %231 = vector.broadcast %230 : vector<1x128xf32> to vector<16x128xf32>
    %232 = arith.mulf %231, %69 : vector<16x128xf32>
    %233 = math.exp %232 : vector<16x128xf32>
    %234 = vector.extract_strided_slice %84 {offsets = [7, 0, 0], sizes = [1, 16, 128], strides = [1, 1, 1]} : vector<8x16x128xf32> to vector<1x16x128xf32>
    %235 = vector.shape_cast %234 : vector<1x16x128xf32> to vector<16x128xf32>
    %236 = vector.extract_strided_slice %235 {offsets = [0, 0], sizes = [16, 1], strides = [1, 1]} : vector<16x128xf32> to vector<16x1xf32>
    %237 = vector.extract_strided_slice %76 {offsets = [7, 0], sizes = [1, 128], strides = [1, 1]} : vector<8x128xf32> to vector<1x128xf32>
    %238 = vector.broadcast %236 : vector<16x1xf32> to vector<16x128xf32>
    %239 = vector.broadcast %237 : vector<1x128xf32> to vector<16x128xf32>
    %240 = arith.mulf %238, %239 : vector<16x128xf32>
    %241 = arith.mulf %222, %233 : vector<16x128xf32>
    %242 = arith.addf %241, %240 : vector<16x128xf32>
    %243 = vector.extract_strided_slice %88 {offsets = [7, 0, 0], sizes = [1, 16, 128], strides = [1, 1, 1]} : vector<8x16x128xf32> to vector<1x16x128xf32>
    %244 = vector.shape_cast %243 : vector<1x16x128xf32> to vector<16x128xf32>
    %245 = vector.extract_strided_slice %244 {offsets = [0, 0], sizes = [16, 1], strides = [1, 1]} : vector<16x128xf32> to vector<16x1xf32>
    %246 = vector.broadcast %245 : vector<16x1xf32> to vector<16x128xf32>
    %247 = arith.mulf %242, %246 : vector<16x128xf32>
    %cst_58 = arith.constant dense<0.000000e+00> : vector<128xf32>
    %248 = vector.multi_reduction <add>, %247, %cst_58 [0] : vector<16x128xf32> to vector<128xf32>
    %249 = vector.shape_cast %248 : vector<128xf32> to vector<1x128xf32>
    %c0_59 = arith.constant 0 : index
    %c0_60 = arith.constant 0 : index
    %250 = vector.load %arg19[%c0_59, %c0_60] : memref<16x128xf32, #tpu.memory_space<vmem>>, vector<16x128xf32>
    tpu.vector_store %arg19[%c0_59, %c0_60], %242 {strides = array<i32>} : memref<16x128xf32, #tpu.memory_space<vmem>>, vector<16x128xf32>,
    %251 = tpu.concatenate %109, %129, %149, %169, %189, %209, %229, %249 in 0 : vector<1x128xf32>, vector<1x128xf32>, vector<1x128xf32>, vector<1x128xf32>, vector<1x128xf32>, vector<1x128xf32>, vector<1x128xf32>, vector<1x128xf32> -> vector<8x128xf32>
    %252 = arith.index_cast %72 : i32 to index
    %c0_61 = arith.constant 0 : index
    %253 = vector.load %arg18[%252, %c0_61] : memref<8x128xf32, #tpu.memory_space<vmem>>, vector<8x128xf32>
    tpu.vector_store %arg18[%252, %c0_61], %251 {strides = array<i32>} : memref<8x128xf32, #tpu.memory_space<vmem>>, vector<8x128xf32>,
    %c1_i32 = arith.constant 1 : i32
    %c0_62 = arith.constant 0 : index
    %c0_63 = arith.constant 0 : index
    %254 = vector.load %arg18[%c0_62, %c0_63] : memref<8x128xf32, #tpu.memory_space<vmem>>, vector<8x128xf32>
    %c0_64 = arith.constant 0 : index
    %c0_65 = arith.constant 0 : index
    %255 = vector.load %arg11[%c0_64, %c0_65] : memref<1x128xf32, #tpu.memory_space<vmem>>, vector<1x128xf32>
    %256 = vector.broadcast %255 : vector<1x128xf32> to vector<8x128xf32>
    %257 = arith.mulf %42, %256 : vector<8x128xf32>
    %258 = arith.addf %254, %257 : vector<8x128xf32>
    %cst_66 = arith.constant 0.000000e+00 : f32
    %259 = vector.broadcast %cst_66 : f32 to vector<8x128xf32>
    %260 = arith.subf %259, %8 : vector<8x128xf32>
    %261 = math.exp %260 : vector<8x128xf32>
    %cst_67 = arith.constant 1.000000e+00 : f32
    %262 = vector.broadcast %cst_67 : f32 to vector<8x128xf32>
    %263 = arith.addf %262, %261 : vector<8x128xf32>
    %cst_68 = arith.constant 1.000000e+00 : f32
    %264 = vector.broadcast %cst_68 : f32 to vector<8x128xf32>
    %265 = arith.divf %264, %263 : vector<8x128xf32>
    %266 = arith.mulf %8, %265 : vector<8x128xf32>
    %267 = arith.mulf %258, %266 : vector<8x128xf32>
    %268 = arith.truncf %267 : vector<8x128xf32> to vector<8x128xbf16>
    %c0_69 = arith.constant 0 : index
    %c0_70 = arith.constant 0 : index
    %269 = vector.load %arg12[%c0_69, %c0_70] : memref<128x64xbf16, #tpu.memory_space<vmem>>, vector<128x64xbf16>
    %cst_71 = arith.constant dense<0.000000e+00> : vector<8x64xf32>
    %270 = tpu.matmul %268, %269, %cst_71 {dimension_numbers = #tpu.dot_dimension_numbers<[1], [0], [0], [1], [0, 0, 1, 1], [], []>} : vector<8x128xbf16>, vector<128x64xbf16>, vector<8x64xf32> -> vector<8x64xf32>
    %c0_72 = arith.constant 0 : index
    %c0_73 = arith.constant 0 : index
    %c0_74 = arith.constant 0 : index
    %271 = vector.load %arg13[%c0_72, %c0_73, %c0_74] : memref<1x8x64xf32, #tpu.memory_space<vmem>>, vector<1x8x64xf32>
    %272 = vector.shape_cast %271 : vector<1x8x64xf32> to vector<8x64xf32>
    %273 = vector.shape_cast %270 : vector<8x64xf32> to vector<1x8x64xf32>
    tpu.vector_store %arg13[%c0_72, %c0_73, %c0_74], %273 {strides = array<i32>} : memref<1x8x64xf32, #tpu.memory_space<vmem>>, vector<1x8x64xf32>,
    return
  }
  func.func @transform_0(%arg0: i32, %arg1: i32) -> (i32, i32, i32) {
    %c0_i32 = arith.constant 0 : i32
    %c0_i32_0 = arith.constant 0 : i32
    return %arg0, %arg1, %c0_i32 : i32, i32, i32
  }
  func.func @transform_1(%arg0: i32, %arg1: i32) -> (i32, i32) {
    %c0_i32 = arith.constant 0 : i32
    %c0_i32_0 = arith.constant 0 : i32
    %c0_i32_1 = arith.constant 0 : i32
    return %c0_i32, %c0_i32_0 : i32, i32
  }
  func.func @transform_2(%arg0: i32, %arg1: i32) -> (i32, i32) {
    %c0_i32 = arith.constant 0 : i32
    %c0_i32_0 = arith.constant 0 : i32
    %c0_i32_1 = arith.constant 0 : i32
    return %c0_i32, %c0_i32_0 : i32, i32
  }
  func.func @transform_3(%arg0: i32, %arg1: i32) -> (i32, i32) {
    %c0_i32 = arith.constant 0 : i32
    %c0_i32_0 = arith.constant 0 : i32
    %c0_i32_1 = arith.constant 0 : i32
    return %c0_i32, %c0_i32_0 : i32, i32
  }
  func.func @transform_4(%arg0: i32, %arg1: i32) -> (i32, i32) {
    %c0_i32 = arith.constant 0 : i32
    %c0_i32_0 = arith.constant 0 : i32
    %c0_i32_1 = arith.constant 0 : i32
    return %c0_i32, %c0_i32_0 : i32, i32
  }
  func.func @transform_5(%arg0: i32, %arg1: i32) -> (i32, i32) {
    %c0_i32 = arith.constant 0 : i32
    %c0_i32_0 = arith.constant 0 : i32
    %c0_i32_1 = arith.constant 0 : i32
    return %c0_i32, %c0_i32_0 : i32, i32
  }
  func.func @transform_6(%arg0: i32, %arg1: i32) -> (i32, i32) {
    %c0_i32 = arith.constant 0 : i32
    %c0_i32_0 = arith.constant 0 : i32
    %c0_i32_1 = arith.constant 0 : i32
    return %c0_i32, %c0_i32_0 : i32, i32
  }
  func.func @transform_7(%arg0: i32, %arg1: i32) -> (i32, i32) {
    %c0_i32 = arith.constant 0 : i32
    %c0_i32_0 = arith.constant 0 : i32
    %c0_i32_1 = arith.constant 0 : i32
    return %c0_i32, %c0_i32_0 : i32, i32
  }
  func.func @transform_8(%arg0: i32, %arg1: i32) -> (i32, i32) {
    %c0_i32 = arith.constant 0 : i32
    %c0_i32_0 = arith.constant 0 : i32
    %c0_i32_1 = arith.constant 0 : i32
    return %c0_i32, %c0_i32_0 : i32, i32
  }
  func.func @transform_9(%arg0: i32, %arg1: i32) -> (i32, i32) {
    %c0_i32 = arith.constant 0 : i32
    %c0_i32_0 = arith.constant 0 : i32
    %c0_i32_1 = arith.constant 0 : i32
    return %c0_i32, %c0_i32_0 : i32, i32
  }
  func.func @transform_10(%arg0: i32, %arg1: i32) -> (i32, i32) {
    %c0_i32 = arith.constant 0 : i32
    %c0_i32_0 = arith.constant 0 : i32
    %c0_i32_1 = arith.constant 0 : i32
    return %c0_i32, %c0_i32_0 : i32, i32
  }
  func.func @transform_11(%arg0: i32, %arg1: i32) -> (i32, i32, i32) {
    %c0_i32 = arith.constant 0 : i32
    %c0_i32_0 = arith.constant 0 : i32
    return %arg0, %arg1, %c0_i32 : i32, i32, i32
  }
}

module attributes {stable_mosaic.version = 11 : i64} {
  func.func @_mamba_kernel(%arg0: i32, %arg1: i32, %arg2: memref<1x8x64xbf16, #tpu.memory_space<vmem>>, %arg3: memref<64x256xbf16, #tpu.memory_space<vmem>>, %arg4: memref<4x128xf32, #tpu.memory_space<vmem>>, %arg5: memref<1x128xf32, #tpu.memory_space<vmem>>, %arg6: memref<128x32xbf16, #tpu.memory_space<vmem>>, %arg7: memref<128x4xf32, #tpu.memory_space<vmem>>, %arg8: memref<4x128xf32, #tpu.memory_space<vmem>>, %arg9: memref<1x128xf32, #tpu.memory_space<vmem>>, %arg10: memref<16x128xf32, #tpu.memory_space<vmem>>, %arg11: memref<1x128xf32, #tpu.memory_space<vmem>>, %arg12: memref<128x64xbf16, #tpu.memory_space<vmem>>, %arg13: memref<1x8x64xf32, #tpu.memory_space<vmem>>, %arg14: memref<8x128xf32, #tpu.memory_space<vmem>>, %arg15: memref<8x128xf32, #tpu.memory_space<vmem>>, %arg16: memref<8x16xf32, #tpu.memory_space<vmem>>, %arg17: memref<8x16xf32, #tpu.memory_space<vmem>>, %arg18: memref<8x128xf32, #tpu.memory_space<vmem>>, %arg19: memref<16x128xf32, #tpu.memory_space<vmem>>, %arg20: memref<3x128xf32, #tpu.memory_space<vmem>>) attributes {dimension_semantics = [#tpu.dimension_semantics<parallel>, #tpu.dimension_semantics<arbitrary>], iteration_bounds = array<i64: 2, 2>, scalar_prefetch = 0 : i64, scratch_operands = 7 : i64, tpu.core_type = #tpu.core_type<tc>, window_params = [{transform_indices = @transform_0, window_bounds = array<i64: 1, 8, 64>}, {pipeline_mode = #tpu.pipeline_mode<synchronous>, transform_indices = @transform_1, window_bounds = array<i64: 64, 256>}, {pipeline_mode = #tpu.pipeline_mode<synchronous>, transform_indices = @transform_2, window_bounds = array<i64: 4, 128>}, {pipeline_mode = #tpu.pipeline_mode<synchronous>, transform_indices = @transform_3, window_bounds = array<i64: 1, 128>}, {pipeline_mode = #tpu.pipeline_mode<synchronous>, transform_indices = @transform_4, window_bounds = array<i64: 128, 32>}, {pipeline_mode = #tpu.pipeline_mode<synchronous>, transform_indices = @transform_5, window_bounds = array<i64: 128, 4>}, {pipeline_mode = #tpu.pipeline_mode<synchronous>, transform_indices = @transform_6, window_bounds = array<i64: 4, 128>}, {pipeline_mode = #tpu.pipeline_mode<synchronous>, transform_indices = @transform_7, window_bounds = array<i64: 1, 128>}, {pipeline_mode = #tpu.pipeline_mode<synchronous>, transform_indices = @transform_8, window_bounds = array<i64: 16, 128>}, {pipeline_mode = #tpu.pipeline_mode<synchronous>, transform_indices = @transform_9, window_bounds = array<i64: 1, 128>}, {pipeline_mode = #tpu.pipeline_mode<synchronous>, transform_indices = @transform_10, window_bounds = array<i64: 128, 64>}, {transform_indices = @transform_11, window_bounds = array<i64: 1, 8, 64>}]} {
    %c0_i32 = arith.constant 0 : i32
    %0 = arith.cmpi eq, %arg1, %c0_i32 : i32
    %1 = arith.extui %0 : i1 to i32
    %c0_i32_0 = arith.constant 0 : i32
    %2 = arith.cmpi ne, %1, %c0_i32_0 : i32
    scf.if %2 {
      %cst_75 = arith.constant 0.000000e+00 : f32
      %274 = vector.broadcast %cst_75 : f32 to vector<16x128xf32>
      %c0_76 = arith.constant 0 : index
      %c0_77 = arith.constant 0 : index
      %275 = vector.load %arg19[%c0_76, %c0_77] : memref<16x128xf32, #tpu.memory_space<vmem>>, vector<16x128xf32>
      tpu.vector_store %arg19[%c0_76, %c0_77], %274 {strides = array<i32>} : memref<16x128xf32, #tpu.memory_space<vmem>>, vector<16x128xf32>,
      %cst_78 = arith.constant 0.000000e+00 : f32
      %276 = vector.broadcast %cst_78 : f32 to vector<3x128xf32>
      %c0_79 = arith.constant 0 : index
      %c0_80 = arith.constant 0 : index
      %277 = vector.load %arg20[%c0_79, %c0_80] : memref<3x128xf32, #tpu.memory_space<vmem>>, vector<3x128xf32>
      tpu.vector_store %arg20[%c0_79, %c0_80], %276 {strides = array<i32>} : memref<3x128xf32, #tpu.memory_space<vmem>>, vector<3x128xf32>,
    } else {
    }
    %c0 = arith.constant 0 : index
    %c0_1 = arith.constant 0 : index
    %c0_2 = arith.constant 0 : index
    %3 = vector.load %arg2[%c0, %c0_1, %c0_2] : memref<1x8x64xbf16, #tpu.memory_space<vmem>>, vector<1x8x64xbf16>
    %4 = vector.shape_cast %3 : vector<1x8x64xbf16> to vector<8x64xbf16>
    %c0_3 = arith.constant 0 : index
    %c0_4 = arith.constant 0 : index
    %5 = vector.load %arg3[%c0_3, %c0_4] : memref<64x256xbf16, #tpu.memory_space<vmem>>, vector<64x256xbf16>
    %cst = arith.constant dense<0.000000e+00> : vector<8x256xf32>
    %6 = tpu.matmul %4, %5, %cst {dimension_numbers = #tpu.dot_dimension_numbers<[1], [0], [0], [1], [0, 0, 1, 1], [], []>} : vector<8x64xbf16>, vector<64x256xbf16>, vector<8x256xf32> -> vector<8x256xf32>
    %7 = vector.extract_strided_slice %6 {offsets = [0, 0], sizes = [8, 128], strides = [1, 1]} : vector<8x256xf32> to vector<8x128xf32>
    %8 = vector.extract_strided_slice %6 {offsets = [0, 128], sizes = [8, 128], strides = [1, 1]} : vector<8x256xf32> to vector<8x128xf32>
    %c0_5 = arith.constant 0 : index
    %c0_6 = arith.constant 0 : index
    %9 = vector.load %arg20[%c0_5, %c0_6] : memref<3x128xf32, #tpu.memory_space<vmem>>, vector<3x128xf32>
    %10 = tpu.concatenate %9, %7 in 0 : vector<3x128xf32>, vector<8x128xf32> -> vector<11x128xf32>
    %c0_7 = arith.constant 0 : index
    %c0_8 = arith.constant 0 : index
    %11 = vector.load %arg5[%c0_7, %c0_8] : memref<1x128xf32, #tpu.memory_space<vmem>>, vector<1x128xf32>
    %12 = vector.extract_strided_slice %10 {offsets = [0, 0], sizes = [8, 128], strides = [1, 1]} : vector<11x128xf32> to vector<8x128xf32>
    %c0_9 = arith.constant 0 : index
    %c0_10 = arith.constant 0 : index
    %13 = vector.load %arg4[%c0_9, %c0_10] : memref<4x128xf32, #tpu.memory_space<vmem>>, vector<1x128xf32>
    %14 = vector.broadcast %13 : vector<1x128xf32> to vector<8x128xf32>
    %15 = arith.mulf %12, %14 : vector<8x128xf32>
    %16 = vector.broadcast %11 : vector<1x128xf32> to vector<8x128xf32>
    %17 = arith.addf %16, %15 : vector<8x128xf32>
    %18 = vector.extract_strided_slice %10 {offsets = [1, 0], sizes = [8, 128], strides = [1, 1]} : vector<11x128xf32> to vector<8x128xf32>
    %c1 = arith.constant 1 : index
    %c0_11 = arith.constant 0 : index
    %19 = vector.load %arg4[%c1, %c0_11] : memref<4x128xf32, #tpu.memory_space<vmem>>, vector<1x128xf32>
    %20 = vector.broadcast %19 : vector<1x128xf32> to vector<8x128xf32>
    %21 = arith.mulf %18, %20 : vector<8x128xf32>
    %22 = arith.addf %17, %21 : vector<8x128xf32>
    %23 = vector.extract_strided_slice %10 {offsets = [2, 0], sizes = [8, 128], strides = [1, 1]} : vector<11x128xf32> to vector<8x128xf32>
    %c2 = arith.constant 2 : index
    %c0_12 = arith.constant 0 : index
    %24 = vector.load %arg4[%c2, %c0_12] : memref<4x128xf32, #tpu.memory_space<vmem>>, vector<1x128xf32>
    %25 = vector.broadcast %24 : vector<1x128xf32> to vector<8x128xf32>
    %26 = arith.mulf %23, %25 : vector<8x128xf32>
    %27 = arith.addf %22, %26 : vector<8x128xf32>
    %28 = vector.extract_strided_slice %10 {offsets = [3, 0], sizes = [8, 128], strides = [1, 1]} : vector<11x128xf32> to vector<8x128xf32>
    %c3 = arith.constant 3 : index
    %c0_13 = arith.constant 0 : index
    %29 = vector.load %arg4[%c3, %c0_13] : memref<4x128xf32, #tpu.memory_space<vmem>>, vector<1x128xf32>
    %30 = vector.broadcast %29 : vector<1x128xf32> to vector<8x128xf32>
    %31 = arith.mulf %28, %30 : vector<8x128xf32>
    %32 = arith.addf %27, %31 : vector<8x128xf32>
    %33 = vector.extract_strided_slice %10 {offsets = [8, 0], sizes = [3, 128], strides = [1, 1]} : vector<11x128xf32> to vector<3x128xf32>
    %c0_14 = arith.constant 0 : index
    %c0_15 = arith.constant 0 : index
    %34 = vector.load %arg20[%c0_14, %c0_15] : memref<3x128xf32, #tpu.memory_space<vmem>>, vector<3x128xf32>
    tpu.vector_store %arg20[%c0_14, %c0_15], %33 {strides = array<i32>} : memref<3x128xf32, #tpu.memory_space<vmem>>, vector<3x128xf32>,
    %cst_16 = arith.constant 0.000000e+00 : f32
    %35 = vector.broadcast %cst_16 : f32 to vector<8x128xf32>
    %36 = arith.subf %35, %32 : vector<8x128xf32>
    %37 = math.exp %36 : vector<8x128xf32>
    %cst_17 = arith.constant 1.000000e+00 : f32
    %38 = vector.broadcast %cst_17 : f32 to vector<8x128xf32>
    %39 = arith.addf %38, %37 : vector<8x128xf32>
    %cst_18 = arith.constant 1.000000e+00 : f32
    %40 = vector.broadcast %cst_18 : f32 to vector<8x128xf32>
    %41 = arith.divf %40, %39 : vector<8x128xf32>
    %42 = arith.mulf %32, %41 : vector<8x128xf32>
    %43 = arith.truncf %42 : vector<8x128xf32> to vector<8x128xbf16>
    %c0_19 = arith.constant 0 : index
    %c0_20 = arith.constant 0 : index
    %44 = vector.load %arg6[%c0_19, %c0_20] : memref<128x32xbf16, #tpu.memory_space<vmem>>, vector<128x32xbf16>
    %cst_21 = arith.constant dense<0.000000e+00> : vector<8x32xf32>
    %45 = tpu.matmul %43, %44, %cst_21 {dimension_numbers = #tpu.dot_dimension_numbers<[1], [0], [0], [1], [0, 0, 1, 1], [], []>} : vector<8x128xbf16>, vector<128x32xbf16>, vector<8x32xf32> -> vector<8x32xf32>
    %46 = vector.extract_strided_slice %45 {offsets = [0, 0], sizes = [8, 16], strides = [1, 1]} : vector<8x32xf32> to vector<8x16xf32>
    %c0_22 = arith.constant 0 : index
    %c0_23 = arith.constant 0 : index
    %47 = vector.load %arg16[%c0_22, %c0_23] : memref<8x16xf32, #tpu.memory_space<vmem>>, vector<8x16xf32>
    tpu.vector_store %arg16[%c0_22, %c0_23], %46 {strides = array<i32>} : memref<8x16xf32, #tpu.memory_space<vmem>>, vector<8x16xf32>,
    %48 = vector.extract_strided_slice %45 {offsets = [0, 16], sizes = [8, 16], strides = [1, 1]} : vector<8x32xf32> to vector<8x16xf32>
    %c0_24 = arith.constant 0 : index
    %c0_25 = arith.constant 0 : index
    %49 = vector.load %arg17[%c0_24, %c0_25] : memref<8x16xf32, #tpu.memory_space<vmem>>, vector<8x16xf32>
    tpu.vector_store %arg17[%c0_24, %c0_25], %48 {strides = array<i32>} : memref<8x16xf32, #tpu.memory_space<vmem>>, vector<8x16xf32>,
    %c0_26 = arith.constant 0 : index
    %c0_27 = arith.constant 0 : index
    %50 = vector.load %arg7[%c0_26, %c0_27] : memref<128x4xf32, #tpu.memory_space<vmem>>, vector<128x4xf32>
    %cst_28 = arith.constant dense<0.000000e+00> : vector<8x4xf32>
    %51 = tpu.matmul %42, %50, %cst_28 {dimension_numbers = #tpu.dot_dimension_numbers<[1], [0], [0], [1], [0, 0, 1, 1], [], []>} : vector<8x128xf32>, vector<128x4xf32>, vector<8x4xf32> -> vector<8x4xf32>
    %c0_29 = arith.constant 0 : index
    %c0_30 = arith.constant 0 : index
    %52 = vector.load %arg8[%c0_29, %c0_30] : memref<4x128xf32, #tpu.memory_space<vmem>>, vector<4x128xf32>
    %cst_31 = arith.constant dense<0.000000e+00> : vector<8x128xf32>
    %53 = tpu.matmul %51, %52, %cst_31 {dimension_numbers = #tpu.dot_dimension_numbers<[1], [0], [0], [1], [0, 0, 1, 1], [], []>} : vector<8x4xf32>, vector<4x128xf32>, vector<8x128xf32> -> vector<8x128xf32>
    %c0_32 = arith.constant 0 : index
    %c0_33 = arith.constant 0 : index
    %54 = vector.load %arg9[%c0_32, %c0_33] : memref<1x128xf32, #tpu.memory_space<vmem>>, vector<1x128xf32>
    %55 = vector.broadcast %54 : vector<1x128xf32> to vector<8x128xf32>
    %56 = arith.addf %53, %55 : vector<8x128xf32>
    %cst_34 = arith.constant 2.000000e+01 : f32
    %57 = vector.broadcast %cst_34 : f32 to vector<8x128xf32>
    %58 = arith.cmpf ogt, %56, %57 : vector<8x128xf32>
    %cst_35 = arith.constant 2.000000e+01 : f32
    %59 = vector.broadcast %cst_35 : f32 to vector<8x128xf32>
    %60 = arith.minimumf %56, %59 : vector<8x128xf32>
    %61 = math.exp %60 : vector<8x128xf32>
    %cst_36 = arith.constant 1.000000e+00 : f32
    %62 = vector.broadcast %cst_36 : f32 to vector<8x128xf32>
    %63 = arith.addf %62, %61 : vector<8x128xf32>
    %64 = math.log %63 : vector<8x128xf32>
    %65 = arith.select %58, %56, %64 : vector<8x128xi1>, vector<8x128xf32>
    %c0_37 = arith.constant 0 : index
    %c0_38 = arith.constant 0 : index
    %66 = vector.load %arg14[%c0_37, %c0_38] : memref<8x128xf32, #tpu.memory_space<vmem>>, vector<8x128xf32>
    tpu.vector_store %arg14[%c0_37, %c0_38], %65 {strides = array<i32>} : memref<8x128xf32, #tpu.memory_space<vmem>>, vector<8x128xf32>,
    %67 = arith.mulf %65, %42 : vector<8x128xf32>
    %c0_39 = arith.constant 0 : index
    %c0_40 = arith.constant 0 : index
    %68 = vector.load %arg15[%c0_39, %c0_40] : memref<8x128xf32, #tpu.memory_space<vmem>>, vector<8x128xf32>
    tpu.vector_store %arg15[%c0_39, %c0_40], %67 {strides = array<i32>} : memref<8x128xf32, #tpu.memory_space<vmem>>, vector<8x128xf32>,
    %c0_41 = arith.constant 0 : index
    %c0_42 = arith.constant 0 : index
    %69 = vector.load %arg10[%c0_41, %c0_42] : memref<16x128xf32, #tpu.memory_space<vmem>>, vector<16x128xf32>
    %cst_43 = arith.constant 1.000000e+00 : f32
    %70 = vector.broadcast %cst_43 : f32 to vector<1x1x128xf32>
    %c0_i32_44 = arith.constant 0 : i32
    %c8_i32 = arith.constant 8 : i32
    %71 = arith.muli %c0_i32_44, %c8_i32 : i32
    %72 = tpu.assume_multiple %71, 8 : i32
    %73 = arith.index_cast %72 : i32 to index
    %c0_45 = arith.constant 0 : index
    %74 = vector.load %arg14[%73, %c0_45] : memref<8x128xf32, #tpu.memory_space<vmem>>, vector<8x128xf32>
    %75 = arith.index_cast %72 : i32 to index
    %c0_46 = arith.constant 0 : index
    %76 = vector.load %arg15[%75, %c0_46] : memref<8x128xf32, #tpu.memory_space<vmem>>, vector<8x128xf32>
    %77 = arith.index_cast %72 : i32 to index
    %c0_47 = arith.constant 0 : index
    %78 = vector.load %arg16[%77, %c0_47] : memref<8x16xf32, #tpu.memory_space<vmem>>, vector<8x16xf32>
    %79 = arith.index_cast %72 : i32 to index
    %c0_48 = arith.constant 0 : index
    %80 = vector.load %arg17[%79, %c0_48] : memref<8x16xf32, #tpu.memory_space<vmem>>, vector<8x16xf32>
    %81 = vector.shape_cast %78 : vector<8x16xf32> to vector<8x16x1xf32>
    %82 = vector.broadcast %81 : vector<8x16x1xf32> to vector<8x16x128xf32>
    %83 = vector.broadcast %70 : vector<1x1x128xf32> to vector<8x16x128xf32>
    %84 = arith.mulf %82, %83 : vector<8x16x128xf32>
    %85 = vector.shape_cast %80 : vector<8x16xf32> to vector<8x16x1xf32>
    %86 = vector.broadcast %85 : vector<8x16x1xf32> to vector<8x16x128xf32>
    %87 = vector.broadcast %70 : vector<1x1x128xf32> to vector<8x16x128xf32>
    %88 = arith.mulf %86, %87 : vector<8x16x128xf32>
    %c0_49 = arith.constant 0 : index
    %c0_50 = arith.constant 0 : index
    %89 = vector.load %arg19[%c0_49, %c0_50] : memref<16x128xf32, #tpu.memory_space<vmem>>, vector<16x128xf32>
    %90 = vector.extract_strided_slice %74 {offsets = [0, 0], sizes = [1, 128], strides = [1, 1]} : vector<8x128xf32> to vector<1x128xf32>
    %91 = vector.broadcast %90 : vector<1x128xf32> to vector<16x128xf32>
    %92 = arith.mulf %91, %69 : vector<16x128xf32>
    %93 = math.exp %92 : vector<16x128xf32>
    %94 = vector.extract_strided_slice %84 {offsets = [0, 0, 0], sizes = [1, 16, 128], strides = [1, 1, 1]} : vector<8x16x128xf32> to vector<1x16x128xf32>
    %95 = vector.shape_cast %94 : vector<1x16x128xf32> to vector<16x128xf32>
    %96 = vector.extract_strided_slice %95 {offsets = [0, 0], sizes = [16, 1], strides = [1, 1]} : vector<16x128xf32> to vector<16x1xf32>
    %97 = vector.extract_strided_slice %76 {offsets = [0, 0], sizes = [1, 128], strides = [1, 1]} : vector<8x128xf32> to vector<1x128xf32>
    %98 = vector.broadcast %96 : vector<16x1xf32> to vector<16x128xf32>
    %99 = vector.broadcast %97 : vector<1x128xf32> to vector<16x128xf32>
    %100 = arith.mulf %98, %99 : vector<16x128xf32>
    %101 = arith.mulf %89, %93 : vector<16x128xf32>
    %102 = arith.addf %101, %100 : vector<16x128xf32>
    %103 = vector.extract_strided_slice %88 {offsets = [0, 0, 0], sizes = [1, 16, 128], strides = [1, 1, 1]} : vector<8x16x128xf32> to vector<1x16x128xf32>
    %104 = vector.shape_cast %103 : vector<1x16x128xf32> to vector<16x128xf32>
    %105 = vector.extract_strided_slice %104 {offsets = [0, 0], sizes = [16, 1], strides = [1, 1]} : vector<16x128xf32> to vector<16x1xf32>
    %106 = vector.broadcast %105 : vector<16x1xf32> to vector<16x128xf32>
    %107 = arith.mulf %102, %106 : vector<16x128xf32>
    %cst_51 = arith.constant dense<0.000000e+00> : vector<128xf32>
    %108 = vector.multi_reduction <add>, %107, %cst_51 [0] : vector<16x128xf32> to vector<128xf32>
    %109 = vector.shape_cast %108 : vector<128xf32> to vector<1x128xf32>
    %110 = vector.extract_strided_slice %74 {offsets = [1, 0], sizes = [1, 128], strides = [1, 1]} : vector<8x128xf32> to vector<1x128xf32>
    %111 = vector.broadcast %110 : vector<1x128xf32> to vector<16x128xf32>
    %112 = arith.mulf %111, %69 : vector<16x128xf32>
    %113 = math.exp %112 : vector<16x128xf32>
    %114 = vector.extract_strided_slice %84 {offsets = [1, 0, 0], sizes = [1, 16, 128], strides = [1, 1, 1]} : vector<8x16x128xf32> to vector<1x16x128xf32>
    %115 = vector.shape_cast %114 : vector<1x16x128xf32> to vector<16x128xf32>
    %116 = vector.extract_strided_slice %115 {offsets = [0, 0], sizes = [16, 1], strides = [1, 1]} : vector<16x128xf32> to vector<16x1xf32>
    %117 = vector.extract_strided_slice %76 {offsets = [1, 0], sizes = [1, 128], strides = [1, 1]} : vector<8x128xf32> to vector<1x128xf32>
    %118 = vector.broadcast %116 : vector<16x1xf32> to vector<16x128xf32>
    %119 = vector.broadcast %117 : vector<1x128xf32> to vector<16x128xf32>
    %120 = arith.mulf %118, %119 : vector<16x128xf32>
    %121 = arith.mulf %102, %113 : vector<16x128xf32>
    %122 = arith.addf %121, %120 : vector<16x128xf32>
    %123 = vector.extract_strided_slice %88 {offsets = [1, 0, 0], sizes = [1, 16, 128], strides = [1, 1, 1]} : vector<8x16x128xf32> to vector<1x16x128xf32>
    %124 = vector.shape_cast %123 : vector<1x16x128xf32> to vector<16x128xf32>
    %125 = vector.extract_strided_slice %124 {offsets = [0, 0], sizes = [16, 1], strides = [1, 1]} : vector<16x128xf32> to vector<16x1xf32>
    %126 = vector.broadcast %125 : vector<16x1xf32> to vector<16x128xf32>
    %127 = arith.mulf %122, %126 : vector<16x128xf32>
    %cst_52 = arith.constant dense<0.000000e+00> : vector<128xf32>
    %128 = vector.multi_reduction <add>, %127, %cst_52 [0] : vector<16x128xf32> to vector<128xf32>
    %129 = vector.shape_cast %128 : vector<128xf32> to vector<1x128xf32>
    %130 = vector.extract_strided_slice %74 {offsets = [2, 0], sizes = [1, 128], strides = [1, 1]} : vector<8x128xf32> to vector<1x128xf32>
    %131 = vector.broadcast %130 : vector<1x128xf32> to vector<16x128xf32>
    %132 = arith.mulf %131, %69 : vector<16x128xf32>
    %133 = math.exp %132 : vector<16x128xf32>
    %134 = vector.extract_strided_slice %84 {offsets = [2, 0, 0], sizes = [1, 16, 128], strides = [1, 1, 1]} : vector<8x16x128xf32> to vector<1x16x128xf32>
    %135 = vector.shape_cast %134 : vector<1x16x128xf32> to vector<16x128xf32>
    %136 = vector.extract_strided_slice %135 {offsets = [0, 0], sizes = [16, 1], strides = [1, 1]} : vector<16x128xf32> to vector<16x1xf32>
    %137 = vector.extract_strided_slice %76 {offsets = [2, 0], sizes = [1, 128], strides = [1, 1]} : vector<8x128xf32> to vector<1x128xf32>
    %138 = vector.broadcast %136 : vector<16x1xf32> to vector<16x128xf32>
    %139 = vector.broadcast %137 : vector<1x128xf32> to vector<16x128xf32>
    %140 = arith.mulf %138, %139 : vector<16x128xf32>
    %141 = arith.mulf %122, %133 : vector<16x128xf32>
    %142 = arith.addf %141, %140 : vector<16x128xf32>
    %143 = vector.extract_strided_slice %88 {offsets = [2, 0, 0], sizes = [1, 16, 128], strides = [1, 1, 1]} : vector<8x16x128xf32> to vector<1x16x128xf32>
    %144 = vector.shape_cast %143 : vector<1x16x128xf32> to vector<16x128xf32>
    %145 = vector.extract_strided_slice %144 {offsets = [0, 0], sizes = [16, 1], strides = [1, 1]} : vector<16x128xf32> to vector<16x1xf32>
    %146 = vector.broadcast %145 : vector<16x1xf32> to vector<16x128xf32>
    %147 = arith.mulf %142, %146 : vector<16x128xf32>
    %cst_53 = arith.constant dense<0.000000e+00> : vector<128xf32>
    %148 = vector.multi_reduction <add>, %147, %cst_53 [0] : vector<16x128xf32> to vector<128xf32>
    %149 = vector.shape_cast %148 : vector<128xf32> to vector<1x128xf32>
    %150 = vector.extract_strided_slice %74 {offsets = [3, 0], sizes = [1, 128], strides = [1, 1]} : vector<8x128xf32> to vector<1x128xf32>
    %151 = vector.broadcast %150 : vector<1x128xf32> to vector<16x128xf32>
    %152 = arith.mulf %151, %69 : vector<16x128xf32>
    %153 = math.exp %152 : vector<16x128xf32>
    %154 = vector.extract_strided_slice %84 {offsets = [3, 0, 0], sizes = [1, 16, 128], strides = [1, 1, 1]} : vector<8x16x128xf32> to vector<1x16x128xf32>
    %155 = vector.shape_cast %154 : vector<1x16x128xf32> to vector<16x128xf32>
    %156 = vector.extract_strided_slice %155 {offsets = [0, 0], sizes = [16, 1], strides = [1, 1]} : vector<16x128xf32> to vector<16x1xf32>
    %157 = vector.extract_strided_slice %76 {offsets = [3, 0], sizes = [1, 128], strides = [1, 1]} : vector<8x128xf32> to vector<1x128xf32>
    %158 = vector.broadcast %156 : vector<16x1xf32> to vector<16x128xf32>
    %159 = vector.broadcast %157 : vector<1x128xf32> to vector<16x128xf32>
    %160 = arith.mulf %158, %159 : vector<16x128xf32>
    %161 = arith.mulf %142, %153 : vector<16x128xf32>
    %162 = arith.addf %161, %160 : vector<16x128xf32>
    %163 = vector.extract_strided_slice %88 {offsets = [3, 0, 0], sizes = [1, 16, 128], strides = [1, 1, 1]} : vector<8x16x128xf32> to vector<1x16x128xf32>
    %164 = vector.shape_cast %163 : vector<1x16x128xf32> to vector<16x128xf32>
    %165 = vector.extract_strided_slice %164 {offsets = [0, 0], sizes = [16, 1], strides = [1, 1]} : vector<16x128xf32> to vector<16x1xf32>
    %166 = vector.broadcast %165 : vector<16x1xf32> to vector<16x128xf32>
    %167 = arith.mulf %162, %166 : vector<16x128xf32>
    %cst_54 = arith.constant dense<0.000000e+00> : vector<128xf32>
    %168 = vector.multi_reduction <add>, %167, %cst_54 [0] : vector<16x128xf32> to vector<128xf32>
    %169 = vector.shape_cast %168 : vector<128xf32> to vector<1x128xf32>
    %170 = vector.extract_strided_slice %74 {offsets = [4, 0], sizes = [1, 128], strides = [1, 1]} : vector<8x128xf32> to vector<1x128xf32>
    %171 = vector.broadcast %170 : vector<1x128xf32> to vector<16x128xf32>
    %172 = arith.mulf %171, %69 : vector<16x128xf32>
    %173 = math.exp %172 : vector<16x128xf32>
    %174 = vector.extract_strided_slice %84 {offsets = [4, 0, 0], sizes = [1, 16, 128], strides = [1, 1, 1]} : vector<8x16x128xf32> to vector<1x16x128xf32>
    %175 = vector.shape_cast %174 : vector<1x16x128xf32> to vector<16x128xf32>
    %176 = vector.extract_strided_slice %175 {offsets = [0, 0], sizes = [16, 1], strides = [1, 1]} : vector<16x128xf32> to vector<16x1xf32>
    %177 = vector.extract_strided_slice %76 {offsets = [4, 0], sizes = [1, 128], strides = [1, 1]} : vector<8x128xf32> to vector<1x128xf32>
    %178 = vector.broadcast %176 : vector<16x1xf32> to vector<16x128xf32>
    %179 = vector.broadcast %177 : vector<1x128xf32> to vector<16x128xf32>
    %180 = arith.mulf %178, %179 : vector<16x128xf32>
    %181 = arith.mulf %162, %173 : vector<16x128xf32>
    %182 = arith.addf %181, %180 : vector<16x128xf32>
    %183 = vector.extract_strided_slice %88 {offsets = [4, 0, 0], sizes = [1, 16, 128], strides = [1, 1, 1]} : vector<8x16x128xf32> to vector<1x16x128xf32>
    %184 = vector.shape_cast %183 : vector<1x16x128xf32> to vector<16x128xf32>
    %185 = vector.extract_strided_slice %184 {offsets = [0, 0], sizes = [16, 1], strides = [1, 1]} : vector<16x128xf32> to vector<16x1xf32>
    %186 = vector.broadcast %185 : vector<16x1xf32> to vector<16x128xf32>
    %187 = arith.mulf %182, %186 : vector<16x128xf32>
    %cst_55 = arith.constant dense<0.000000e+00> : vector<128xf32>
    %188 = vector.multi_reduction <add>, %187, %cst_55 [0] : vector<16x128xf32> to vector<128xf32>
    %189 = vector.shape_cast %188 : vector<128xf32> to vector<1x128xf32>
    %190 = vector.extract_strided_slice %74 {offsets = [5, 0], sizes = [1, 128], strides = [1, 1]} : vector<8x128xf32> to vector<1x128xf32>
    %191 = vector.broadcast %190 : vector<1x128xf32> to vector<16x128xf32>
    %192 = arith.mulf %191, %69 : vector<16x128xf32>
    %193 = math.exp %192 : vector<16x128xf32>
    %194 = vector.extract_strided_slice %84 {offsets = [5, 0, 0], sizes = [1, 16, 128], strides = [1, 1, 1]} : vector<8x16x128xf32> to vector<1x16x128xf32>
    %195 = vector.shape_cast %194 : vector<1x16x128xf32> to vector<16x128xf32>
    %196 = vector.extract_strided_slice %195 {offsets = [0, 0], sizes = [16, 1], strides = [1, 1]} : vector<16x128xf32> to vector<16x1xf32>
    %197 = vector.extract_strided_slice %76 {offsets = [5, 0], sizes = [1, 128], strides = [1, 1]} : vector<8x128xf32> to vector<1x128xf32>
    %198 = vector.broadcast %196 : vector<16x1xf32> to vector<16x128xf32>
    %199 = vector.broadcast %197 : vector<1x128xf32> to vector<16x128xf32>
    %200 = arith.mulf %198, %199 : vector<16x128xf32>
    %201 = arith.mulf %182, %193 : vector<16x128xf32>
    %202 = arith.addf %201, %200 : vector<16x128xf32>
    %203 = vector.extract_strided_slice %88 {offsets = [5, 0, 0], sizes = [1, 16, 128], strides = [1, 1, 1]} : vector<8x16x128xf32> to vector<1x16x128xf32>
    %204 = vector.shape_cast %203 : vector<1x16x128xf32> to vector<16x128xf32>
    %205 = vector.extract_strided_slice %204 {offsets = [0, 0], sizes = [16, 1], strides = [1, 1]} : vector<16x128xf32> to vector<16x1xf32>
    %206 = vector.broadcast %205 : vector<16x1xf32> to vector<16x128xf32>
    %207 = arith.mulf %202, %206 : vector<16x128xf32>
    %cst_56 = arith.constant dense<0.000000e+00> : vector<128xf32>
    %208 = vector.multi_reduction <add>, %207, %cst_56 [0] : vector<16x128xf32> to vector<128xf32>
    %209 = vector.shape_cast %208 : vector<128xf32> to vector<1x128xf32>
    %210 = vector.extract_strided_slice %74 {offsets = [6, 0], sizes = [1, 128], strides = [1, 1]} : vector<8x128xf32> to vector<1x128xf32>
    %211 = vector.broadcast %210 : vector<1x128xf32> to vector<16x128xf32>
    %212 = arith.mulf %211, %69 : vector<16x128xf32>
    %213 = math.exp %212 : vector<16x128xf32>
    %214 = vector.extract_strided_slice %84 {offsets = [6, 0, 0], sizes = [1, 16, 128], strides = [1, 1, 1]} : vector<8x16x128xf32> to vector<1x16x128xf32>
    %215 = vector.shape_cast %214 : vector<1x16x128xf32> to vector<16x128xf32>
    %216 = vector.extract_strided_slice %215 {offsets = [0, 0], sizes = [16, 1], strides = [1, 1]} : vector<16x128xf32> to vector<16x1xf32>
    %217 = vector.extract_strided_slice %76 {offsets = [6, 0], sizes = [1, 128], strides = [1, 1]} : vector<8x128xf32> to vector<1x128xf32>
    %218 = vector.broadcast %216 : vector<16x1xf32> to vector<16x128xf32>
    %219 = vector.broadcast %217 : vector<1x128xf32> to vector<16x128xf32>
    %220 = arith.mulf %218, %219 : vector<16x128xf32>
    %221 = arith.mulf %202, %213 : vector<16x128xf32>
    %222 = arith.addf %221, %220 : vector<16x128xf32>
    %223 = vector.extract_strided_slice %88 {offsets = [6, 0, 0], sizes = [1, 16, 128], strides = [1, 1, 1]} : vector<8x16x128xf32> to vector<1x16x128xf32>
    %224 = vector.shape_cast %223 : vector<1x16x128xf32> to vector<16x128xf32>
    %225 = vector.extract_strided_slice %224 {offsets = [0, 0], sizes = [16, 1], strides = [1, 1]} : vector<16x128xf32> to vector<16x1xf32>
    %226 = vector.broadcast %225 : vector<16x1xf32> to vector<16x128xf32>
    %227 = arith.mulf %222, %226 : vector<16x128xf32>
    %cst_57 = arith.constant dense<0.000000e+00> : vector<128xf32>
    %228 = vector.multi_reduction <add>, %227, %cst_57 [0] : vector<16x128xf32> to vector<128xf32>
    %229 = vector.shape_cast %228 : vector<128xf32> to vector<1x128xf32>
    %230 = vector.extract_strided_slice %74 {offsets = [7, 0], sizes = [1, 128], strides = [1, 1]} : vector<8x128xf32> to vector<1x128xf32>
    %231 = vector.broadcast %230 : vector<1x128xf32> to vector<16x128xf32>
    %232 = arith.mulf %231, %69 : vector<16x128xf32>
    %233 = math.exp %232 : vector<16x128xf32>
    %234 = vector.extract_strided_slice %84 {offsets = [7, 0, 0], sizes = [1, 16, 128], strides = [1, 1, 1]} : vector<8x16x128xf32> to vector<1x16x128xf32>
    %235 = vector.shape_cast %234 : vector<1x16x128xf32> to vector<16x128xf32>
    %236 = vector.extract_strided_slice %235 {offsets = [0, 0], sizes = [16, 1], strides = [1, 1]} : vector<16x128xf32> to vector<16x1xf32>
    %237 = vector.extract_strided_slice %76 {offsets = [7, 0], sizes = [1, 128], strides = [1, 1]} : vector<8x128xf32> to vector<1x128xf32>
    %238 = vector.broadcast %236 : vector<16x1xf32> to vector<16x128xf32>
    %239 = vector.broadcast %237 : vector<1x128xf32> to vector<16x128xf32>
    %240 = arith.mulf %238, %239 : vector<16x128xf32>
    %241 = arith.mulf %222, %233 : vector<16x128xf32>
    %242 = arith.addf %241, %240 : vector<16x128xf32>
    %243 = vector.extract_strided_slice %88 {offsets = [7, 0, 0], sizes = [1, 16, 128], strides = [1, 1, 1]} : vector<8x16x128xf32> to vector<1x16x128xf32>
    %244 = vector.shape_cast %243 : vector<1x16x128xf32> to vector<16x128xf32>
    %245 = vector.extract_strided_slice %244 {offsets = [0, 0], sizes = [16, 1], strides = [1, 1]} : vector<16x128xf32> to vector<16x1xf32>
    %246 = vector.broadcast %245 : vector<16x1xf32> to vector<16x128xf32>
    %247 = arith.mulf %242, %246 : vector<16x128xf32>
    %cst_58 = arith.constant dense<0.000000e+00> : vector<128xf32>
    %248 = vector.multi_reduction <add>, %247, %cst_58 [0] : vector<16x128xf32> to vector<128xf32>
    %249 = vector.shape_cast %248 : vector<128xf32> to vector<1x128xf32>
    %c0_59 = arith.constant 0 : index
    %c0_60 = arith.constant 0 : index
    %250 = vector.load %arg19[%c0_59, %c0_60] : memref<16x128xf32, #tpu.memory_space<vmem>>, vector<16x128xf32>
    tpu.vector_store %arg19[%c0_59, %c0_60], %242 {strides = array<i32>} : memref<16x128xf32, #tpu.memory_space<vmem>>, vector<16x128xf32>,
    %251 = tpu.concatenate %109, %129, %149, %169, %189, %209, %229, %249 in 0 : vector<1x128xf32>, vector<1x128xf32>, vector<1x128xf32>, vector<1x128xf32>, vector<1x128xf32>, vector<1x128xf32>, vector<1x128xf32>, vector<1x128xf32> -> vector<8x128xf32>
    %252 = arith.index_cast %72 : i32 to index
    %c0_61 = arith.constant 0 : index
    %253 = vector.load %arg18[%252, %c0_61] : memref<8x128xf32, #tpu.memory_space<vmem>>, vector<8x128xf32>
    tpu.vector_store %arg18[%252, %c0_61], %251 {strides = array<i32>} : memref<8x128xf32, #tpu.memory_space<vmem>>, vector<8x128xf32>,
    %c1_i32 = arith.constant 1 : i32
    %c0_62 = arith.constant 0 : index
    %c0_63 = arith.constant 0 : index
    %254 = vector.load %arg18[%c0_62, %c0_63] : memref<8x128xf32, #tpu.memory_space<vmem>>, vector<8x128xf32>
    %c0_64 = arith.constant 0 : index
    %c0_65 = arith.constant 0 : index
    %255 = vector.load %arg11[%c0_64, %c0_65] : memref<1x128xf32, #tpu.memory_space<vmem>>, vector<1x128xf32>
    %256 = vector.broadcast %255 : vector<1x128xf32> to vector<8x128xf32>
    %257 = arith.mulf %42, %256 : vector<8x128xf32>
    %258 = arith.addf %254, %257 : vector<8x128xf32>
    %cst_66 = arith.constant 0.000000e+00 : f32
    %259 = vector.broadcast %cst_66 : f32 to vector<8x128xf32>
    %260 = arith.subf %259, %8 : vector<8x128xf32>
    %261 = math.exp %260 : vector<8x128xf32>
    %cst_67 = arith.constant 1.000000e+00 : f32
    %262 = vector.broadcast %cst_67 : f32 to vector<8x128xf32>
    %263 = arith.addf %262, %261 : vector<8x128xf32>
    %cst_68 = arith.constant 1.000000e+00 : f32
    %264 = vector.broadcast %cst_68 : f32 to vector<8x128xf32>
    %265 = arith.divf %264, %263 : vector<8x128xf32>
    %266 = arith.mulf %8, %265 : vector<8x128xf32>
    %267 = arith.mulf %258, %266 : vector<8x128xf32>
    %268 = arith.truncf %267 : vector<8x128xf32> to vector<8x128xbf16>
    %c0_69 = arith.constant 0 : index
    %c0_70 = arith.constant 0 : index
    %269 = vector.load %arg12[%c0_69, %c0_70] : memref<128x64xbf16, #tpu.memory_space<vmem>>, vector<128x64xbf16>
    %cst_71 = arith.constant dense<0.000000e+00> : vector<8x64xf32>
    %270 = tpu.matmul %268, %269, %cst_71 {dimension_numbers = #tpu.dot_dimension_numbers<[1], [0], [0], [1], [0, 0, 1, 1], [], []>} : vector<8x128xbf16>, vector<128x64xbf16>, vector<8x64xf32> -> vector<8x64xf32>
    %c0_72 = arith.constant 0 : index
    %c0_73 = arith.constant 0 : index
    %c0_74 = arith.constant 0 : index
    %271 = vector.load %arg13[%c0_72, %c0_73, %c0_74] : memref<1x8x64xf32, #tpu.memory_space<vmem>>, vector<1x8x64xf32>
    %272 = vector.shape_cast %271 : vector<1x8x64xf32> to vector<8x64xf32>
    %273 = vector.shape_cast %270 : vector<8x64xf32> to vector<1x8x64xf32>
    tpu.vector_store %arg13[%c0_72, %c0_73, %c0_74], %273 {strides = array<i32>} : memref<1x8x64xf32, #tpu.memory_space<vmem>>, vector<1x8x64xf32>,
    return
  }
  func.func @transform_0(%arg0: i32, %arg1: i32) -> (i32, i32, i32) {
    %c0_i32 = arith.constant 0 : i32
    %c0_i32_0 = arith.constant 0 : i32
    return %arg0, %arg1, %c0_i32 : i32, i32, i32
  }
  func.func @transform_1(%arg0: i32, %arg1: i32) -> (i32, i32) {
    %c0_i32 = arith.constant 0 : i32
    %c0_i32_0 = arith.constant 0 : i32
    %c0_i32_1 = arith.constant 0 : i32
    return %c0_i32, %c0_i32_0 : i32, i32
  }
  func.func @transform_2(%arg0: i32, %arg1: i32) -> (i32, i32) {
    %c0_i32 = arith.constant 0 : i32
    %c0_i32_0 = arith.constant 0 : i32
    %c0_i32_1 = arith.constant 0 : i32
    return %c0_i32, %c0_i32_0 : i32, i32
  }
  func.func @transform_3(%arg0: i32, %arg1: i32) -> (i32, i32) {
    %c0_i32 = arith.constant 0 : i32
    %c0_i32_0 = arith.constant 0 : i32
    %c0_i32_1 = arith.constant 0 : i32
    return %c0_i32, %c0_i32_0 : i32, i32
  }
  func.func @transform_4(%arg0: i32, %arg1: i32) -> (i32, i32) {
    %c0_i32 = arith.constant 0 : i32
    %c0_i32_0 = arith.constant 0 : i32
    %c0_i32_1 = arith.constant 0 : i32
    return %c0_i32, %c0_i32_0 : i32, i32
  }
  func.func @transform_5(%arg0: i32, %arg1: i32) -> (i32, i32) {
    %c0_i32 = arith.constant 0 : i32
    %c0_i32_0 = arith.constant 0 : i32
    %c0_i32_1 = arith.constant 0 : i32
    return %c0_i32, %c0_i32_0 : i32, i32
  }
  func.func @transform_6(%arg0: i32, %arg1: i32) -> (i32, i32) {
    %c0_i32 = arith.constant 0 : i32
    %c0_i32_0 = arith.constant 0 : i32
    %c0_i32_1 = arith.constant 0 : i32
    return %c0_i32, %c0_i32_0 : i32, i32
  }
  func.func @transform_7(%arg0: i32, %arg1: i32) -> (i32, i32) {
    %c0_i32 = arith.constant 0 : i32
    %c0_i32_0 = arith.constant 0 : i32
    %c0_i32_1 = arith.constant 0 : i32
    return %c0_i32, %c0_i32_0 : i32, i32
  }
  func.func @transform_8(%arg0: i32, %arg1: i32) -> (i32, i32) {
    %c0_i32 = arith.constant 0 : i32
    %c0_i32_0 = arith.constant 0 : i32
    %c0_i32_1 = arith.constant 0 : i32
    return %c0_i32, %c0_i32_0 : i32, i32
  }
  func.func @transform_9(%arg0: i32, %arg1: i32) -> (i32, i32) {
    %c0_i32 = arith.constant 0 : i32
    %c0_i32_0 = arith.constant 0 : i32
    %c0_i32_1 = arith.constant 0 : i32
    return %c0_i32, %c0_i32_0 : i32, i32
  }
  func.func @transform_10(%arg0: i32, %arg1: i32) -> (i32, i32) {
    %c0_i32 = arith.constant 0 : i32
    %c0_i32_0 = arith.constant 0 : i32
    %c0_i32_1 = arith.constant 0 : i32
    return %c0_i32, %c0_i32_0 : i32, i32
  }
  func.func @transform_11(%arg0: i32, %arg1: i32) -> (i32, i32, i32) {
    %c0_i32 = arith.constant 0 : i32
    %c0_i32_0 = arith.constant 0 : i32
    return %arg0, %arg1, %c0_i32 : i32, i32, i32
  }
}

</mosaic_0001>

<llo_original>
// kernel: tpu_custom_call.1
$region0: #{tpu_custom_call.1}
  #allocation0 [shape = 'u32[]', space=smem, size = 0x4, offset = 0x4, fixed_abs, tag = 'smem constant byte address 0x4 - core index']
  #allocation1 [shape = 'u32[144,128]{1,0:T(1,128)}', space=vmem, size = 0x12000, scoped, tag = 'internal scratch']
  #allocation2 [shape = 'f32[8,128]{1,0:T(8,128)}', space=vmem, size = 0x1000, scoped, tag = 'scratch operand']
  #allocation3 [shape = 'f32[8,128]{1,0:T(8,128)}', space=vmem, size = 0x1000, scoped, tag = 'scratch operand']
  #allocation4 [shape = 'f32[8,16]{1,0:T(8,128)}', space=vmem, size = 0x1000, scoped, tag = 'scratch operand']
  #allocation5 [shape = 'f32[8,16]{1,0:T(8,128)}', space=vmem, size = 0x1000, scoped, tag = 'scratch operand']
  #allocation6 [shape = 'f32[8,128]{1,0:T(8,128)}', space=vmem, size = 0x1000, scoped, tag = 'scratch operand']
  #allocation7 [shape = 'f32[16,128]{1,0:T(8,128)}', space=vmem, size = 0x2000, scoped, tag = 'scratch operand']
  #allocation8 [shape = 'f32[3,128]{1,0:T(4,128)}', space=vmem, size = 0x800, scoped, tag = 'scratch operand']
  %s0 = inlined_call_operand.vmem [shape: bf16[2,16,64], index: 0, kind: input, shape index: {}]
  %s1 = inlined_call_operand.vmem [shape: bf16[64,256], index: 1, kind: input, shape index: {}]
  %s2 = inlined_call_operand.vmem [shape: f32[4,128], index: 2, kind: input, shape index: {}]
  %s3 = inlined_call_operand.vmem [shape: f32[1,128], index: 3, kind: input, shape index: {}]
  %s4 = inlined_call_operand.vmem [shape: bf16[128,32], index: 4, kind: input, shape index: {}]
  %s5 = inlined_call_operand.vmem [shape: f32[128,4], index: 5, kind: input, shape index: {}]
  %s6 = inlined_call_operand.vmem [shape: f32[4,128], index: 6, kind: input, shape index: {}]
  %s7 = inlined_call_operand.vmem [shape: f32[1,128], index: 7, kind: input, shape index: {}]
  %s8 = inlined_call_operand.vmem [shape: f32[16,128], index: 8, kind: input, shape index: {}]
  %s9 = inlined_call_operand.vmem [shape: f32[1,128], index: 9, kind: input, shape index: {}]
  %s10 = inlined_call_operand.vmem [shape: bf16[128,64], index: 10, kind: input, shape index: {}]
  %s11 = inlined_call_operand.hbm [shape: f32[2,16,64], index: 11, kind: output, shape index: {}]
  %s12 = sld [smem:[#allocation0]]
  $region81: #{tpu_custom_call.1} parent=0
    _
  %s14 = ssub.s32 1, %s12
  %s15 = scalar_select 0, %s14, %s12
  $region1: #{tpu_custom_call.1} parent=0
    #allocation9 [shape = 'u8[8192]{0}', space=vmem, size = 0x2000, scoped, tag = 'output window, operand 0']
    #allocation10 [shape = 's32[2]{0}', space=sflag, size = 0x8, scoped, tag = 'scoped memory for tpu_custom_call.1']
    %16 = vsyncpa [#allocation10], 0
    %s17 = scalar_lea.sflag [#allocation10], 1
    %18 = vsyncpa %s17, 0
    loop: start=0, step=1, limit=6
    $region2: #{tpu_custom_call.1} parent=1 // loop_pre_header
      _
    $region3: #{tpu_custom_call.1} parent=1 // loop_header
      %s20 = sphi 0, %s24
      %p21 = scmp.ge.s32.totalorder %s20, 6
      %s27 = sphi 0, %s39
      %s28 = sphi 0, %s35
      %s29 = sphi 0, %s27
      %s30 = sphi 0, %s28
      %s31 = sphi 0, %s29
      %s32 = sphi 0, %s30
      %s44 = sphi 0, %s46
      %s47 = sphi 0, %s44
      %s48 = sphi 0, %s47
      %s64 = sphi 0, %s48
      %s68 = sphi 0, %s68
      %s70 = sphi 0, %s68
      %s71 = sphi 0, %s70
      %s85 = sphi 0, %s71
      %s89 = sphi 0, %s89
      %s91 = sphi 0, %s89
      %s92 = sphi 0, %s91
      %s106 = sphi 0, %s92
      %s110 = sphi 0, %s110
      %s112 = sphi 0, %s110
      %s113 = sphi 0, %s112
      %s127 = sphi 0, %s113
      %s131 = sphi 0, %s131
      %s133 = sphi 0, %s131
      %s134 = sphi 0, %s133
      %s148 = sphi 0, %s134
      %s152 = sphi 0, %s152
      %s154 = sphi 0, %s152
      %s155 = sphi 0, %s154
      %s169 = sphi 0, %s155
      %s173 = sphi 0, %s173
      %s175 = sphi 0, %s173
      %s176 = sphi 0, %s175
      %s190 = sphi 0, %s176
      %s194 = sphi 0, %s194
      %s196 = sphi 0, %s194
      %s197 = sphi 0, %s196
      %s211 = sphi 0, %s197
      %s215 = sphi 0, %s215
      %s217 = sphi 0, %s215
      %s218 = sphi 0, %s217
      %s232 = sphi 0, %s218
      %s236 = sphi 0, %s236
      %s238 = sphi 0, %s236
      %s239 = sphi 0, %s238
      %s253 = sphi 0, %s239
      %s257 = sphi 0, %s257
      %s259 = sphi 0, %s257
      %s260 = sphi 0, %s259
      %s274 = sphi 0, %s260
      %s282 = sphi 0, %s284
      %s285 = sphi 0, %s282
      %s286 = sphi 0, %s285
      %s302 = sphi 0, %s286
    $region4: #{tpu_custom_call.1} parent=1 // loop_header_branch
      %23 = sbr.rel (%p21) target = $region8
    $region5: #{tpu_custom_call.1} parent=1 // loop_body
      %s25 = ssub.s32 %s20, 1
      %s26 = ssub.s32 %s20, 2
      %s33 = sadd.s32 1, %s28
      %p34 = scmp.ge.s32.totalorder %s33, 2
      %s35 = scalar_select %p34, 0, %s33
      %s36 = sadd.s32 1, %s27
      %s37 = scalar_select %p34, %s36, %s27
      %p38 = scmp.ge.s32.totalorder %s37, 2
      %s39 = scalar_select %p38, 0, %s37
      %s40 = ssub.s32 %s27, %s39
      %s41 = ssub.s32 %s28, %s35
      %s42 = sor.u32 %s40, %s41
      %p43 = scmp.eq.s32.totalorder %s42, 0
      %s45 = sadd.s32 %s44, 1
      %s46 = scalar_select %p43, %s44, %s45
      %p49 = pneg %p43
      %p50 = scmp.eq.s32.totalorder %s20, 3
      %p51 = por %p49, %p50
      %p52 = scmp.ne.s32.totalorder %s44, %s47
      %p53 = scmp.eq.s32.totalorder %s20, 0
      %p54 = por %p52, %p53
      %p55 = scmp.ne.s32.totalorder %s44, %s47
      %p56 = scmp.eq.s32.totalorder %s25, 3
      %p57 = por %p55, %p56
      %p58 = scmp.ne.s32.totalorder %s47, %s48
      %p59 = scmp.eq.s32.totalorder %s25, 0
      %p60 = por %p58, %p59
      %p61 = scmp.ne.s32.totalorder %s47, %s48
      %p62 = scmp.eq.s32.totalorder %s26, 3
      %p63 = por %p61, %p62
      %p65 = scmp.ne.s32.totalorder %s48, %s64
      %p66 = scmp.eq.s32.totalorder %s26, 0
      %p67 = por %p65, %p66
      %s69 = sadd.s32 %s68, 1
      %p72 = scmp.eq.s32.totalorder %s20, 3
      %p73 = scmp.ne.s32.totalorder %s68, %s70
      %p74 = scmp.eq.s32.totalorder %s20, 0
      %p75 = por %p73, %p74
      %p76 = scmp.ne.s32.totalorder %s68, %s70
      %p77 = scmp.eq.s32.totalorder %s25, 3
      %p78 = por %p76, %p77
      %p79 = scmp.ne.s32.totalorder %s70, %s71
      %p80 = scmp.eq.s32.totalorder %s25, 0
      %p81 = por %p79, %p80
      %p82 = scmp.ne.s32.totalorder %s70, %s71
      %p83 = scmp.eq.s32.totalorder %s26, 3
      %p84 = por %p82, %p83
      %p86 = scmp.ne.s32.totalorder %s71, %s85
      %p87 = scmp.eq.s32.totalorder %s26, 0
      %p88 = por %p86, %p87
      %s90 = sadd.s32 %s89, 1
      %p93 = scmp.eq.s32.totalorder %s20, 3
      %p94 = scmp.ne.s32.totalorder %s89, %s91
      %p95 = scmp.eq.s32.totalorder %s20, 0
      %p96 = por %p94, %p95
      %p97 = scmp.ne.s32.totalorder %s89, %s91
      %p98 = scmp.eq.s32.totalorder %s25, 3
      %p99 = por %p97, %p98
      %p100 = scmp.ne.s32.totalorder %s91, %s92
      %p101 = scmp.eq.s32.totalorder %s25, 0
      %p102 = por %p100, %p101
      %p103 = scmp.ne.s32.totalorder %s91, %s92
      %p104 = scmp.eq.s32.totalorder %s26, 3
      %p105 = por %p103, %p104
      %p107 = scmp.ne.s32.totalorder %s92, %s106
      %p108 = scmp.eq.s32.totalorder %s26, 0
      %p109 = por %p107, %p108
      %s111 = sadd.s32 %s110, 1
      %p114 = scmp.eq.s32.totalorder %s20, 3
      %p115 = scmp.ne.s32.totalorder %s110, %s112
      %p116 = scmp.eq.s32.totalorder %s20, 0
      %p117 = por %p115, %p116
      %p118 = scmp.ne.s32.totalorder %s110, %s112
      %p119 = scmp.eq.s32.totalorder %s25, 3
      %p120 = por %p118, %p119
      %p121 = scmp.ne.s32.totalorder %s112, %s113
      %p122 = scmp.eq.s32.totalorder %s25, 0
      %p123 = por %p121, %p122
      %p124 = scmp.ne.s32.totalorder %s112, %s113
      %p125 = scmp.eq.s32.totalorder %s26, 3
      %p126 = por %p124, %p125
      %p128 = scmp.ne.s32.totalorder %s113, %s127
      %p129 = scmp.eq.s32.totalorder %s26, 0
      %p130 = por %p128, %p129
      %s132 = sadd.s32 %s131, 1
      %p135 = scmp.eq.s32.totalorder %s20, 3
      %p136 = scmp.ne.s32.totalorder %s131, %s133
      %p137 = scmp.eq.s32.totalorder %s20, 0
      %p138 = por %p136, %p137
      %p139 = scmp.ne.s32.totalorder %s131, %s133
      %p140 = scmp.eq.s32.totalorder %s25, 3
      %p141 = por %p139, %p140
      %p142 = scmp.ne.s32.totalorder %s133, %s134
      %p143 = scmp.eq.s32.totalorder %s25, 0
      %p144 = por %p142, %p143
      %p145 = scmp.ne.s32.totalorder %s133, %s134
      %p146 = scmp.eq.s32.totalorder %s26, 3
      %p147 = por %p145, %p146
      %p149 = scmp.ne.s32.totalorder %s134, %s148
      %p150 = scmp.eq.s32.totalorder %s26, 0
      %p151 = por %p149, %p150
      %s153 = sadd.s32 %s152, 1
      %p156 = scmp.eq.s32.totalorder %s20, 3
      %p157 = scmp.ne.s32.totalorder %s152, %s154
      %p158 = scmp.eq.s32.totalorder %s20, 0
      %p159 = por %p157, %p158
      %p160 = scmp.ne.s32.totalorder %s152, %s154
      %p161 = scmp.eq.s32.totalorder %s25, 3
      %p162 = por %p160, %p161
      %p163 = scmp.ne.s32.totalorder %s154, %s155
      %p164 = scmp.eq.s32.totalorder %s25, 0
      %p165 = por %p163, %p164
      %p166 = scmp.ne.s32.totalorder %s154, %s155
      %p167 = scmp.eq.s32.totalorder %s26, 3
      %p168 = por %p166, %p167
      %p170 = scmp.ne.s32.totalorder %s155, %s169
      %p171 = scmp.eq.s32.totalorder %s26, 0
      %p172 = por %p170, %p171
      %s174 = sadd.s32 %s173, 1
      %p177 = scmp.eq.s32.totalorder %s20, 3
      %p178 = scmp.ne.s32.totalorder %s173, %s175
      %p179 = scmp.eq.s32.totalorder %s20, 0
      %p180 = por %p178, %p179
      %p181 = scmp.ne.s32.totalorder %s173, %s175
      %p182 = scmp.eq.s32.totalorder %s25, 3
      %p183 = por %p181, %p182
      %p184 = scmp.ne.s32.totalorder %s175, %s176
      %p185 = scmp.eq.s32.totalorder %s25, 0
      %p186 = por %p184, %p185
      %p187 = scmp.ne.s32.totalorder %s175, %s176
      %p188 = scmp.eq.s32.totalorder %s26, 3
      %p189 = por %p187, %p188
      %p191 = scmp.ne.s32.totalorder %s176, %s190
      %p192 = scmp.eq.s32.totalorder %s26, 0
      %p193 = por %p191, %p192
      %s195 = sadd.s32 %s194, 1
      %p198 = scmp.eq.s32.totalorder %s20, 3
      %p199 = scmp.ne.s32.totalorder %s194, %s196
      %p200 = scmp.eq.s32.totalorder %s20, 0
      %p201 = por %p199, %p200
      %p202 = scmp.ne.s32.totalorder %s194, %s196
      %p203 = scmp.eq.s32.totalorder %s25, 3
      %p204 = por %p202, %p203
      %p205 = scmp.ne.s32.totalorder %s196, %s197
      %p206 = scmp.eq.s32.totalorder %s25, 0
      %p207 = por %p205, %p206
      %p208 = scmp.ne.s32.totalorder %s196, %s197
      %p209 = scmp.eq.s32.totalorder %s26, 3
      %p210 = por %p208, %p209
      %p212 = scmp.ne.s32.totalorder %s197, %s211
      %p213 = scmp.eq.s32.totalorder %s26, 0
      %p214 = por %p212, %p213
      %s216 = sadd.s32 %s215, 1
      %p219 = scmp.eq.s32.totalorder %s20, 3
      %p220 = scmp.ne.s32.totalorder %s215, %s217
      %p221 = scmp.eq.s32.totalorder %s20, 0
      %p222 = por %p220, %p221
      %p223 = scmp.ne.s32.totalorder %s215, %s217
      %p224 = scmp.eq.s32.totalorder %s25, 3
      %p225 = por %p223, %p224
      %p226 = scmp.ne.s32.totalorder %s217, %s218
      %p227 = scmp.eq.s32.totalorder %s25, 0
      %p228 = por %p226, %p227
      %p229 = scmp.ne.s32.totalorder %s217, %s218
      %p230 = scmp.eq.s32.totalorder %s26, 3
      %p231 = por %p229, %p230
      %p233 = scmp.ne.s32.totalorder %s218, %s232
      %p234 = scmp.eq.s32.totalorder %s26, 0
      %p235 = por %p233, %p234
      %s237 = sadd.s32 %s236, 1
      %p240 = scmp.eq.s32.totalorder %s20, 3
      %p241 = scmp.ne.s32.totalorder %s236, %s238
      %p242 = scmp.eq.s32.totalorder %s20, 0
      %p243 = por %p241, %p242
      %p244 = scmp.ne.s32.totalorder %s236, %s238
      %p245 = scmp.eq.s32.totalorder %s25, 3
      %p246 = por %p244, %p245
      %p247 = scmp.ne.s32.totalorder %s238, %s239
      %p248 = scmp.eq.s32.totalorder %s25, 0
      %p249 = por %p247, %p248
      %p250 = scmp.ne.s32.totalorder %s238, %s239
      %p251 = scmp.eq.s32.totalorder %s26, 3
      %p252 = por %p250, %p251
      %p254 = scmp.ne.s32.totalorder %s239, %s253
      %p255 = scmp.eq.s32.totalorder %s26, 0
      %p256 = por %p254, %p255
      %s258 = sadd.s32 %s257, 1
      %p261 = scmp.eq.s32.totalorder %s20, 3
      %p262 = scmp.ne.s32.totalorder %s257, %s259
      %p263 = scmp.eq.s32.totalorder %s20, 0
      %p264 = por %p262, %p263
      %p265 = scmp.ne.s32.totalorder %s257, %s259
      %p266 = scmp.eq.s32.totalorder %s25, 3
      %p267 = por %p265, %p266
      %p268 = scmp.ne.s32.totalorder %s259, %s260
      %p269 = scmp.eq.s32.totalorder %s25, 0
      %p270 = por %p268, %p269
      %p271 = scmp.ne.s32.totalorder %s259, %s260
      %p272 = scmp.eq.s32.totalorder %s26, 3
      %p273 = por %p271, %p272
      %p275 = scmp.ne.s32.totalorder %s260, %s274
      %p276 = scmp.eq.s32.totalorder %s26, 0
      %p277 = por %p275, %p276
      %s278 = ssub.s32 %s27, %s39
      %s279 = ssub.s32 %s28, %s35
      %s280 = sor.u32 %s278, %s279
      %p281 = scmp.eq.s32.totalorder %s280, 0
      %s283 = sadd.s32 %s282, 1
      %s284 = scalar_select %p281, %s282, %s283
      %p287 = pneg %p281
      %p288 = scmp.eq.s32.totalorder %s20, 3
      %p289 = por %p287, %p288
      %p290 = scmp.ne.s32.totalorder %s282, %s285
      %p291 = scmp.eq.s32.totalorder %s20, 0
      %p292 = por %p290, %p291
      %p293 = scmp.ne.s32.totalorder %s282, %s285
      %p294 = scmp.eq.s32.totalorder %s25, 3
      %p295 = por %p293, %p294
      %p296 = scmp.ne.s32.totalorder %s285, %s286
      %p297 = scmp.eq.s32.totalorder %s25, 0
      %p298 = por %p296, %p297
      %p299 = scmp.ne.s32.totalorder %s285, %s286
      %p300 = scmp.eq.s32.totalorder %s26, 3
      %p301 = por %p299, %p300
      %p303 = scmp.ne.s32.totalorder %s286, %s302
      %p304 = scmp.eq.s32.totalorder %s26, 0
      %p305 = por %p303, %p304
      %p306 = scmp.le.s32.totalorder 1, %s20
      %p307 = scmp.lt.s32.totalorder %s20, 5
      %p308 = pnand %p306, %p307
      %p309 = pneg %p308
      // Predicated region
      $region9: #{tpu_custom_call.1} parent=5 // pred_check
        _
      $region10: #{tpu_custom_call.1} parent=5 // pred_check_branch
        %311 = sbr.rel (%p308) target = $region12
      $region11: #{tpu_custom_call.1} parent=5 // pred_region
        %s312 = ssub.s32 %s20, 1
        // Predicated region
        $region13: #{tpu_custom_call.1} parent=11 // pred_check
          %p313 = pneg %p81
        $region14: #{tpu_custom_call.1} parent=11 // pred_check_branch
          %315 = sbr.rel (%p313) target = $region16
        $region15: #{tpu_custom_call.1} parent=11 // pred_region
          _
        $region16: #{tpu_custom_call.1} parent=11 // pred_fallthru
          _
        // Predicated region
        $region17: #{tpu_custom_call.1} parent=11 // pred_check
          %p316 = pneg %p102
        $region18: #{tpu_custom_call.1} parent=11 // pred_check_branch
          %318 = sbr.rel (%p316) target = $region20
        $region19: #{tpu_custom_call.1} parent=11 // pred_region
          _
        $region20: #{tpu_custom_call.1} parent=11 // pred_fallthru
          _
        // Predicated region
        $region21: #{tpu_custom_call.1} parent=11 // pred_check
          %p319 = pneg %p123
        $region22: #{tpu_custom_call.1} parent=11 // pred_check_branch
          %321 = sbr.rel (%p319) target = $region24
        $region23: #{tpu_custom_call.1} parent=11 // pred_region
          _
        $region24: #{tpu_custom_call.1} parent=11 // pred_fallthru
          _
        // Predicated region
        $region25: #{tpu_custom_call.1} parent=11 // pred_check
          %p322 = pneg %p144
        $region26: #{tpu_custom_call.1} parent=11 // pred_check_branch
          %324 = sbr.rel (%p322) target = $region28
        $region27: #{tpu_custom_call.1} parent=11 // pred_region
          _
        $region28: #{tpu_custom_call.1} parent=11 // pred_fallthru
          _
        // Predicated region
        $region29: #{tpu_custom_call.1} parent=11 // pred_check
          %p325 = pneg %p165
        $region30: #{tpu_custom_call.1} parent=11 // pred_check_branch
          %327 = sbr.rel (%p325) target = $region32
        $region31: #{tpu_custom_call.1} parent=11 // pred_region
          _
        $region32: #{tpu_custom_call.1} parent=11 // pred_fallthru
          _
        // Predicated region
        $region33: #{tpu_custom_call.1} parent=11 // pred_check
          %p328 = pneg %p186
        $region34: #{tpu_custom_call.1} parent=11 // pred_check_branch
          %330 = sbr.rel (%p328) target = $region36
        $region35: #{tpu_custom_call.1} parent=11 // pred_region
          _
        $region36: #{tpu_custom_call.1} parent=11 // pred_fallthru
          _
        // Predicated region
        $region37: #{tpu_custom_call.1} parent=11 // pred_check
          %p331 = pneg %p207
        $region38: #{tpu_custom_call.1} parent=11 // pred_check_branch
          %333 = sbr.rel (%p331) target = $region40
        $region39: #{tpu_custom_call.1} parent=11 // pred_region
          _
        $region40: #{tpu_custom_call.1} parent=11 // pred_fallthru
          _
        // Predicated region
        $region41: #{tpu_custom_call.1} parent=11 // pred_check
          %p334 = pneg %p228
        $region42: #{tpu_custom_call.1} parent=11 // pred_check_branch
          %336 = sbr.rel (%p334) target = $region44
        $region43: #{tpu_custom_call.1} parent=11 // pred_region
          _
        $region44: #{tpu_custom_call.1} parent=11 // pred_fallthru
          _
        // Predicated region
        $region45: #{tpu_custom_call.1} parent=11 // pred_check
          %p337 = pneg %p249
        $region46: #{tpu_custom_call.1} parent=11 // pred_check_branch
          %339 = sbr.rel (%p337) target = $region48
        $region47: #{tpu_custom_call.1} parent=11 // pred_region
          _
        $region48: #{tpu_custom_call.1} parent=11 // pred_fallthru
          _
        // Predicated region
        $region49: #{tpu_custom_call.1} parent=11 // pred_check
          %p340 = pneg %p270
        $region50: #{tpu_custom_call.1} parent=11 // pred_check_branch
          %342 = sbr.rel (%p340) target = $region52
        $region51: #{tpu_custom_call.1} parent=11 // pred_region
          _
        $region52: #{tpu_custom_call.1} parent=11 // pred_fallthru
          _
      $region12: #{tpu_custom_call.1} parent=5 // pred_fallthru
        _
      %p343 = scmp.lt.s32.totalorder %s20, 4
      // Predicated region
      $region53: #{tpu_custom_call.1} parent=5 // pred_check
        %p344 = pneg %p343
      $region54: #{tpu_custom_call.1} parent=5 // pred_check_branch
        %346 = sbr.rel (%p344) target = $region56
      $region55: #{tpu_custom_call.1} parent=5 // pred_region
        // Predicated region
        $region57: #{tpu_custom_call.1} parent=55 // pred_check
          %p347 = pneg %p54
        $region58: #{tpu_custom_call.1} parent=55 // pred_check_branch
          %349 = sbr.rel (%p347) target = $region60
        $region59: #{tpu_custom_call.1} parent=55 // pred_region
          %p350 = scmp.lt.s32.totalorder %s27, 1
          %s351 = scalar_select %p350, %s27, 1
          %p352 = scmp.lt.s32.totalorder %s28, 1
          %s353 = scalar_select %p352, %s28, 1
          %s354 = smul.addr %s351, 2
          %s355 = sadd.s32 %s353, %s354
          %s356 = smul.addr %s355, 4
          %s357 = scalar_lea.vmem %s0, %s356
        $region60: #{tpu_custom_call.1} parent=55 // pred_fallthru
          _
      $region56: #{tpu_custom_call.1} parent=5 // pred_fallthru
        _
      %p358 = scmp.le.s32.totalorder 1, %s20
      %p359 = scmp.lt.s32.totalorder %s20, 5
      %p360 = pnand %p358, %p359
      %p361 = pneg %p360
      // Predicated region
      $region61: #{tpu_custom_call.1} parent=5 // pred_check
        _
      $region62: #{tpu_custom_call.1} parent=5 // pred_check_branch
        %363 = sbr.rel (%p360) target = $region64
      $region63: #{tpu_custom_call.1} parent=5 // pred_region
        %s364 = ssub.s32 %s20, 1
        %p365 = scmp.lt.s32.totalorder %s29, 1
        %s366 = scalar_select %p365, %s29, 1
        %p367 = scmp.lt.s32.totalorder %s30, 1
        %s368 = scalar_select %p367, %s30, 1
        %s369 = smul.addr %s366, 2
        %s370 = sadd.s32 %s368, %s369
        %s371 = smul.addr %s370, 4
        %s372 = scalar_lea.vmem %s0, %s371
        %p373 = pneg %p60
        %p374 = pneg %p57
        %p375 = pneg %p81
        %p376 = pneg %p78
        %p377 = pneg %p102
        %p378 = pneg %p99
        %p379 = pneg %p123
        %p380 = pneg %p120
        %p381 = pneg %p144
        %p382 = pneg %p141
        %p383 = pneg %p165
        %p384 = pneg %p162
        %p385 = pneg %p186
        %p386 = pneg %p183
        %p387 = pneg %p207
        %p388 = pneg %p204
        %p389 = pneg %p228
        %p390 = pneg %p225
        %p391 = pneg %p249
        %p392 = pneg %p246
        %p393 = pneg %p270
        %p394 = pneg %p267
        %p395 = pneg %p298
        %p396 = pneg %p295
        %s397 = sand.u32 %s285, 1
        %s398 = scalar_lea.sflag [#allocation10], %s397
        %s399 = sand.u32 %s285, 1
        %s400 = smul.addr %s399, 8
        %s401 = scalar_lea.vmem [#allocation9], %s400
        %p402 = scmp.lt.s32.totalorder %s29, 1
        %s403 = scalar_select %p402, %s29, 1
        %p404 = scmp.lt.s32.totalorder %s30, 1
        %s405 = scalar_select %p404, %s30, 1
        %s406 = smul.addr %s403, 2
        %s407 = sadd.s32 %s405, %s406
        %s408 = smul.addr %s407, 4
        %s409 = scalar_lea.vmem %s0, %s408
        %p411 = scmp.eq.s32.totalorder %s30, 0
        // Predicated region
        $region65: #{tpu_custom_call.1} parent=63 // pred_check
          %p412 = pneg %p411
        $region66: #{tpu_custom_call.1} parent=63 // pred_check_branch
          %414 = sbr.rel (%p412) target = $region68
        $region67: #{tpu_custom_call.1} parent=63 // pred_region
          %415 = vst [vmem:[#allocation7] sm:$0xff] 0.0
          %416 = vst [vmem:[#allocation7 + $0x8] sm:$0xff] 0.0
          %417 = vst [vmem:[#allocation8] sm:$0x7] 0.0
        $region68: #{tpu_custom_call.1} parent=63 // pred_fallthru
          _
        %v418 = vld [vmem:[%s409] sm:$0xf]
        %v419 = vld [vmem:[%s1] sm:$0xff]
        %v420 = vld [vmem:[%s1 + $0x8] sm:$0xff]
        %v421 = vld [vmem:[%s1 + $0x10] sm:$0xff]
        %v422 = vld [vmem:[%s1 + $0x18] sm:$0xff]
        %v423 = vld [vmem:[%s1 + $0x20] sm:$0xff]
        %v424 = vld [vmem:[%s1 + $0x28] sm:$0xff]
        %v425 = vld [vmem:[%s1 + $0x30] sm:$0xff]
        %v426 = vld [vmem:[%s1 + $0x38] sm:$0xff]
        %v435 = vunpack.c.l.b16 %v419
        %v436 = vunpack.c.h.b16 %v419
        %v437 = vunpack.c.l.b16 %v420
        %v438 = vunpack.c.h.b16 %v420
        %v439 = vunpack.c.l.b16 %v421
        %v440 = vunpack.c.h.b16 %v421
        %v441 = vunpack.c.l.b16 %v422
        %v442 = vunpack.c.h.b16 %v422
        %v443 = vunpack.c.l.b16 %v423
        %v444 = vunpack.c.h.b16 %v423
        %v445 = vunpack.c.l.b16 %v424
        %v446 = vunpack.c.h.b16 %v424
        %v447 = vunpack.c.l.b16 %v425
        %v448 = vunpack.c.h.b16 %v425
        %v449 = vunpack.c.l.b16 %v426
        %v450 = vunpack.c.h.b16 %v426
        %v451 = vpack.c.b16 %v437, %v435
        %v452 = vpack.c.b16 %v438, %v436
        %v453 = vpack.c.b16 %v441, %v439
        %v454 = vpack.c.b16 %v442, %v440
        %v455 = vpack.c.b16 %v445, %v443
        %v456 = vpack.c.b16 %v446, %v444
        %v457 = vpack.c.b16 %v449, %v447
        %v458 = vpack.c.b16 %v450, %v448
        %vm467 = vcmask 523264
        %v469 = vsel %vm467, %v418, 0
        %471 = vmatprep.subr.bf16.mxu0 %v452
        %472 = vmatpush1.bf16.msra.mxu0 %v451
        %473 = vmatprep.subr.bf16.mxu0 %v454
        %474 = vmatpush1.bf16.msra.mxu0 %v453
        %475 = vmatprep.subr.bf16.mxu0 %v456
        %476 = vmatpush1.bf16.msra.mxu0 %v455
        %477 = vmatprep.subr.bf16.mxu0 %v458
        %478 = vmatpush1.bf16.msra.mxu0 %v457
        %479 = vmatprep.subr.bf16.mxu0 0
        %480 = vmatpush1.bf16.msra.mxu0 0
        %481 = vmatprep.subr.bf16.mxu0 0
        %482 = vmatpush1.bf16.msra.mxu0 0
        %483 = vmatprep.subr.bf16.mxu0 0
        %484 = vmatpush1.bf16.msra.mxu0 0
        %485 = vmatprep.subr.bf16.mxu0 0
        %486 = vmatpush1.bf16.msra.mxu0 0
        %487 = vmatprep.subr.bf16.mxu0 0
        %488 = vmatpush1.bf16.msra.mxu0 0
        %489 = vmatprep.subr.bf16.mxu0 0
        %490 = vmatpush1.bf16.msra.mxu0 0
        %491 = vmatprep.subr.bf16.mxu0 0
        %492 = vmatpush1.bf16.msra.mxu0 0
        %493 = vmatprep.subr.bf16.mxu0 0
        %494 = vmatpush1.bf16.msra.mxu0 0
        %495 = vmatprep.subr.bf16.mxu0 0
        %496 = vmatpush1.bf16.msra.mxu0 0
        %497 = vmatprep.subr.bf16.mxu0 0
        %498 = vmatpush1.bf16.msra.mxu0 0
        %499 = vmatprep.subr.bf16.mxu0 0
        %500 = vmatpush1.bf16.msra.mxu0 0
        %501 = vmatprep.subr.bf16.mxu0 0
        %502 = vmatpush1.bf16.msra.mxu0 0
        %503 = vmatprep.mubr.bf16.mxu0 0
        %504 = vmatmul.mubr.bf16.gmra.mrb[0].mxu0 %v469
        %v505 = vpop.f32.mrb[0].mxu0
        %v506 = vadd.f32 0.0, %v505
        %v507 = vpop.f32.mrb[0].mxu0
        %v508 = vadd.f32 0.0, %v507
        %v509 = vpop.f32.mrb[0].mxu0
        %v510 = vpop.f32.mrb[0].mxu0
        %511 = vdwg.mxu0
        %v512 = vld [vmem:[#allocation8] sm:$0x7]
        %v514 = vrot.slane %v506, 5
        %vm516 = vcmask 1042432
        %v517 = vsel %vm516, %v512, %v514
        %v518 = vld [vmem:[%s3] sm:$0x1]
        %v519 = vld [vmem:[%s2] sm:$0x1]
        %v520 = vlaneseq
        %v521 = vshrl.u32 %v520, 7
        %v522 = vsub.s32 0, %v521
        %v523 = vrot.slane %v519, %v522
        %v524 = vmul.f32 %v517, %v523
        %v526 = vlaneseq
        %v527 = vshrl.u32 %v526, 7
        %v528 = vsub.s32 0, %v527
        %v529 = vrot.slane %v518, %v528
        %v531 = vadd.f32 %v529, %v524
        %v532 = vld [vmem:[%s2 + $0x1] sm:$0x1]
        %v533 = vlaneseq
        %v534 = vshrl.u32 %v533, 7
        %v535 = vsub.s32 0, %v534
        %v536 = vrot.slane %v532, %v535
        %v537 = vmul.f32 %v517, %v536
        %v538 = vmul.f32 %v514, %v536
        %vm541 = vcmask 1046528
        %v542 = vrot.slane %v537, 1
        %v543 = vrot.slane %v538, 1
        %v544 = vsel %vm541, %v542, %v543
        %v546 = vadd.f32 %v531, %v544
        %v547 = vld [vmem:[%s2 + $0x2] sm:$0x1]
        %v548 = vlaneseq
        %v549 = vshrl.u32 %v548, 7
        %v550 = vsub.s32 0, %v549
        %v551 = vrot.slane %v547, %v550
        %v552 = vmul.f32 %v517, %v551
        %v553 = vmul.f32 %v514, %v551
        %vm556 = vcmask 1045504
        %v557 = vrot.slane %v552, 2
        %v558 = vrot.slane %v553, 2
        %v559 = vsel %vm556, %v557, %v558
        %v561 = vadd.f32 %v546, %v559
        %v562 = vld [vmem:[%s2 + $0x3] sm:$0x1]
        %v563 = vlaneseq
        %v564 = vshrl.u32 %v563, 7
        %v565 = vsub.s32 0, %v564
        %v566 = vrot.slane %v562, %v565
        %v567 = vmul.f32 %v517, %v566
        %v568 = vmul.f32 %v514, %v566
        %vm571 = vcmask 1044480
        %v572 = vrot.slane %v567, 3
        %v573 = vrot.slane %v568, 3
        %v574 = vsel %vm571, %v572, %v573
        %v576 = vadd.f32 %v561, %v574
        %577 = vst [vmem:[#allocation8] sm:$0x7] %v514
        %v578 = vsub.f32 0.0, %v576
        %v579 = vmul.f32 %v578, 1.442695
        %v580 = vpow.pop %v579
        %v581 = vadd.f32 %v580, 1.0
        %v582 = vrcp.pop %v581
        %v583 = vmul.f32 1.0, %v582
        %v584 = vmul.f32 %v576, %v583
        %v585 = vpack.c.bf16 %v584, %v584
        %v586 = vld [vmem:[%s4] sm:$0xf]
        %v587 = vld [vmem:[%s4 + $0x4] sm:$0xf]
        %v588 = vld [vmem:[%s4 + $0x8] sm:$0xf]
        %v589 = vld [vmem:[%s4 + $0xc] sm:$0xf]
        %v590 = vld [vmem:[%s4 + $0x10] sm:$0xf]
        %v591 = vld [vmem:[%s4 + $0x14] sm:$0xf]
        %v592 = vld [vmem:[%s4 + $0x18] sm:$0xf]
        %v593 = vld [vmem:[%s4 + $0x1c] sm:$0xf]
        %v594 = vld [vmem:[%s4 + $0x20] sm:$0xf]
        %v595 = vld [vmem:[%s4 + $0x24] sm:$0xf]
        %v596 = vld [vmem:[%s4 + $0x28] sm:$0xf]
        %v597 = vld [vmem:[%s4 + $0x2c] sm:$0xf]
        %v598 = vld [vmem:[%s4 + $0x30] sm:$0xf]
        %v599 = vld [vmem:[%s4 + $0x34] sm:$0xf]
        %v600 = vld [vmem:[%s4 + $0x38] sm:$0xf]
        %v601 = vld [vmem:[%s4 + $0x3c] sm:$0xf]
        %v618 = vunpack.c.l.b16 %v586
        %v619 = vunpack.c.l.b16 %v587
        %v620 = vunpack.c.l.b16 %v588
        %v621 = vunpack.c.l.b16 %v589
        %v622 = vunpack.c.l.b16 %v590
        %v623 = vunpack.c.l.b16 %v591
        %v624 = vunpack.c.l.b16 %v592
        %v625 = vunpack.c.l.b16 %v593
        %v626 = vunpack.c.l.b16 %v594
        %v627 = vunpack.c.l.b16 %v595
        %v628 = vunpack.c.l.b16 %v596
        %v629 = vunpack.c.l.b16 %v597
        %v630 = vunpack.c.l.b16 %v598
        %v631 = vunpack.c.l.b16 %v599
        %v632 = vunpack.c.l.b16 %v600
        %v633 = vunpack.c.l.b16 %v601
        %v634 = vpack.c.b16 %v619, %v618
        %v635 = vpack.c.b16 %v621, %v620
        %v636 = vpack.c.b16 %v623, %v622
        %v637 = vpack.c.b16 %v625, %v624
        %v638 = vpack.c.b16 %v627, %v626
        %v639 = vpack.c.b16 %v629, %v628
        %v640 = vpack.c.b16 %v631, %v630
        %v641 = vpack.c.b16 %v633, %v632
        %650 = vmatprep.subr.bf16.mxu0 0
        %651 = vmatpush1.bf16.msra.mxu0 %v634
        %652 = vmatprep.subr.bf16.mxu0 0
        %653 = vmatpush1.bf16.msra.mxu0 %v635
        %654 = vmatprep.subr.bf16.mxu0 0
        %655 = vmatpush1.bf16.msra.mxu0 %v636
        %656 = vmatprep.subr.bf16.mxu0 0
        %657 = vmatpush1.bf16.msra.mxu0 %v637
        %658 = vmatprep.subr.bf16.mxu0 0
        %659 = vmatpush1.bf16.msra.mxu0 %v638
        %660 = vmatprep.subr.bf16.mxu0 0
        %661 = vmatpush1.bf16.msra.mxu0 %v639
        %662 = vmatprep.subr.bf16.mxu0 0
        %663 = vmatpush1.bf16.msra.mxu0 %v640
        %664 = vmatprep.subr.bf16.mxu0 0
        %665 = vmatpush1.bf16.msra.mxu0 %v641
        %666 = vmatprep.subr.bf16.mxu0 0
        %667 = vmatpush1.bf16.msra.mxu0 0
        %668 = vmatprep.subr.bf16.mxu0 0
        %669 = vmatpush1.bf16.msra.mxu0 0
        %670 = vmatprep.subr.bf16.mxu0 0
        %671 = vmatpush1.bf16.msra.mxu0 0
        %672 = vmatprep.subr.bf16.mxu0 0
        %673 = vmatpush1.bf16.msra.mxu0 0
        %674 = vmatprep.subr.bf16.mxu0 0
        %675 = vmatpush1.bf16.msra.mxu0 0
        %676 = vmatprep.subr.bf16.mxu0 0
        %677 = vmatpush1.bf16.msra.mxu0 0
        %678 = vmatprep.subr.bf16.mxu0 0
        %679 = vmatpush1.bf16.msra.mxu0 0
        %680 = vmatprep.subr.bf16.mxu0 0
        %681 = vmatpush1.bf16.msra.mxu0 0
        %682 = vmatprep.mubr.bf16.mxu0 0
        %683 = vmatmul.mubr.bf16.gmra.mrb[0].mxu0 %v585
        %v684 = vpop.f32.mrb[0].mxu0
        %v685 = vadd.f32 0.0, %v684
        %v686 = vpop.f32.mrb[0].mxu0
        %v687 = vpop.f32.mrb[0].mxu0
        %v688 = vpop.f32.mrb[0].mxu0
        %689 = vdwg.mxu0
        %vm690 = vcmask 130048
        %691 = vst.msk [vmem:[#allocation4] sm:$0xff] %vm690, %v685
        %693 = vrot.lane.b32.xlu0 %v685, 112
        %v694 = vpop.permute.xlu0 %693
        %696 = vst.msk [vmem:[#allocation5] sm:$0xff] %vm690, %v694
        %v697 = vld [vmem:[%s5] sm:$0xff]
        %v698 = vld [vmem:[%s5 + $0x8] sm:$0xff]
        %v699 = vld [vmem:[%s5 + $0x10] sm:$0xff]
        %v700 = vld [vmem:[%s5 + $0x18] sm:$0xff]
        %v701 = vld [vmem:[%s5 + $0x20] sm:$0xff]
        %v702 = vld [vmem:[%s5 + $0x28] sm:$0xff]
        %v703 = vld [vmem:[%s5 + $0x30] sm:$0xff]
        %v704 = vld [vmem:[%s5 + $0x38] sm:$0xff]
        %v705 = vld [vmem:[%s5 + $0x40] sm:$0xff]
        %v706 = vld [vmem:[%s5 + $0x48] sm:$0xff]
        %v707 = vld [vmem:[%s5 + $0x50] sm:$0xff]
        %v708 = vld [vmem:[%s5 + $0x58] sm:$0xff]
        %v709 = vld [vmem:[%s5 + $0x60] sm:$0xff]
        %v710 = vld [vmem:[%s5 + $0x68] sm:$0xff]
        %v711 = vld [vmem:[%s5 + $0x70] sm:$0xff]
        %v712 = vld [vmem:[%s5 + $0x78] sm:$0xff]
        %713 = vmatprep.subr.mxu0 0.0
        %714 = vmatpush1.msra.mxu0 %v697
        %715 = vmatprep.subr.mxu0 0.0
        %716 = vmatpush1.msra.mxu0 %v698
        %717 = vmatprep.subr.mxu0 0.0
        %718 = vmatpush1.msra.mxu0 %v699
        %719 = vmatprep.subr.mxu0 0.0
        %720 = vmatpush1.msra.mxu0 %v700
        %721 = vmatprep.subr.mxu0 0.0
        %722 = vmatpush1.msra.mxu0 %v701
        %723 = vmatprep.subr.mxu0 0.0
        %724 = vmatpush1.msra.mxu0 %v702
        %725 = vmatprep.subr.mxu0 0.0
        %726 = vmatpush1.msra.mxu0 %v703
        %727 = vmatprep.subr.mxu0 0.0
        %728 = vmatpush1.msra.mxu0 %v704
        %729 = vmatprep.subr.mxu0 0.0
        %730 = vmatpush1.msra.mxu0 %v705
        %731 = vmatprep.subr.mxu0 0.0
        %732 = vmatpush1.msra.mxu0 %v706
        %733 = vmatprep.subr.mxu0 0.0
        %734 = vmatpush1.msra.mxu0 %v707
        %735 = vmatprep.subr.mxu0 0.0
        %736 = vmatpush1.msra.mxu0 %v708
        %737 = vmatprep.subr.mxu0 0.0
        %738 = vmatpush1.msra.mxu0 %v709
        %739 = vmatprep.subr.mxu0 0.0
        %740 = vmatpush1.msra.mxu0 %v710
        %741 = vmatprep.subr.mxu0 0.0
        %742 = vmatpush1.msra.mxu0 %v711
        %743 = vmatprep.subr.mxu0 0.0
        %744 = vmatpush1.msra.mxu0 %v712
        %745 = vmatprep.subr.mxu0 0.0
        %746 = vmatpush1.msra.mxu0 0.0
        %747 = vmatprep.subr.mxu0 0.0
        %748 = vmatpush1.msra.mxu0 0.0
        %749 = vmatprep.subr.mxu0 0.0
        %750 = vmatpush1.msra.mxu0 0.0
        %751 = vmatprep.subr.mxu0 0.0
        %752 = vmatpush1.msra.mxu0 0.0
        %753 = vmatprep.subr.mxu0 0.0
        %754 = vmatpush1.msra.mxu0 0.0
        %755 = vmatprep.subr.mxu0 0.0
        %756 = vmatpush1.msra.mxu0 0.0
        %757 = vmatprep.subr.mxu0 0.0
        %758 = vmatpush1.msra.mxu0 0.0
        %759 = vmatprep.subr.mxu0 0.0
        %760 = vmatpush1.msra.mxu0 0.0
        %761 = vmatprep.subr.mxu0 0.0
        %762 = vmatpush1.msra.mxu0 0.0
        %763 = vmatprep.subr.mxu0 0.0
        %764 = vmatpush1.msra.mxu0 0.0
        %765 = vmatprep.subr.mxu0 0.0
        %766 = vmatpush1.msra.mxu0 0.0
        %767 = vmatprep.subr.mxu0 0.0
        %768 = vmatpush1.msra.mxu0 0.0
        %769 = vmatprep.subr.mxu0 0.0
        %770 = vmatpush1.msra.mxu0 0.0
        %771 = vmatprep.subr.mxu0 0.0
        %772 = vmatpush1.msra.mxu0 0.0
        %773 = vmatprep.subr.mxu0 0.0
        %774 = vmatpush1.msra.mxu0 0.0
        %775 = vmatprep.subr.mxu0 0.0
        %776 = vmatpush1.msra.mxu0 0.0
        %777 = vmatprep.mubr.f32.mxu0 0.0
        %778 = vmatmul.mubr.f32.gmra.mrb[0].mxu0 %v584
        %v779 = vpop.f32.mrb[0].mxu0
        %v780 = vadd.f32 0.0, %v779
        %v781 = vpop.f32.mrb[0].mxu0
        %782 = vdwg.mxu0
        %v783 = vld [vmem:[%s6] sm:$0xf]
        %v784 = vld [vmem:[%s7] sm:$0x1]
        %v786 = vlaneseq
        %v787 = vshrl.u32 %v786, 7
        %v788 = vsub.s32 0, %v787
        %v789 = vrot.slane %v784, %v788
        %vm791 = vcmask 31744
        %v793 = vsel %vm791, %v780, 0
        %vm795 = vcmask 1043456
        %v797 = vsel %vm795, %v783, 0
        %799 = vmatprep.subr.mxu0 0.0
        %800 = vmatpush1.msra.mxu0 %v797
        %801 = vmatprep.subr.mxu0 0.0
        %802 = vmatpush1.msra.mxu0 0.0
        %803 = vmatprep.subr.mxu0 0.0
        %804 = vmatpush1.msra.mxu0 0.0
        %805 = vmatprep.subr.mxu0 0.0
        %806 = vmatpush1.msra.mxu0 0.0
        %807 = vmatprep.subr.mxu0 0.0
        %808 = vmatpush1.msra.mxu0 0.0
        %809 = vmatprep.subr.mxu0 0.0
        %810 = vmatpush1.msra.mxu0 0.0
        %811 = vmatprep.subr.mxu0 0.0
        %812 = vmatpush1.msra.mxu0 0.0
        %813 = vmatprep.subr.mxu0 0.0
        %814 = vmatpush1.msra.mxu0 0.0
        %815 = vmatprep.subr.mxu0 0.0
        %816 = vmatpush1.msra.mxu0 0.0
        %817 = vmatprep.subr.mxu0 0.0
        %818 = vmatpush1.msra.mxu0 0.0
        %819 = vmatprep.subr.mxu0 0.0
        %820 = vmatpush1.msra.mxu0 0.0
        %821 = vmatprep.subr.mxu0 0.0
        %822 = vmatpush1.msra.mxu0 0.0
        %823 = vmatprep.subr.mxu0 0.0
        %824 = vmatpush1.msra.mxu0 0.0
        %825 = vmatprep.subr.mxu0 0.0
        %826 = vmatpush1.msra.mxu0 0.0
        %827 = vmatprep.subr.mxu0 0.0
        %828 = vmatpush1.msra.mxu0 0.0
        %829 = vmatprep.subr.mxu0 0.0
        %830 = vmatpush1.msra.mxu0 0.0
        %831 = vmatprep.subr.mxu0 0.0
        %832 = vmatpush1.msra.mxu0 0.0
        %833 = vmatprep.subr.mxu0 0.0
        %834 = vmatpush1.msra.mxu0 0.0
        %835 = vmatprep.subr.mxu0 0.0
        %836 = vmatpush1.msra.mxu0 0.0
        %837 = vmatprep.subr.mxu0 0.0
        %838 = vmatpush1.msra.mxu0 0.0
        %839 = vmatprep.subr.mxu0 0.0
        %840 = vmatpush1.msra.mxu0 0.0
        %841 = vmatprep.subr.mxu0 0.0
        %842 = vmatpush1.msra.mxu0 0.0
        %843 = vmatprep.subr.mxu0 0.0
        %844 = vmatpush1.msra.mxu0 0.0
        %845 = vmatprep.subr.mxu0 0.0
        %846 = vmatpush1.msra.mxu0 0.0
        %847 = vmatprep.subr.mxu0 0.0
        %848 = vmatpush1.msra.mxu0 0.0
        %849 = vmatprep.subr.mxu0 0.0
        %850 = vmatpush1.msra.mxu0 0.0
        %851 = vmatprep.subr.mxu0 0.0
        %852 = vmatpush1.msra.mxu0 0.0
        %853 = vmatprep.subr.mxu0 0.0
        %854 = vmatpush1.msra.mxu0 0.0
        %855 = vmatprep.subr.mxu0 0.0
        %856 = vmatpush1.msra.mxu0 0.0
        %857 = vmatprep.subr.mxu0 0.0
        %858 = vmatpush1.msra.mxu0 0.0
        %859 = vmatprep.subr.mxu0 0.0
        %860 = vmatpush1.msra.mxu0 0.0
        %861 = vmatprep.subr.mxu0 0.0
        %862 = vmatpush1.msra.mxu0 0.0
        %863 = vmatprep.mubr.f32.mxu0 0.0
        %864 = vmatmul.mubr.f32.gmra.mrb[0].mxu0 %v793
        %v865 = vpop.f32.mrb[0].mxu0
        %v866 = vadd.f32 %v789, %v865
        %v867 = vpop.f32.mrb[0].mxu0
        %868 = vdwg.mxu0
        %vm869 = vcmp.gt.f32.partialorder %v866, 20.0
        %v870 = vmin.f32 %v866, 20.0
        %v871 = vmul.f32 %v870, 1.442695
        %v872 = vpow.pop %v871
        %v873 = vadd.f32 %v872, 1.0
        %v874 = vlog2.pop %v873
        %v875 = vmul.f32 %v874, 0.6931472
        %v876 = vsel %vm869, %v866, %v875
        %877 = vst [vmem:[#allocation2] sm:$0xff] %v876
        %v878 = vmul.f32 %v876, %v584
        %879 = vst [vmem:[#allocation3] sm:$0xff] %v878
        %v880 = vld [vmem:[%s8] sm:$0xff]
        %v881 = vld [vmem:[%s8 + $0x8] sm:$0xff]
        %v882 = vld [vmem:[#allocation2] sm:$0xff]
        %v883 = vld [vmem:[#allocation3] sm:$0xff]
        %v884 = vld [vmem:[#allocation4] sm:$0xff]
        %v885 = vld [vmem:[#allocation5] sm:$0xff]
        %v886 = vlaneseq
        %v887 = vshrl.u32 %v886, 7
        %v888 = vsub.s32 0, %v887
        %v889 = vrot.slane %v884, %v888
        %891 = vbcast.lane.b32.xlu0 %v889, 256
        %v892 = vpop.permute.xlu0 %891
        %s894 = sor.u32 256, 8
        %895 = vbcast.lane.b32.xlu0 %v889, %s894
        %v896 = vpop.permute.xlu0 %895
        %v897 = vlaneseq
        %v898 = vshrl.u32 %v897, 7
        %v899 = vsub.s32 1, %v898
        %v900 = vrot.slane %v884, %v899
        %902 = vbcast.lane.b32.xlu0 %v900, 256
        %v903 = vpop.permute.xlu0 %902
        %s905 = sor.u32 256, 8
        %906 = vbcast.lane.b32.xlu0 %v900, %s905
        %v907 = vpop.permute.xlu0 %906
        %v908 = vlaneseq
        %v909 = vshrl.u32 %v908, 7
        %v910 = vsub.s32 2, %v909
        %v911 = vrot.slane %v884, %v910
        %913 = vbcast.lane.b32.xlu0 %v911, 256
        %v914 = vpop.permute.xlu0 %913
        %s916 = sor.u32 256, 8
        %917 = vbcast.lane.b32.xlu0 %v911, %s916
        %v918 = vpop.permute.xlu0 %917
        %v919 = vlaneseq
        %v920 = vshrl.u32 %v919, 7
        %v921 = vsub.s32 3, %v920
        %v922 = vrot.slane %v884, %v921
        %924 = vbcast.lane.b32.xlu0 %v922, 256
        %v925 = vpop.permute.xlu0 %924
        %s927 = sor.u32 256, 8
        %928 = vbcast.lane.b32.xlu0 %v922, %s927
        %v929 = vpop.permute.xlu0 %928
        %v930 = vlaneseq
        %v931 = vshrl.u32 %v930, 7
        %v932 = vsub.s32 4, %v931
        %v933 = vrot.slane %v884, %v932
        %935 = vbcast.lane.b32.xlu0 %v933, 256
        %v936 = vpop.permute.xlu0 %935
        %s938 = sor.u32 256, 8
        %939 = vbcast.lane.b32.xlu0 %v933, %s938
        %v940 = vpop.permute.xlu0 %939
        %v941 = vlaneseq
        %v942 = vshrl.u32 %v941, 7
        %v943 = vsub.s32 5, %v942
        %v944 = vrot.slane %v884, %v943
        %946 = vbcast.lane.b32.xlu0 %v944, 256
        %v947 = vpop.permute.xlu0 %946
        %s949 = sor.u32 256, 8
        %950 = vbcast.lane.b32.xlu0 %v944, %s949
        %v951 = vpop.permute.xlu0 %950
        %v952 = vlaneseq
        %v953 = vshrl.u32 %v952, 7
        %v954 = vsub.s32 6, %v953
        %v955 = vrot.slane %v884, %v954
        %957 = vbcast.lane.b32.xlu0 %v955, 256
        %v958 = vpop.permute.xlu0 %957
        %s960 = sor.u32 256, 8
        %961 = vbcast.lane.b32.xlu0 %v955, %s960
        %v962 = vpop.permute.xlu0 %961
        %v963 = vlaneseq
        %v964 = vshrl.u32 %v963, 7
        %v965 = vsub.s32 7, %v964
        %v966 = vrot.slane %v884, %v965
        %968 = vbcast.lane.b32.xlu0 %v966, 256
        %v969 = vpop.permute.xlu0 %968
        %s971 = sor.u32 256, 8
        %972 = vbcast.lane.b32.xlu0 %v966, %s971
        %v973 = vpop.permute.xlu0 %972
        %v974 = vlaneseq
        %v975 = vshrl.u32 %v974, 7
        %v976 = vsub.s32 0, %v975
        %v977 = vrot.slane %v885, %v976
        %979 = vbcast.lane.b32.xlu0 %v977, 256
        %v980 = vpop.permute.xlu0 %979
        %s982 = sor.u32 256, 8
        %983 = vbcast.lane.b32.xlu0 %v977, %s982
        %v984 = vpop.permute.xlu0 %983
        %v985 = vlaneseq
        %v986 = vshrl.u32 %v985, 7
        %v987 = vsub.s32 1, %v986
        %v988 = vrot.slane %v885, %v987
        %990 = vbcast.lane.b32.xlu0 %v988, 256
        %v991 = vpop.permute.xlu0 %990
        %s993 = sor.u32 256, 8
        %994 = vbcast.lane.b32.xlu0 %v988, %s993
        %v995 = vpop.permute.xlu0 %994
        %v996 = vlaneseq
        %v997 = vshrl.u32 %v996, 7
        %v998 = vsub.s32 2, %v997
        %v999 = vrot.slane %v885, %v998
        %1001 = vbcast.lane.b32.xlu0 %v999, 256
        %v1002 = vpop.permute.xlu0 %1001
        %s1004 = sor.u32 256, 8
        %1005 = vbcast.lane.b32.xlu0 %v999, %s1004
        %v1006 = vpop.permute.xlu0 %1005
        %v1007 = vlaneseq
        %v1008 = vshrl.u32 %v1007, 7
        %v1009 = vsub.s32 3, %v1008
        %v1010 = vrot.slane %v885, %v1009
        %1012 = vbcast.lane.b32.xlu0 %v1010, 256
        %v1013 = vpop.permute.xlu0 %1012
        %s1015 = sor.u32 256, 8
        %1016 = vbcast.lane.b32.xlu0 %v1010, %s1015
        %v1017 = vpop.permute.xlu0 %1016
        %v1018 = vlaneseq
        %v1019 = vshrl.u32 %v1018, 7
        %v1020 = vsub.s32 4, %v1019
        %v1021 = vrot.slane %v885, %v1020
        %1023 = vbcast.lane.b32.xlu0 %v1021, 256
        %v1024 = vpop.permute.xlu0 %1023
        %s1026 = sor.u32 256, 8
        %1027 = vbcast.lane.b32.xlu0 %v1021, %s1026
        %v1028 = vpop.permute.xlu0 %1027
        %v1029 = vlaneseq
        %v1030 = vshrl.u32 %v1029, 7
        %v1031 = vsub.s32 5, %v1030
        %v1032 = vrot.slane %v885, %v1031
        %1034 = vbcast.lane.b32.xlu0 %v1032, 256
        %v1035 = vpop.permute.xlu0 %1034
        %s1037 = sor.u32 256, 8
        %1038 = vbcast.lane.b32.xlu0 %v1032, %s1037
        %v1039 = vpop.permute.xlu0 %1038
        %v1040 = vlaneseq
        %v1041 = vshrl.u32 %v1040, 7
        %v1042 = vsub.s32 6, %v1041
        %v1043 = vrot.slane %v885, %v1042
        %1045 = vbcast.lane.b32.xlu0 %v1043, 256
        %v1046 = vpop.permute.xlu0 %1045
        %s1048 = sor.u32 256, 8
        %1049 = vbcast.lane.b32.xlu0 %v1043, %s1048
        %v1050 = vpop.permute.xlu0 %1049
        %v1051 = vlaneseq
        %v1052 = vshrl.u32 %v1051, 7
        %v1053 = vsub.s32 7, %v1052
        %v1054 = vrot.slane %v885, %v1053
        %1056 = vbcast.lane.b32.xlu0 %v1054, 256
        %v1057 = vpop.permute.xlu0 %1056
        %s1059 = sor.u32 256, 8
        %1060 = vbcast.lane.b32.xlu0 %v1054, %s1059
        %v1061 = vpop.permute.xlu0 %1060
        %v1062 = vld [vmem:[#allocation7] sm:$0xff]
        %v1063 = vld [vmem:[#allocation7 + $0x8] sm:$0xff]
        %v1064 = vlaneseq
        %v1065 = vshrl.u32 %v1064, 7
        %v1066 = vsub.s32 0, %v1065
        %v1067 = vrot.slane %v882, %v1066
        %v1068 = vmul.f32 %v1067, %v880
        %v1069 = vmul.f32 %v1067, %v881
        %v1070 = vmul.f32 %v1068, 1.442695
        %v1071 = vpow.pop %v1070
        %v1072 = vmul.f32 %v1069, 1.442695
        %v1073 = vpow.pop %v1072
        %v1074 = vlaneseq
        %v1075 = vshrl.u32 %v1074, 7
        %v1076 = vsub.s32 0, %v1075
        %v1077 = vrot.slane %v883, %v1076
        %v1078 = vmul.f32 %v892, %v1077
        %v1079 = vmul.f32 %v896, %v1077
        %v1080 = vmul.f32 %v1062, %v1071
        %v1081 = vmul.f32 %v1063, %v1073
        %v1082 = vadd.f32 %v1080, %v1078
        %v1083 = vadd.f32 %v1081, %v1079
        %v1084 = vmul.f32 %v1082, %v980
        %v1085 = vmul.f32 %v1083, %v984
        %v1086 = vadd.f32 %v1084, %v1085
        %v1087 = vrot.slane %v1086, 4
        %v1088 = vadd.f32 %v1086, %v1087
        %v1089 = vrot.slane %v1088, 2
        %v1090 = vadd.f32 %v1088, %v1089
        %v1091 = vrot.slane %v1090, 1
        %v1092 = vadd.f32 %v1090, %v1091
        %v1093 = vlaneseq
        %v1094 = vshrl.u32 %v1093, 7
        %v1095 = vsub.s32 1, %v1094
        %v1096 = vrot.slane %v882, %v1095
        %v1097 = vmul.f32 %v1096, %v880
        %v1098 = vmul.f32 %v1096, %v881
        %v1099 = vmul.f32 %v1097, 1.442695
        %v1100 = vpow.pop %v1099
        %v1101 = vmul.f32 %v1098, 1.442695
        %v1102 = vpow.pop %v1101
        %v1103 = vlaneseq
        %v1104 = vshrl.u32 %v1103, 7
        %v1105 = vsub.s32 1, %v1104
        %v1106 = vrot.slane %v883, %v1105
        %v1107 = vmul.f32 %v903, %v1106
        %v1108 = vmul.f32 %v907, %v1106
        %v1109 = vmul.f32 %v1082, %v1100
        %v1110 = vmul.f32 %v1083, %v1102
        %v1111 = vadd.f32 %v1109, %v1107
        %v1112 = vadd.f32 %v1110, %v1108
        %v1113 = vmul.f32 %v1111, %v991
        %v1114 = vmul.f32 %v1112, %v995
        %v1115 = vadd.f32 %v1113, %v1114
        %v1116 = vrot.slane %v1115, 4
        %v1117 = vadd.f32 %v1115, %v1116
        %v1118 = vrot.slane %v1117, 2
        %v1119 = vadd.f32 %v1117, %v1118
        %v1120 = vrot.slane %v1119, 1
        %v1121 = vadd.f32 %v1119, %v1120
        %v1122 = vlaneseq
        %v1123 = vshrl.u32 %v1122, 7
        %v1124 = vsub.s32 2, %v1123
        %v1125 = vrot.slane %v882, %v1124
        %v1126 = vmul.f32 %v1125, %v880
        %v1127 = vmul.f32 %v1125, %v881
        %v1128 = vmul.f32 %v1126, 1.442695
        %v1129 = vpow.pop %v1128
        %v1130 = vmul.f32 %v1127, 1.442695
        %v1131 = vpow.pop %v1130
        %v1132 = vlaneseq
        %v1133 = vshrl.u32 %v1132, 7
        %v1134 = vsub.s32 2, %v1133
        %v1135 = vrot.slane %v883, %v1134
        %v1136 = vmul.f32 %v914, %v1135
        %v1137 = vmul.f32 %v918, %v1135
        %v1138 = vmul.f32 %v1111, %v1129
        %v1139 = vmul.f32 %v1112, %v1131
        %v1140 = vadd.f32 %v1138, %v1136
        %v1141 = vadd.f32 %v1139, %v1137
        %v1142 = vmul.f32 %v1140, %v1002
        %v1143 = vmul.f32 %v1141, %v1006
        %v1144 = vadd.f32 %v1142, %v1143
        %v1145 = vrot.slane %v1144, 4
        %v1146 = vadd.f32 %v1144, %v1145
        %v1147 = vrot.slane %v1146, 2
        %v1148 = vadd.f32 %v1146, %v1147
        %v1149 = vrot.slane %v1148, 1
        %v1150 = vadd.f32 %v1148, %v1149
        %v1151 = vlaneseq
        %v1152 = vshrl.u32 %v1151, 7
        %v1153 = vsub.s32 3, %v1152
        %v1154 = vrot.slane %v882, %v1153
        %v1155 = vmul.f32 %v1154, %v880
        %v1156 = vmul.f32 %v1154, %v881
        %v1157 = vmul.f32 %v1155, 1.442695
        %v1158 = vpow.pop %v1157
        %v1159 = vmul.f32 %v1156, 1.442695
        %v1160 = vpow.pop %v1159
        %v1161 = vlaneseq
        %v1162 = vshrl.u32 %v1161, 7
        %v1163 = vsub.s32 3, %v1162
        %v1164 = vrot.slane %v883, %v1163
        %v1165 = vmul.f32 %v925, %v1164
        %v1166 = vmul.f32 %v929, %v1164
        %v1167 = vmul.f32 %v1140, %v1158
        %v1168 = vmul.f32 %v1141, %v1160
        %v1169 = vadd.f32 %v1167, %v1165
        %v1170 = vadd.f32 %v1168, %v1166
        %v1171 = vmul.f32 %v1169, %v1013
        %v1172 = vmul.f32 %v1170, %v1017
        %v1173 = vadd.f32 %v1171, %v1172
        %v1174 = vrot.slane %v1173, 4
        %v1175 = vadd.f32 %v1173, %v1174
        %v1176 = vrot.slane %v1175, 2
        %v1177 = vadd.f32 %v1175, %v1176
        %v1178 = vrot.slane %v1177, 1
        %v1179 = vadd.f32 %v1177, %v1178
        %v1180 = vlaneseq
        %v1181 = vshrl.u32 %v1180, 7
        %v1182 = vsub.s32 4, %v1181
        %v1183 = vrot.slane %v882, %v1182
        %v1184 = vmul.f32 %v1183, %v880
        %v1185 = vmul.f32 %v1183, %v881
        %v1186 = vmul.f32 %v1184, 1.442695
        %v1187 = vpow.pop %v1186
        %v1188 = vmul.f32 %v1185, 1.442695
        %v1189 = vpow.pop %v1188
        %v1190 = vlaneseq
        %v1191 = vshrl.u32 %v1190, 7
        %v1192 = vsub.s32 4, %v1191
        %v1193 = vrot.slane %v883, %v1192
        %v1194 = vmul.f32 %v936, %v1193
        %v1195 = vmul.f32 %v940, %v1193
        %v1196 = vmul.f32 %v1169, %v1187
        %v1197 = vmul.f32 %v1170, %v1189
        %v1198 = vadd.f32 %v1196, %v1194
        %v1199 = vadd.f32 %v1197, %v1195
        %v1200 = vmul.f32 %v1198, %v1024
        %v1201 = vmul.f32 %v1199, %v1028
        %v1202 = vadd.f32 %v1200, %v1201
        %v1203 = vrot.slane %v1202, 4
        %v1204 = vadd.f32 %v1202, %v1203
        %v1205 = vrot.slane %v1204, 2
        %v1206 = vadd.f32 %v1204, %v1205
        %v1207 = vrot.slane %v1206, 1
        %v1208 = vadd.f32 %v1206, %v1207
        %v1209 = vlaneseq
        %v1210 = vshrl.u32 %v1209, 7
        %v1211 = vsub.s32 5, %v1210
        %v1212 = vrot.slane %v882, %v1211
        %v1213 = vmul.f32 %v1212, %v880
        %v1214 = vmul.f32 %v1212, %v881
        %v1215 = vmul.f32 %v1213, 1.442695
        %v1216 = vpow.pop %v1215
        %v1217 = vmul.f32 %v1214, 1.442695
        %v1218 = vpow.pop %v1217
        %v1219 = vlaneseq
        %v1220 = vshrl.u32 %v1219, 7
        %v1221 = vsub.s32 5, %v1220
        %v1222 = vrot.slane %v883, %v1221
        %v1223 = vmul.f32 %v947, %v1222
        %v1224 = vmul.f32 %v951, %v1222
        %v1225 = vmul.f32 %v1198, %v1216
        %v1226 = vmul.f32 %v1199, %v1218
        %v1227 = vadd.f32 %v1225, %v1223
        %v1228 = vadd.f32 %v1226, %v1224
        %v1229 = vmul.f32 %v1227, %v1035
        %v1230 = vmul.f32 %v1228, %v1039
        %v1231 = vadd.f32 %v1229, %v1230
        %v1232 = vrot.slane %v1231, 4
        %v1233 = vadd.f32 %v1231, %v1232
        %v1234 = vrot.slane %v1233, 2
        %v1235 = vadd.f32 %v1233, %v1234
        %v1236 = vrot.slane %v1235, 1
        %v1237 = vadd.f32 %v1235, %v1236
        %v1238 = vlaneseq
        %v1239 = vshrl.u32 %v1238, 7
        %v1240 = vsub.s32 6, %v1239
        %v1241 = vrot.slane %v882, %v1240
        %v1242 = vmul.f32 %v1241, %v880
        %v1243 = vmul.f32 %v1241, %v881
        %v1244 = vmul.f32 %v1242, 1.442695
        %v1245 = vpow.pop %v1244
        %v1246 = vmul.f32 %v1243, 1.442695
        %v1247 = vpow.pop %v1246
        %v1248 = vlaneseq
        %v1249 = vshrl.u32 %v1248, 7
        %v1250 = vsub.s32 6, %v1249
        %v1251 = vrot.slane %v883, %v1250
        %v1252 = vmul.f32 %v958, %v1251
        %v1253 = vmul.f32 %v962, %v1251
        %v1254 = vmul.f32 %v1227, %v1245
        %v1255 = vmul.f32 %v1228, %v1247
        %v1256 = vadd.f32 %v1254, %v1252
        %v1257 = vadd.f32 %v1255, %v1253
        %v1258 = vmul.f32 %v1256, %v1046
        %v1259 = vmul.f32 %v1257, %v1050
        %v1260 = vadd.f32 %v1258, %v1259
        %v1261 = vrot.slane %v1260, 4
        %v1262 = vadd.f32 %v1260, %v1261
        %v1263 = vrot.slane %v1262, 2
        %v1264 = vadd.f32 %v1262, %v1263
        %v1265 = vrot.slane %v1264, 1
        %v1266 = vadd.f32 %v1264, %v1265
        %v1267 = vlaneseq
        %v1268 = vshrl.u32 %v1267, 7
        %v1269 = vsub.s32 7, %v1268
        %v1270 = vrot.slane %v882, %v1269
        %v1271 = vmul.f32 %v1270, %v880
        %v1272 = vmul.f32 %v1270, %v881
        %v1273 = vmul.f32 %v1271, 1.442695
        %v1274 = vpow.pop %v1273
        %v1275 = vmul.f32 %v1272, 1.442695
        %v1276 = vpow.pop %v1275
        %v1277 = vlaneseq
        %v1278 = vshrl.u32 %v1277, 7
        %v1279 = vsub.s32 7, %v1278
        %v1280 = vrot.slane %v883, %v1279
        %v1281 = vmul.f32 %v969, %v1280
        %v1282 = vmul.f32 %v973, %v1280
        %v1283 = vmul.f32 %v1256, %v1274
        %v1284 = vmul.f32 %v1257, %v1276
        %v1285 = vadd.f32 %v1283, %v1281
        %v1286 = vadd.f32 %v1284, %v1282
        %v1287 = vmul.f32 %v1285, %v1057
        %v1288 = vmul.f32 %v1286, %v1061
        %v1289 = vadd.f32 %v1287, %v1288
        %v1290 = vrot.slane %v1289, 4
        %v1291 = vadd.f32 %v1289, %v1290
        %v1292 = vrot.slane %v1291, 2
        %v1293 = vadd.f32 %v1291, %v1292
        %v1294 = vrot.slane %v1293, 1
        %v1295 = vadd.f32 %v1293, %v1294
        %1296 = vst [vmem:[#allocation7] sm:$0xff] %v1285
        %1297 = vst [vmem:[#allocation7 + $0x8] sm:$0xff] %v1286
        %vm1298 = vcmask 1040384
        %v1299 = vsel %vm1298, %v1092, %v1121
        %vm1300 = vcmask 1041408
        %v1301 = vsel %vm1300, %v1299, %v1150
        %v1302 = vsel %vm516, %v1301, %v1179
        %v1303 = vsel %vm795, %v1302, %v1208
        %v1304 = vsel %vm571, %v1303, %v1237
        %v1305 = vsel %vm556, %v1304, %v1266
        %v1306 = vsel %vm541, %v1305, %v1295
        %1307 = vst [vmem:[#allocation6] sm:$0xff] %v1306
        %v1308 = vld [vmem:[#allocation6] sm:$0xff]
        %v1309 = vld [vmem:[%s9] sm:$0x1]
        %v1311 = vlaneseq
        %v1312 = vshrl.u32 %v1311, 7
        %v1313 = vsub.s32 0, %v1312
        %v1314 = vrot.slane %v1309, %v1313
        %v1316 = vmul.f32 %v584, %v1314
        %v1317 = vadd.f32 %v1308, %v1316
        %v1318 = vsub.f32 0.0, %v508
        %v1319 = vmul.f32 %v1318, 1.442695
        %v1320 = vpow.pop %v1319
        %v1321 = vadd.f32 %v1320, 1.0
        %v1322 = vrcp.pop %v1321
        %v1323 = vmul.f32 1.0, %v1322
        %v1324 = vmul.f32 %v508, %v1323
        %v1325 = vmul.f32 %v1317, %v1324
        %v1326 = vpack.c.bf16 %v1325, %v1325
        %v1327 = vld [vmem:[%s10] sm:$0xf]
        %v1328 = vld [vmem:[%s10 + $0x4] sm:$0xf]
        %v1329 = vld [vmem:[%s10 + $0x8] sm:$0xf]
        %v1330 = vld [vmem:[%s10 + $0xc] sm:$0xf]
        %v1331 = vld [vmem:[%s10 + $0x10] sm:$0xf]
        %v1332 = vld [vmem:[%s10 + $0x14] sm:$0xf]
        %v1333 = vld [vmem:[%s10 + $0x18] sm:$0xf]
        %v1334 = vld [vmem:[%s10 + $0x1c] sm:$0xf]
        %v1335 = vld [vmem:[%s10 + $0x20] sm:$0xf]
        %v1336 = vld [vmem:[%s10 + $0x24] sm:$0xf]
        %v1337 = vld [vmem:[%s10 + $0x28] sm:$0xf]
        %v1338 = vld [vmem:[%s10 + $0x2c] sm:$0xf]
        %v1339 = vld [vmem:[%s10 + $0x30] sm:$0xf]
        %v1340 = vld [vmem:[%s10 + $0x34] sm:$0xf]
        %v1341 = vld [vmem:[%s10 + $0x38] sm:$0xf]
        %v1342 = vld [vmem:[%s10 + $0x3c] sm:$0xf]
        %v1359 = vunpack.c.l.b16 %v1327
        %v1360 = vunpack.c.l.b16 %v1328
        %v1361 = vunpack.c.l.b16 %v1329
        %v1362 = vunpack.c.l.b16 %v1330
        %v1363 = vunpack.c.l.b16 %v1331
        %v1364 = vunpack.c.l.b16 %v1332
        %v1365 = vunpack.c.l.b16 %v1333
        %v1366 = vunpack.c.l.b16 %v1334
        %v1367 = vunpack.c.l.b16 %v1335
        %v1368 = vunpack.c.l.b16 %v1336
        %v1369 = vunpack.c.l.b16 %v1337
        %v1370 = vunpack.c.l.b16 %v1338
        %v1371 = vunpack.c.l.b16 %v1339
        %v1372 = vunpack.c.l.b16 %v1340
        %v1373 = vunpack.c.l.b16 %v1341
        %v1374 = vunpack.c.l.b16 %v1342
        %v1375 = vpack.c.b16 %v1360, %v1359
        %v1376 = vpack.c.b16 %v1362, %v1361
        %v1377 = vpack.c.b16 %v1364, %v1363
        %v1378 = vpack.c.b16 %v1366, %v1365
        %v1379 = vpack.c.b16 %v1368, %v1367
        %v1380 = vpack.c.b16 %v1370, %v1369
        %v1381 = vpack.c.b16 %v1372, %v1371
        %v1382 = vpack.c.b16 %v1374, %v1373
        %1391 = vmatprep.subr.bf16.mxu0 0
        %1392 = vmatpush1.bf16.msra.mxu0 %v1375
        %1393 = vmatprep.subr.bf16.mxu0 0
        %1394 = vmatpush1.bf16.msra.mxu0 %v1376
        %1395 = vmatprep.subr.bf16.mxu0 0
        %1396 = vmatpush1.bf16.msra.mxu0 %v1377
        %1397 = vmatprep.subr.bf16.mxu0 0
        %1398 = vmatpush1.bf16.msra.mxu0 %v1378
        %1399 = vmatprep.subr.bf16.mxu0 0
        %1400 = vmatpush1.bf16.msra.mxu0 %v1379
        %1401 = vmatprep.subr.bf16.mxu0 0
        %1402 = vmatpush1.bf16.msra.mxu0 %v1380
        %1403 = vmatprep.subr.bf16.mxu0 0
        %1404 = vmatpush1.bf16.msra.mxu0 %v1381
        %1405 = vmatprep.subr.bf16.mxu0 0
        %1406 = vmatpush1.bf16.msra.mxu0 %v1382
        %1407 = vmatprep.subr.bf16.mxu0 0
        %1408 = vmatpush1.bf16.msra.mxu0 0
        %1409 = vmatprep.subr.bf16.mxu0 0
        %1410 = vmatpush1.bf16.msra.mxu0 0
        %1411 = vmatprep.subr.bf16.mxu0 0
        %1412 = vmatpush1.bf16.msra.mxu0 0
        %1413 = vmatprep.subr.bf16.mxu0 0
        %1414 = vmatpush1.bf16.msra.mxu0 0
        %1415 = vmatprep.subr.bf16.mxu0 0
        %1416 = vmatpush1.bf16.msra.mxu0 0
        %1417 = vmatprep.subr.bf16.mxu0 0
        %1418 = vmatpush1.bf16.msra.mxu0 0
        %1419 = vmatprep.subr.bf16.mxu0 0
        %1420 = vmatpush1.bf16.msra.mxu0 0
        %1421 = vmatprep.subr.bf16.mxu0 0
        %1422 = vmatpush1.bf16.msra.mxu0 0
        %1423 = vmatprep.mubr.bf16.mxu0 0
        %1424 = vmatmul.mubr.bf16.gmra.mrb[0].mxu0 %v1326
        %v1425 = vpop.f32.mrb[0].mxu0
        %v1426 = vadd.f32 0.0, %v1425
        %v1427 = vpop.f32.mrb[0].mxu0
        %v1428 = vpop.f32.mrb[0].mxu0
        %v1429 = vpop.f32.mrb[0].mxu0
        %1430 = vdwg.mxu0
        %1431 = vst.msk [vmem:[%s401] sm:$0xff] %vm467, %v1426
        %s1432 = sand.u32 %s285, 1
        %s1433 = scalar_lea.sflag [#allocation10], %s1432
        %s1434 = sand.u32 %s285, 1
        %s1435 = smul.addr %s1434, 8
        %s1436 = scalar_lea.vmem [#allocation9], %s1435
        // Predicated region
        $region69: #{tpu_custom_call.1} parent=63 // pred_check
          %p1437 = pneg %p295
        $region70: #{tpu_custom_call.1} parent=63 // pred_check_branch
          %1439 = sbr.rel (%p1437) target = $region72
        $region71: #{tpu_custom_call.1} parent=63 // pred_region
          %s1441 = ssub.s32 128, 128
          %1442 = vsyncadd %s1433, %s1441
          %s1443 = smul.addr %s29, 2
          %s1444 = sadd.s32 %s30, %s1443
          %s1445 = smul.addr %s1444, 128
          %s1446 = scalar_lea.hbm %s11, %s1445
          %s1448 = sshll.u32 %s1436, 4
          %s1449 = int_to_ptr.vmem [resolvable:$true] %s1448
          %1451 = dma.vmem_to_hbm [thread:$0]  %s1449, 128, %s1446, %s1433
        $region72: #{tpu_custom_call.1} parent=63 // pred_fallthru
          _
      $region64: #{tpu_custom_call.1} parent=5 // pred_fallthru
        _
      %p1452 = scmp.le.s32.totalorder 2, %s20
      // Predicated region
      $region73: #{tpu_custom_call.1} parent=5 // pred_check
        %p1453 = pneg %p1452
      $region74: #{tpu_custom_call.1} parent=5 // pred_check_branch
        %1455 = sbr.rel (%p1453) target = $region76
      $region75: #{tpu_custom_call.1} parent=5 // pred_region
        %s1456 = ssub.s32 %s20, 2
        // Predicated region
        $region77: #{tpu_custom_call.1} parent=75 // pred_check
          %p1457 = pneg %p301
        $region78: #{tpu_custom_call.1} parent=75 // pred_check_branch
          %1459 = sbr.rel (%p1457) target = $region80
        $region79: #{tpu_custom_call.1} parent=75 // pred_region
          %s1460 = sand.u32 %s286, 1
          %s1461 = scalar_lea.sflag [#allocation10], %s1460
          %s1462 = sand.u32 %s286, 1
          %s1463 = smul.addr %s1462, 8
          %s1464 = scalar_lea.vmem [#allocation9], %s1463
          %1465 = dma.done %s1461, 128
        $region80: #{tpu_custom_call.1} parent=75 // pred_fallthru
          _
      $region76: #{tpu_custom_call.1} parent=5 // pred_fallthru
        _
    $region6: #{tpu_custom_call.1} parent=1 // loop_footer
      %s24 = sadd.s32 1, %s20
    $region7: #{tpu_custom_call.1} parent=1 // loop_footer_branch
      %19 = sbr.rel target = $region3
    $region8: #{tpu_custom_call.1} parent=1 // loop_exit
      _
    %1466 = vsyncpa [#allocation10], 1
    %s1467 = scalar_lea.sflag [#allocation10], 1
    %1468 = vsyncpa %s1467, 1

// kernel: tpu_custom_call.1
$region0: #{tpu_custom_call.1}
  #allocation0 [shape = 'u32[]', space=smem, size = 0x4, offset = 0x4, fixed_abs, tag = 'smem constant byte address 0x4 - core index']
  #allocation1 [shape = 'u32[144,128]{1,0:T(1,128)}', space=vmem, size = 0x12000, scoped, tag = 'internal scratch']
  #allocation2 [shape = 'f32[8,128]{1,0:T(8,128)}', space=vmem, size = 0x1000, scoped, tag = 'scratch operand']
  #allocation3 [shape = 'f32[8,128]{1,0:T(8,128)}', space=vmem, size = 0x1000, scoped, tag = 'scratch operand']
  #allocation4 [shape = 'f32[8,16]{1,0:T(8,128)}', space=vmem, size = 0x1000, scoped, tag = 'scratch operand']
  #allocation5 [shape = 'f32[8,16]{1,0:T(8,128)}', space=vmem, size = 0x1000, scoped, tag = 'scratch operand']
  #allocation6 [shape = 'f32[8,128]{1,0:T(8,128)}', space=vmem, size = 0x1000, scoped, tag = 'scratch operand']
  #allocation7 [shape = 'f32[16,128]{1,0:T(8,128)}', space=vmem, size = 0x2000, scoped, tag = 'scratch operand']
  #allocation8 [shape = 'f32[3,128]{1,0:T(4,128)}', space=vmem, size = 0x800, scoped, tag = 'scratch operand']
  %s0 = inlined_call_operand.vmem [shape: bf16[2,16,64], index: 0, kind: input, shape index: {}]
  %s1 = inlined_call_operand.vmem [shape: bf16[64,256], index: 1, kind: input, shape index: {}]
  %s2 = inlined_call_operand.vmem [shape: f32[4,128], index: 2, kind: input, shape index: {}]
  %s3 = inlined_call_operand.vmem [shape: f32[1,128], index: 3, kind: input, shape index: {}]
  %s4 = inlined_call_operand.vmem [shape: bf16[128,32], index: 4, kind: input, shape index: {}]
  %s5 = inlined_call_operand.vmem [shape: f32[128,4], index: 5, kind: input, shape index: {}]
  %s6 = inlined_call_operand.vmem [shape: f32[4,128], index: 6, kind: input, shape index: {}]
  %s7 = inlined_call_operand.vmem [shape: f32[1,128], index: 7, kind: input, shape index: {}]
  %s8 = inlined_call_operand.vmem [shape: f32[16,128], index: 8, kind: input, shape index: {}]
  %s9 = inlined_call_operand.vmem [shape: f32[1,128], index: 9, kind: input, shape index: {}]
  %s10 = inlined_call_operand.vmem [shape: bf16[128,64], index: 10, kind: input, shape index: {}]
  %s11 = inlined_call_operand.hbm [shape: f32[2,16,64], index: 11, kind: output, shape index: {}]
  %s12 = sld [smem:[#allocation0]]
  $region81: #{tpu_custom_call.1} parent=0
    _
  %s14 = ssub.s32 1, %s12
  %s15 = scalar_select 0, %s14, %s12
  $region1: #{tpu_custom_call.1} parent=0
    #allocation9 [shape = 'u8[8192]{0}', space=vmem, size = 0x2000, scoped, tag = 'output window, operand 0']
    #allocation10 [shape = 's32[2]{0}', space=sflag, size = 0x8, scoped, tag = 'scoped memory for tpu_custom_call.1']
    %16 = vsyncpa [#allocation10], 0
    %s17 = scalar_lea.sflag [#allocation10], 1
    %18 = vsyncpa %s17, 0
    loop: start=0, step=1, limit=6
    $region2: #{tpu_custom_call.1} parent=1 // loop_pre_header
      _
    $region3: #{tpu_custom_call.1} parent=1 // loop_header
      %s20 = sphi 0, %s24
      %p21 = scmp.ge.s32.totalorder %s20, 6
      %s27 = sphi 0, %s39
      %s28 = sphi 0, %s35
      %s29 = sphi 0, %s27
      %s30 = sphi 0, %s28
      %s31 = sphi 0, %s29
      %s32 = sphi 0, %s30
      %s44 = sphi 0, %s46
      %s47 = sphi 0, %s44
      %s48 = sphi 0, %s47
      %s64 = sphi 0, %s48
      %s68 = sphi 0, %s68
      %s70 = sphi 0, %s68
      %s71 = sphi 0, %s70
      %s85 = sphi 0, %s71
      %s89 = sphi 0, %s89
      %s91 = sphi 0, %s89
      %s92 = sphi 0, %s91
      %s106 = sphi 0, %s92
      %s110 = sphi 0, %s110
      %s112 = sphi 0, %s110
      %s113 = sphi 0, %s112
      %s127 = sphi 0, %s113
      %s131 = sphi 0, %s131
      %s133 = sphi 0, %s131
      %s134 = sphi 0, %s133
      %s148 = sphi 0, %s134
      %s152 = sphi 0, %s152
      %s154 = sphi 0, %s152
      %s155 = sphi 0, %s154
      %s169 = sphi 0, %s155
      %s173 = sphi 0, %s173
      %s175 = sphi 0, %s173
      %s176 = sphi 0, %s175
      %s190 = sphi 0, %s176
      %s194 = sphi 0, %s194
      %s196 = sphi 0, %s194
      %s197 = sphi 0, %s196
      %s211 = sphi 0, %s197
      %s215 = sphi 0, %s215
      %s217 = sphi 0, %s215
      %s218 = sphi 0, %s217
      %s232 = sphi 0, %s218
      %s236 = sphi 0, %s236
      %s238 = sphi 0, %s236
      %s239 = sphi 0, %s238
      %s253 = sphi 0, %s239
      %s257 = sphi 0, %s257
      %s259 = sphi 0, %s257
      %s260 = sphi 0, %s259
      %s274 = sphi 0, %s260
      %s282 = sphi 0, %s284
      %s285 = sphi 0, %s282
      %s286 = sphi 0, %s285
      %s302 = sphi 0, %s286
    $region4: #{tpu_custom_call.1} parent=1 // loop_header_branch
      %23 = sbr.rel (%p21) target = $region8
    $region5: #{tpu_custom_call.1} parent=1 // loop_body
      %s25 = ssub.s32 %s20, 1
      %s26 = ssub.s32 %s20, 2
      %s33 = sadd.s32 1, %s28
      %p34 = scmp.ge.s32.totalorder %s33, 2
      %s35 = scalar_select %p34, 0, %s33
      %s36 = sadd.s32 1, %s27
      %s37 = scalar_select %p34, %s36, %s27
      %p38 = scmp.ge.s32.totalorder %s37, 2
      %s39 = scalar_select %p38, 0, %s37
      %s40 = ssub.s32 %s27, %s39
      %s41 = ssub.s32 %s28, %s35
      %s42 = sor.u32 %s40, %s41
      %p43 = scmp.eq.s32.totalorder %s42, 0
      %s45 = sadd.s32 %s44, 1
      %s46 = scalar_select %p43, %s44, %s45
      %p49 = pneg %p43
      %p50 = scmp.eq.s32.totalorder %s20, 3
      %p51 = por %p49, %p50
      %p52 = scmp.ne.s32.totalorder %s44, %s47
      %p53 = scmp.eq.s32.totalorder %s20, 0
      %p54 = por %p52, %p53
      %p55 = scmp.ne.s32.totalorder %s44, %s47
      %p56 = scmp.eq.s32.totalorder %s25, 3
      %p57 = por %p55, %p56
      %p58 = scmp.ne.s32.totalorder %s47, %s48
      %p59 = scmp.eq.s32.totalorder %s25, 0
      %p60 = por %p58, %p59
      %p61 = scmp.ne.s32.totalorder %s47, %s48
      %p62 = scmp.eq.s32.totalorder %s26, 3
      %p63 = por %p61, %p62
      %p65 = scmp.ne.s32.totalorder %s48, %s64
      %p66 = scmp.eq.s32.totalorder %s26, 0
      %p67 = por %p65, %p66
      %s69 = sadd.s32 %s68, 1
      %p72 = scmp.eq.s32.totalorder %s20, 3
      %p73 = scmp.ne.s32.totalorder %s68, %s70
      %p74 = scmp.eq.s32.totalorder %s20, 0
      %p75 = por %p73, %p74
      %p76 = scmp.ne.s32.totalorder %s68, %s70
      %p77 = scmp.eq.s32.totalorder %s25, 3
      %p78 = por %p76, %p77
      %p79 = scmp.ne.s32.totalorder %s70, %s71
      %p80 = scmp.eq.s32.totalorder %s25, 0
      %p81 = por %p79, %p80
      %p82 = scmp.ne.s32.totalorder %s70, %s71
      %p83 = scmp.eq.s32.totalorder %s26, 3
      %p84 = por %p82, %p83
      %p86 = scmp.ne.s32.totalorder %s71, %s85
      %p87 = scmp.eq.s32.totalorder %s26, 0
      %p88 = por %p86, %p87
      %s90 = sadd.s32 %s89, 1
      %p93 = scmp.eq.s32.totalorder %s20, 3
      %p94 = scmp.ne.s32.totalorder %s89, %s91
      %p95 = scmp.eq.s32.totalorder %s20, 0
      %p96 = por %p94, %p95
      %p97 = scmp.ne.s32.totalorder %s89, %s91
      %p98 = scmp.eq.s32.totalorder %s25, 3
      %p99 = por %p97, %p98
      %p100 = scmp.ne.s32.totalorder %s91, %s92
      %p101 = scmp.eq.s32.totalorder %s25, 0
      %p102 = por %p100, %p101
      %p103 = scmp.ne.s32.totalorder %s91, %s92
      %p104 = scmp.eq.s32.totalorder %s26, 3
      %p105 = por %p103, %p104
      %p107 = scmp.ne.s32.totalorder %s92, %s106
      %p108 = scmp.eq.s32.totalorder %s26, 0
      %p109 = por %p107, %p108
      %s111 = sadd.s32 %s110, 1
      %p114 = scmp.eq.s32.totalorder %s20, 3
      %p115 = scmp.ne.s32.totalorder %s110, %s112
      %p116 = scmp.eq.s32.totalorder %s20, 0
      %p117 = por %p115, %p116
      %p118 = scmp.ne.s32.totalorder %s110, %s112
      %p119 = scmp.eq.s32.totalorder %s25, 3
      %p120 = por %p118, %p119
      %p121 = scmp.ne.s32.totalorder %s112, %s113
      %p122 = scmp.eq.s32.totalorder %s25, 0
      %p123 = por %p121, %p122
      %p124 = scmp.ne.s32.totalorder %s112, %s113
      %p125 = scmp.eq.s32.totalorder %s26, 3
      %p126 = por %p124, %p125
      %p128 = scmp.ne.s32.totalorder %s113, %s127
      %p129 = scmp.eq.s32.totalorder %s26, 0
      %p130 = por %p128, %p129
      %s132 = sadd.s32 %s131, 1
      %p135 = scmp.eq.s32.totalorder %s20, 3
      %p136 = scmp.ne.s32.totalorder %s131, %s133
      %p137 = scmp.eq.s32.totalorder %s20, 0
      %p138 = por %p136, %p137
      %p139 = scmp.ne.s32.totalorder %s131, %s133
      %p140 = scmp.eq.s32.totalorder %s25, 3
      %p141 = por %p139, %p140
      %p142 = scmp.ne.s32.totalorder %s133, %s134
      %p143 = scmp.eq.s32.totalorder %s25, 0
      %p144 = por %p142, %p143
      %p145 = scmp.ne.s32.totalorder %s133, %s134
      %p146 = scmp.eq.s32.totalorder %s26, 3
      %p147 = por %p145, %p146
      %p149 = scmp.ne.s32.totalorder %s134, %s148
      %p150 = scmp.eq.s32.totalorder %s26, 0
      %p151 = por %p149, %p150
      %s153 = sadd.s32 %s152, 1
      %p156 = scmp.eq.s32.totalorder %s20, 3
      %p157 = scmp.ne.s32.totalorder %s152, %s154
      %p158 = scmp.eq.s32.totalorder %s20, 0
      %p159 = por %p157, %p158
      %p160 = scmp.ne.s32.totalorder %s152, %s154
      %p161 = scmp.eq.s32.totalorder %s25, 3
      %p162 = por %p160, %p161
      %p163 = scmp.ne.s32.totalorder %s154, %s155
      %p164 = scmp.eq.s32.totalorder %s25, 0
      %p165 = por %p163, %p164
      %p166 = scmp.ne.s32.totalorder %s154, %s155
      %p167 = scmp.eq.s32.totalorder %s26, 3
      %p168 = por %p166, %p167
      %p170 = scmp.ne.s32.totalorder %s155, %s169
      %p171 = scmp.eq.s32.totalorder %s26, 0
      %p172 = por %p170, %p171
      %s174 = sadd.s32 %s173, 1
      %p177 = scmp.eq.s32.totalorder %s20, 3
      %p178 = scmp.ne.s32.totalorder %s173, %s175
      %p179 = scmp.eq.s32.totalorder %s20, 0
      %p180 = por %p178, %p179
      %p181 = scmp.ne.s32.totalorder %s173, %s175
      %p182 = scmp.eq.s32.totalorder %s25, 3
      %p183 = por %p181, %p182
      %p184 = scmp.ne.s32.totalorder %s175, %s176
      %p185 = scmp.eq.s32.totalorder %s25, 0
      %p186 = por %p184, %p185
      %p187 = scmp.ne.s32.totalorder %s175, %s176
      %p188 = scmp.eq.s32.totalorder %s26, 3
      %p189 = por %p187, %p188
      %p191 = scmp.ne.s32.totalorder %s176, %s190
      %p192 = scmp.eq.s32.totalorder %s26, 0
      %p193 = por %p191, %p192
      %s195 = sadd.s32 %s194, 1
      %p198 = scmp.eq.s32.totalorder %s20, 3
      %p199 = scmp.ne.s32.totalorder %s194, %s196
      %p200 = scmp.eq.s32.totalorder %s20, 0
      %p201 = por %p199, %p200
      %p202 = scmp.ne.s32.totalorder %s194, %s196
      %p203 = scmp.eq.s32.totalorder %s25, 3
      %p204 = por %p202, %p203
      %p205 = scmp.ne.s32.totalorder %s196, %s197
      %p206 = scmp.eq.s32.totalorder %s25, 0
      %p207 = por %p205, %p206
      %p208 = scmp.ne.s32.totalorder %s196, %s197
      %p209 = scmp.eq.s32.totalorder %s26, 3
      %p210 = por %p208, %p209
      %p212 = scmp.ne.s32.totalorder %s197, %s211
      %p213 = scmp.eq.s32.totalorder %s26, 0
      %p214 = por %p212, %p213
      %s216 = sadd.s32 %s215, 1
      %p219 = scmp.eq.s32.totalorder %s20, 3
      %p220 = scmp.ne.s32.totalorder %s215, %s217
      %p221 = scmp.eq.s32.totalorder %s20, 0
      %p222 = por %p220, %p221
      %p223 = scmp.ne.s32.totalorder %s215, %s217
      %p224 = scmp.eq.s32.totalorder %s25, 3
      %p225 = por %p223, %p224
      %p226 = scmp.ne.s32.totalorder %s217, %s218
      %p227 = scmp.eq.s32.totalorder %s25, 0
      %p228 = por %p226, %p227
      %p229 = scmp.ne.s32.totalorder %s217, %s218
      %p230 = scmp.eq.s32.totalorder %s26, 3
      %p231 = por %p229, %p230
      %p233 = scmp.ne.s32.totalorder %s218, %s232
      %p234 = scmp.eq.s32.totalorder %s26, 0
      %p235 = por %p233, %p234
      %s237 = sadd.s32 %s236, 1
      %p240 = scmp.eq.s32.totalorder %s20, 3
      %p241 = scmp.ne.s32.totalorder %s236, %s238
      %p242 = scmp.eq.s32.totalorder %s20, 0
      %p243 = por %p241, %p242
      %p244 = scmp.ne.s32.totalorder %s236, %s238
      %p245 = scmp.eq.s32.totalorder %s25, 3
      %p246 = por %p244, %p245
      %p247 = scmp.ne.s32.totalorder %s238, %s239
      %p248 = scmp.eq.s32.totalorder %s25, 0
      %p249 = por %p247, %p248
      %p250 = scmp.ne.s32.totalorder %s238, %s239
      %p251 = scmp.eq.s32.totalorder %s26, 3
      %p252 = por %p250, %p251
      %p254 = scmp.ne.s32.totalorder %s239, %s253
      %p255 = scmp.eq.s32.totalorder %s26, 0
      %p256 = por %p254, %p255
      %s258 = sadd.s32 %s257, 1
      %p261 = scmp.eq.s32.totalorder %s20, 3
      %p262 = scmp.ne.s32.totalorder %s257, %s259
      %p263 = scmp.eq.s32.totalorder %s20, 0
      %p264 = por %p262, %p263
      %p265 = scmp.ne.s32.totalorder %s257, %s259
      %p266 = scmp.eq.s32.totalorder %s25, 3
      %p267 = por %p265, %p266
      %p268 = scmp.ne.s32.totalorder %s259, %s260
      %p269 = scmp.eq.s32.totalorder %s25, 0
      %p270 = por %p268, %p269
      %p271 = scmp.ne.s32.totalorder %s259, %s260
      %p272 = scmp.eq.s32.totalorder %s26, 3
      %p273 = por %p271, %p272
      %p275 = scmp.ne.s32.totalorder %s260, %s274
      %p276 = scmp.eq.s32.totalorder %s26, 0
      %p277 = por %p275, %p276
      %s278 = ssub.s32 %s27, %s39
      %s279 = ssub.s32 %s28, %s35
      %s280 = sor.u32 %s278, %s279
      %p281 = scmp.eq.s32.totalorder %s280, 0
      %s283 = sadd.s32 %s282, 1
      %s284 = scalar_select %p281, %s282, %s283
      %p287 = pneg %p281
      %p288 = scmp.eq.s32.totalorder %s20, 3
      %p289 = por %p287, %p288
      %p290 = scmp.ne.s32.totalorder %s282, %s285
      %p291 = scmp.eq.s32.totalorder %s20, 0
      %p292 = por %p290, %p291
      %p293 = scmp.ne.s32.totalorder %s282, %s285
      %p294 = scmp.eq.s32.totalorder %s25, 3
      %p295 = por %p293, %p294
      %p296 = scmp.ne.s32.totalorder %s285, %s286
      %p297 = scmp.eq.s32.totalorder %s25, 0
      %p298 = por %p296, %p297
      %p299 = scmp.ne.s32.totalorder %s285, %s286
      %p300 = scmp.eq.s32.totalorder %s26, 3
      %p301 = por %p299, %p300
      %p303 = scmp.ne.s32.totalorder %s286, %s302
      %p304 = scmp.eq.s32.totalorder %s26, 0
      %p305 = por %p303, %p304
      %p306 = scmp.le.s32.totalorder 1, %s20
      %p307 = scmp.lt.s32.totalorder %s20, 5
      %p308 = pnand %p306, %p307
      %p309 = pneg %p308
      // Predicated region
      $region9: #{tpu_custom_call.1} parent=5 // pred_check
        _
      $region10: #{tpu_custom_call.1} parent=5 // pred_check_branch
        %311 = sbr.rel (%p308) target = $region12
      $region11: #{tpu_custom_call.1} parent=5 // pred_region
        %s312 = ssub.s32 %s20, 1
        // Predicated region
        $region13: #{tpu_custom_call.1} parent=11 // pred_check
          %p313 = pneg %p81
        $region14: #{tpu_custom_call.1} parent=11 // pred_check_branch
          %315 = sbr.rel (%p313) target = $region16
        $region15: #{tpu_custom_call.1} parent=11 // pred_region
          _
        $region16: #{tpu_custom_call.1} parent=11 // pred_fallthru
          _
        // Predicated region
        $region17: #{tpu_custom_call.1} parent=11 // pred_check
          %p316 = pneg %p102
        $region18: #{tpu_custom_call.1} parent=11 // pred_check_branch
          %318 = sbr.rel (%p316) target = $region20
        $region19: #{tpu_custom_call.1} parent=11 // pred_region
          _
        $region20: #{tpu_custom_call.1} parent=11 // pred_fallthru
          _
        // Predicated region
        $region21: #{tpu_custom_call.1} parent=11 // pred_check
          %p319 = pneg %p123
        $region22: #{tpu_custom_call.1} parent=11 // pred_check_branch
          %321 = sbr.rel (%p319) target = $region24
        $region23: #{tpu_custom_call.1} parent=11 // pred_region
          _
        $region24: #{tpu_custom_call.1} parent=11 // pred_fallthru
          _
        // Predicated region
        $region25: #{tpu_custom_call.1} parent=11 // pred_check
          %p322 = pneg %p144
        $region26: #{tpu_custom_call.1} parent=11 // pred_check_branch
          %324 = sbr.rel (%p322) target = $region28
        $region27: #{tpu_custom_call.1} parent=11 // pred_region
          _
        $region28: #{tpu_custom_call.1} parent=11 // pred_fallthru
          _
        // Predicated region
        $region29: #{tpu_custom_call.1} parent=11 // pred_check
          %p325 = pneg %p165
        $region30: #{tpu_custom_call.1} parent=11 // pred_check_branch
          %327 = sbr.rel (%p325) target = $region32
        $region31: #{tpu_custom_call.1} parent=11 // pred_region
          _
        $region32: #{tpu_custom_call.1} parent=11 // pred_fallthru
          _
        // Predicated region
        $region33: #{tpu_custom_call.1} parent=11 // pred_check
          %p328 = pneg %p186
        $region34: #{tpu_custom_call.1} parent=11 // pred_check_branch
          %330 = sbr.rel (%p328) target = $region36
        $region35: #{tpu_custom_call.1} parent=11 // pred_region
          _
        $region36: #{tpu_custom_call.1} parent=11 // pred_fallthru
          _
        // Predicated region
        $region37: #{tpu_custom_call.1} parent=11 // pred_check
          %p331 = pneg %p207
        $region38: #{tpu_custom_call.1} parent=11 // pred_check_branch
          %333 = sbr.rel (%p331) target = $region40
        $region39: #{tpu_custom_call.1} parent=11 // pred_region
          _
        $region40: #{tpu_custom_call.1} parent=11 // pred_fallthru
          _
        // Predicated region
        $region41: #{tpu_custom_call.1} parent=11 // pred_check
          %p334 = pneg %p228
        $region42: #{tpu_custom_call.1} parent=11 // pred_check_branch
          %336 = sbr.rel (%p334) target = $region44
        $region43: #{tpu_custom_call.1} parent=11 // pred_region
          _
        $region44: #{tpu_custom_call.1} parent=11 // pred_fallthru
          _
        // Predicated region
        $region45: #{tpu_custom_call.1} parent=11 // pred_check
          %p337 = pneg %p249
        $region46: #{tpu_custom_call.1} parent=11 // pred_check_branch
          %339 = sbr.rel (%p337) target = $region48
        $region47: #{tpu_custom_call.1} parent=11 // pred_region
          _
        $region48: #{tpu_custom_call.1} parent=11 // pred_fallthru
          _
        // Predicated region
        $region49: #{tpu_custom_call.1} parent=11 // pred_check
          %p340 = pneg %p270
        $region50: #{tpu_custom_call.1} parent=11 // pred_check_branch
          %342 = sbr.rel (%p340) target = $region52
        $region51: #{tpu_custom_call.1} parent=11 // pred_region
          _
        $region52: #{tpu_custom_call.1} parent=11 // pred_fallthru
          _
      $region12: #{tpu_custom_call.1} parent=5 // pred_fallthru
        _
      %p343 = scmp.lt.s32.totalorder %s20, 4
      // Predicated region
      $region53: #{tpu_custom_call.1} parent=5 // pred_check
        %p344 = pneg %p343
      $region54: #{tpu_custom_call.1} parent=5 // pred_check_branch
        %346 = sbr.rel (%p344) target = $region56
      $region55: #{tpu_custom_call.1} parent=5 // pred_region
        // Predicated region
        $region57: #{tpu_custom_call.1} parent=55 // pred_check
          %p347 = pneg %p54
        $region58: #{tpu_custom_call.1} parent=55 // pred_check_branch
          %349 = sbr.rel (%p347) target = $region60
        $region59: #{tpu_custom_call.1} parent=55 // pred_region
          %p350 = scmp.lt.s32.totalorder %s27, 1
          %s351 = scalar_select %p350, %s27, 1
          %p352 = scmp.lt.s32.totalorder %s28, 1
          %s353 = scalar_select %p352, %s28, 1
          %s354 = smul.addr %s351, 2
          %s355 = sadd.s32 %s353, %s354
          %s356 = smul.addr %s355, 4
          %s357 = scalar_lea.vmem %s0, %s356
        $region60: #{tpu_custom_call.1} parent=55 // pred_fallthru
          _
      $region56: #{tpu_custom_call.1} parent=5 // pred_fallthru
        _
      %p358 = scmp.le.s32.totalorder 1, %s20
      %p359 = scmp.lt.s32.totalorder %s20, 5
      %p360 = pnand %p358, %p359
      %p361 = pneg %p360
      // Predicated region
      $region61: #{tpu_custom_call.1} parent=5 // pred_check
        _
      $region62: #{tpu_custom_call.1} parent=5 // pred_check_branch
        %363 = sbr.rel (%p360) target = $region64
      $region63: #{tpu_custom_call.1} parent=5 // pred_region
        %s364 = ssub.s32 %s20, 1
        %p365 = scmp.lt.s32.totalorder %s29, 1
        %s366 = scalar_select %p365, %s29, 1
        %p367 = scmp.lt.s32.totalorder %s30, 1
        %s368 = scalar_select %p367, %s30, 1
        %s369 = smul.addr %s366, 2
        %s370 = sadd.s32 %s368, %s369
        %s371 = smul.addr %s370, 4
        %s372 = scalar_lea.vmem %s0, %s371
        %p373 = pneg %p60
        %p374 = pneg %p57
        %p375 = pneg %p81
        %p376 = pneg %p78
        %p377 = pneg %p102
        %p378 = pneg %p99
        %p379 = pneg %p123
        %p380 = pneg %p120
        %p381 = pneg %p144
        %p382 = pneg %p141
        %p383 = pneg %p165
        %p384 = pneg %p162
        %p385 = pneg %p186
        %p386 = pneg %p183
        %p387 = pneg %p207
        %p388 = pneg %p204
        %p389 = pneg %p228
        %p390 = pneg %p225
        %p391 = pneg %p249
        %p392 = pneg %p246
        %p393 = pneg %p270
        %p394 = pneg %p267
        %p395 = pneg %p298
        %p396 = pneg %p295
        %s397 = sand.u32 %s285, 1
        %s398 = scalar_lea.sflag [#allocation10], %s397
        %s399 = sand.u32 %s285, 1
        %s400 = smul.addr %s399, 8
        %s401 = scalar_lea.vmem [#allocation9], %s400
        %p402 = scmp.lt.s32.totalorder %s29, 1
        %s403 = scalar_select %p402, %s29, 1
        %p404 = scmp.lt.s32.totalorder %s30, 1
        %s405 = scalar_select %p404, %s30, 1
        %s406 = smul.addr %s403, 2
        %s407 = sadd.s32 %s405, %s406
        %s408 = smul.addr %s407, 4
        %s409 = scalar_lea.vmem %s0, %s408
        %p411 = scmp.eq.s32.totalorder %s30, 0
        // Predicated region
        $region65: #{tpu_custom_call.1} parent=63 // pred_check
          %p412 = pneg %p411
        $region66: #{tpu_custom_call.1} parent=63 // pred_check_branch
          %414 = sbr.rel (%p412) target = $region68
        $region67: #{tpu_custom_call.1} parent=63 // pred_region
          %415 = vst [vmem:[#allocation7] sm:$0xff] 0.0
          %416 = vst [vmem:[#allocation7 + $0x8] sm:$0xff] 0.0
          %417 = vst [vmem:[#allocation8] sm:$0x7] 0.0
        $region68: #{tpu_custom_call.1} parent=63 // pred_fallthru
          _
        %v418 = vld [vmem:[%s409] sm:$0xf]
        %v419 = vld [vmem:[%s1] sm:$0xff]
        %v420 = vld [vmem:[%s1 + $0x8] sm:$0xff]
        %v421 = vld [vmem:[%s1 + $0x10] sm:$0xff]
        %v422 = vld [vmem:[%s1 + $0x18] sm:$0xff]
        %v423 = vld [vmem:[%s1 + $0x20] sm:$0xff]
        %v424 = vld [vmem:[%s1 + $0x28] sm:$0xff]
        %v425 = vld [vmem:[%s1 + $0x30] sm:$0xff]
        %v426 = vld [vmem:[%s1 + $0x38] sm:$0xff]
        %v435 = vunpack.c.l.b16 %v419
        %v436 = vunpack.c.h.b16 %v419
        %v437 = vunpack.c.l.b16 %v420
        %v438 = vunpack.c.h.b16 %v420
        %v439 = vunpack.c.l.b16 %v421
        %v440 = vunpack.c.h.b16 %v421
        %v441 = vunpack.c.l.b16 %v422
        %v442 = vunpack.c.h.b16 %v422
        %v443 = vunpack.c.l.b16 %v423
        %v444 = vunpack.c.h.b16 %v423
        %v445 = vunpack.c.l.b16 %v424
        %v446 = vunpack.c.h.b16 %v424
        %v447 = vunpack.c.l.b16 %v425
        %v448 = vunpack.c.h.b16 %v425
        %v449 = vunpack.c.l.b16 %v426
        %v450 = vunpack.c.h.b16 %v426
        %v451 = vpack.c.b16 %v437, %v435
        %v452 = vpack.c.b16 %v438, %v436
        %v453 = vpack.c.b16 %v441, %v439
        %v454 = vpack.c.b16 %v442, %v440
        %v455 = vpack.c.b16 %v445, %v443
        %v456 = vpack.c.b16 %v446, %v444
        %v457 = vpack.c.b16 %v449, %v447
        %v458 = vpack.c.b16 %v450, %v448
        %vm467 = vcmask 523264
        %v469 = vsel %vm467, %v418, 0
        %471 = vmatprep.subr.bf16.mxu0 %v452
        %472 = vmatpush1.bf16.msra.mxu0 %v451
        %473 = vmatprep.subr.bf16.mxu0 %v454
        %474 = vmatpush1.bf16.msra.mxu0 %v453
        %475 = vmatprep.subr.bf16.mxu0 %v456
        %476 = vmatpush1.bf16.msra.mxu0 %v455
        %477 = vmatprep.subr.bf16.mxu0 %v458
        %478 = vmatpush1.bf16.msra.mxu0 %v457
        %479 = vmatprep.subr.bf16.mxu0 0
        %480 = vmatpush1.bf16.msra.mxu0 0
        %481 = vmatprep.subr.bf16.mxu0 0
        %482 = vmatpush1.bf16.msra.mxu0 0
        %483 = vmatprep.subr.bf16.mxu0 0
        %484 = vmatpush1.bf16.msra.mxu0 0
        %485 = vmatprep.subr.bf16.mxu0 0
        %486 = vmatpush1.bf16.msra.mxu0 0
        %487 = vmatprep.subr.bf16.mxu0 0
        %488 = vmatpush1.bf16.msra.mxu0 0
        %489 = vmatprep.subr.bf16.mxu0 0
        %490 = vmatpush1.bf16.msra.mxu0 0
        %491 = vmatprep.subr.bf16.mxu0 0
        %492 = vmatpush1.bf16.msra.mxu0 0
        %493 = vmatprep.subr.bf16.mxu0 0
        %494 = vmatpush1.bf16.msra.mxu0 0
        %495 = vmatprep.subr.bf16.mxu0 0
        %496 = vmatpush1.bf16.msra.mxu0 0
        %497 = vmatprep.subr.bf16.mxu0 0
        %498 = vmatpush1.bf16.msra.mxu0 0
        %499 = vmatprep.subr.bf16.mxu0 0
        %500 = vmatpush1.bf16.msra.mxu0 0
        %501 = vmatprep.subr.bf16.mxu0 0
        %502 = vmatpush1.bf16.msra.mxu0 0
        %503 = vmatprep.mubr.bf16.mxu0 0
        %504 = vmatmul.mubr.bf16.gmra.mrb[0].mxu0 %v469
        %v505 = vpop.f32.mrb[0].mxu0
        %v506 = vadd.f32 0.0, %v505
        %v507 = vpop.f32.mrb[0].mxu0
        %v508 = vadd.f32 0.0, %v507
        %v509 = vpop.f32.mrb[0].mxu0
        %v510 = vpop.f32.mrb[0].mxu0
        %511 = vdwg.mxu0
        %v512 = vld [vmem:[#allocation8] sm:$0x7]
        %v514 = vrot.slane %v506, 5
        %vm516 = vcmask 1042432
        %v517 = vsel %vm516, %v512, %v514
        %v518 = vld [vmem:[%s3] sm:$0x1]
        %v519 = vld [vmem:[%s2] sm:$0x1]
        %v520 = vlaneseq
        %v521 = vshrl.u32 %v520, 7
        %v522 = vsub.s32 0, %v521
        %v523 = vrot.slane %v519, %v522
        %v524 = vmul.f32 %v517, %v523
        %v526 = vlaneseq
        %v527 = vshrl.u32 %v526, 7
        %v528 = vsub.s32 0, %v527
        %v529 = vrot.slane %v518, %v528
        %v531 = vadd.f32 %v529, %v524
        %v532 = vld [vmem:[%s2 + $0x1] sm:$0x1]
        %v533 = vlaneseq
        %v534 = vshrl.u32 %v533, 7
        %v535 = vsub.s32 0, %v534
        %v536 = vrot.slane %v532, %v535
        %v537 = vmul.f32 %v517, %v536
        %v538 = vmul.f32 %v514, %v536
        %vm541 = vcmask 1046528
        %v542 = vrot.slane %v537, 1
        %v543 = vrot.slane %v538, 1
        %v544 = vsel %vm541, %v542, %v543
        %v546 = vadd.f32 %v531, %v544
        %v547 = vld [vmem:[%s2 + $0x2] sm:$0x1]
        %v548 = vlaneseq
        %v549 = vshrl.u32 %v548, 7
        %v550 = vsub.s32 0, %v549
        %v551 = vrot.slane %v547, %v550
        %v552 = vmul.f32 %v517, %v551
        %v553 = vmul.f32 %v514, %v551
        %vm556 = vcmask 1045504
        %v557 = vrot.slane %v552, 2
        %v558 = vrot.slane %v553, 2
        %v559 = vsel %vm556, %v557, %v558
        %v561 = vadd.f32 %v546, %v559
        %v562 = vld [vmem:[%s2 + $0x3] sm:$0x1]
        %v563 = vlaneseq
        %v564 = vshrl.u32 %v563, 7
        %v565 = vsub.s32 0, %v564
        %v566 = vrot.slane %v562, %v565
        %v567 = vmul.f32 %v517, %v566
        %v568 = vmul.f32 %v514, %v566
        %vm571 = vcmask 1044480
        %v572 = vrot.slane %v567, 3
        %v573 = vrot.slane %v568, 3
        %v574 = vsel %vm571, %v572, %v573
        %v576 = vadd.f32 %v561, %v574
        %577 = vst [vmem:[#allocation8] sm:$0x7] %v514
        %v578 = vsub.f32 0.0, %v576
        %v579 = vmul.f32 %v578, 1.442695
        %v580 = vpow.pop %v579
        %v581 = vadd.f32 %v580, 1.0
        %v582 = vrcp.pop %v581
        %v583 = vmul.f32 1.0, %v582
        %v584 = vmul.f32 %v576, %v583
        %v585 = vpack.c.bf16 %v584, %v584
        %v586 = vld [vmem:[%s4] sm:$0xf]
        %v587 = vld [vmem:[%s4 + $0x4] sm:$0xf]
        %v588 = vld [vmem:[%s4 + $0x8] sm:$0xf]
        %v589 = vld [vmem:[%s4 + $0xc] sm:$0xf]
        %v590 = vld [vmem:[%s4 + $0x10] sm:$0xf]
        %v591 = vld [vmem:[%s4 + $0x14] sm:$0xf]
        %v592 = vld [vmem:[%s4 + $0x18] sm:$0xf]
        %v593 = vld [vmem:[%s4 + $0x1c] sm:$0xf]
        %v594 = vld [vmem:[%s4 + $0x20] sm:$0xf]
        %v595 = vld [vmem:[%s4 + $0x24] sm:$0xf]
        %v596 = vld [vmem:[%s4 + $0x28] sm:$0xf]
        %v597 = vld [vmem:[%s4 + $0x2c] sm:$0xf]
        %v598 = vld [vmem:[%s4 + $0x30] sm:$0xf]
        %v599 = vld [vmem:[%s4 + $0x34] sm:$0xf]
        %v600 = vld [vmem:[%s4 + $0x38] sm:$0xf]
        %v601 = vld [vmem:[%s4 + $0x3c] sm:$0xf]
        %v618 = vunpack.c.l.b16 %v586
        %v619 = vunpack.c.l.b16 %v587
        %v620 = vunpack.c.l.b16 %v588
        %v621 = vunpack.c.l.b16 %v589
        %v622 = vunpack.c.l.b16 %v590
        %v623 = vunpack.c.l.b16 %v591
        %v624 = vunpack.c.l.b16 %v592
        %v625 = vunpack.c.l.b16 %v593
        %v626 = vunpack.c.l.b16 %v594
        %v627 = vunpack.c.l.b16 %v595
        %v628 = vunpack.c.l.b16 %v596
        %v629 = vunpack.c.l.b16 %v597
        %v630 = vunpack.c.l.b16 %v598
        %v631 = vunpack.c.l.b16 %v599
        %v632 = vunpack.c.l.b16 %v600
        %v633 = vunpack.c.l.b16 %v601
        %v634 = vpack.c.b16 %v619, %v618
        %v635 = vpack.c.b16 %v621, %v620
        %v636 = vpack.c.b16 %v623, %v622
        %v637 = vpack.c.b16 %v625, %v624
        %v638 = vpack.c.b16 %v627, %v626
        %v639 = vpack.c.b16 %v629, %v628
        %v640 = vpack.c.b16 %v631, %v630
        %v641 = vpack.c.b16 %v633, %v632
        %650 = vmatprep.subr.bf16.mxu0 0
        %651 = vmatpush1.bf16.msra.mxu0 %v634
        %652 = vmatprep.subr.bf16.mxu0 0
        %653 = vmatpush1.bf16.msra.mxu0 %v635
        %654 = vmatprep.subr.bf16.mxu0 0
        %655 = vmatpush1.bf16.msra.mxu0 %v636
        %656 = vmatprep.subr.bf16.mxu0 0
        %657 = vmatpush1.bf16.msra.mxu0 %v637
        %658 = vmatprep.subr.bf16.mxu0 0
        %659 = vmatpush1.bf16.msra.mxu0 %v638
        %660 = vmatprep.subr.bf16.mxu0 0
        %661 = vmatpush1.bf16.msra.mxu0 %v639
        %662 = vmatprep.subr.bf16.mxu0 0
        %663 = vmatpush1.bf16.msra.mxu0 %v640
        %664 = vmatprep.subr.bf16.mxu0 0
        %665 = vmatpush1.bf16.msra.mxu0 %v641
        %666 = vmatprep.subr.bf16.mxu0 0
        %667 = vmatpush1.bf16.msra.mxu0 0
        %668 = vmatprep.subr.bf16.mxu0 0
        %669 = vmatpush1.bf16.msra.mxu0 0
        %670 = vmatprep.subr.bf16.mxu0 0
        %671 = vmatpush1.bf16.msra.mxu0 0
        %672 = vmatprep.subr.bf16.mxu0 0
        %673 = vmatpush1.bf16.msra.mxu0 0
        %674 = vmatprep.subr.bf16.mxu0 0
        %675 = vmatpush1.bf16.msra.mxu0 0
        %676 = vmatprep.subr.bf16.mxu0 0
        %677 = vmatpush1.bf16.msra.mxu0 0
        %678 = vmatprep.subr.bf16.mxu0 0
        %679 = vmatpush1.bf16.msra.mxu0 0
        %680 = vmatprep.subr.bf16.mxu0 0
        %681 = vmatpush1.bf16.msra.mxu0 0
        %682 = vmatprep.mubr.bf16.mxu0 0
        %683 = vmatmul.mubr.bf16.gmra.mrb[0].mxu0 %v585
        %v684 = vpop.f32.mrb[0].mxu0
        %v685 = vadd.f32 0.0, %v684
        %v686 = vpop.f32.mrb[0].mxu0
        %v687 = vpop.f32.mrb[0].mxu0
        %v688 = vpop.f32.mrb[0].mxu0
        %689 = vdwg.mxu0
        %vm690 = vcmask 130048
        %691 = vst.msk [vmem:[#allocation4] sm:$0xff] %vm690, %v685
        %693 = vrot.lane.b32.xlu0 %v685, 112
        %v694 = vpop.permute.xlu0 %693
        %696 = vst.msk [vmem:[#allocation5] sm:$0xff] %vm690, %v694
        %v697 = vld [vmem:[%s5] sm:$0xff]
        %v698 = vld [vmem:[%s5 + $0x8] sm:$0xff]
        %v699 = vld [vmem:[%s5 + $0x10] sm:$0xff]
        %v700 = vld [vmem:[%s5 + $0x18] sm:$0xff]
        %v701 = vld [vmem:[%s5 + $0x20] sm:$0xff]
        %v702 = vld [vmem:[%s5 + $0x28] sm:$0xff]
        %v703 = vld [vmem:[%s5 + $0x30] sm:$0xff]
        %v704 = vld [vmem:[%s5 + $0x38] sm:$0xff]
        %v705 = vld [vmem:[%s5 + $0x40] sm:$0xff]
        %v706 = vld [vmem:[%s5 + $0x48] sm:$0xff]
        %v707 = vld [vmem:[%s5 + $0x50] sm:$0xff]
        %v708 = vld [vmem:[%s5 + $0x58] sm:$0xff]
        %v709 = vld [vmem:[%s5 + $0x60] sm:$0xff]
        %v710 = vld [vmem:[%s5 + $0x68] sm:$0xff]
        %v711 = vld [vmem:[%s5 + $0x70] sm:$0xff]
        %v712 = vld [vmem:[%s5 + $0x78] sm:$0xff]
        %713 = vmatprep.subr.mxu0 0.0
        %714 = vmatpush1.msra.mxu0 %v697
        %715 = vmatprep.subr.mxu0 0.0
        %716 = vmatpush1.msra.mxu0 %v698
        %717 = vmatprep.subr.mxu0 0.0
        %718 = vmatpush1.msra.mxu0 %v699
        %719 = vmatprep.subr.mxu0 0.0
        %720 = vmatpush1.msra.mxu0 %v700
        %721 = vmatprep.subr.mxu0 0.0
        %722 = vmatpush1.msra.mxu0 %v701
        %723 = vmatprep.subr.mxu0 0.0
        %724 = vmatpush1.msra.mxu0 %v702
        %725 = vmatprep.subr.mxu0 0.0
        %726 = vmatpush1.msra.mxu0 %v703
        %727 = vmatprep.subr.mxu0 0.0
        %728 = vmatpush1.msra.mxu0 %v704
        %729 = vmatprep.subr.mxu0 0.0
        %730 = vmatpush1.msra.mxu0 %v705
        %731 = vmatprep.subr.mxu0 0.0
        %732 = vmatpush1.msra.mxu0 %v706
        %733 = vmatprep.subr.mxu0 0.0
        %734 = vmatpush1.msra.mxu0 %v707
        %735 = vmatprep.subr.mxu0 0.0
        %736 = vmatpush1.msra.mxu0 %v708
        %737 = vmatprep.subr.mxu0 0.0
        %738 = vmatpush1.msra.mxu0 %v709
        %739 = vmatprep.subr.mxu0 0.0
        %740 = vmatpush1.msra.mxu0 %v710
        %741 = vmatprep.subr.mxu0 0.0
        %742 = vmatpush1.msra.mxu0 %v711
        %743 = vmatprep.subr.mxu0 0.0
        %744 = vmatpush1.msra.mxu0 %v712
        %745 = vmatprep.subr.mxu0 0.0
        %746 = vmatpush1.msra.mxu0 0.0
        %747 = vmatprep.subr.mxu0 0.0
        %748 = vmatpush1.msra.mxu0 0.0
        %749 = vmatprep.subr.mxu0 0.0
        %750 = vmatpush1.msra.mxu0 0.0
        %751 = vmatprep.subr.mxu0 0.0
        %752 = vmatpush1.msra.mxu0 0.0
        %753 = vmatprep.subr.mxu0 0.0
        %754 = vmatpush1.msra.mxu0 0.0
        %755 = vmatprep.subr.mxu0 0.0
        %756 = vmatpush1.msra.mxu0 0.0
        %757 = vmatprep.subr.mxu0 0.0
        %758 = vmatpush1.msra.mxu0 0.0
        %759 = vmatprep.subr.mxu0 0.0
        %760 = vmatpush1.msra.mxu0 0.0
        %761 = vmatprep.subr.mxu0 0.0
        %762 = vmatpush1.msra.mxu0 0.0
        %763 = vmatprep.subr.mxu0 0.0
        %764 = vmatpush1.msra.mxu0 0.0
        %765 = vmatprep.subr.mxu0 0.0
        %766 = vmatpush1.msra.mxu0 0.0
        %767 = vmatprep.subr.mxu0 0.0
        %768 = vmatpush1.msra.mxu0 0.0
        %769 = vmatprep.subr.mxu0 0.0
        %770 = vmatpush1.msra.mxu0 0.0
        %771 = vmatprep.subr.mxu0 0.0
        %772 = vmatpush1.msra.mxu0 0.0
        %773 = vmatprep.subr.mxu0 0.0
        %774 = vmatpush1.msra.mxu0 0.0
        %775 = vmatprep.subr.mxu0 0.0
        %776 = vmatpush1.msra.mxu0 0.0
        %777 = vmatprep.mubr.f32.mxu0 0.0
        %778 = vmatmul.mubr.f32.gmra.mrb[0].mxu0 %v584
        %v779 = vpop.f32.mrb[0].mxu0
        %v780 = vadd.f32 0.0, %v779
        %v781 = vpop.f32.mrb[0].mxu0
        %782 = vdwg.mxu0
        %v783 = vld [vmem:[%s6] sm:$0xf]
        %v784 = vld [vmem:[%s7] sm:$0x1]
        %v786 = vlaneseq
        %v787 = vshrl.u32 %v786, 7
        %v788 = vsub.s32 0, %v787
        %v789 = vrot.slane %v784, %v788
        %vm791 = vcmask 31744
        %v793 = vsel %vm791, %v780, 0
        %vm795 = vcmask 1043456
        %v797 = vsel %vm795, %v783, 0
        %799 = vmatprep.subr.mxu0 0.0
        %800 = vmatpush1.msra.mxu0 %v797
        %801 = vmatprep.subr.mxu0 0.0
        %802 = vmatpush1.msra.mxu0 0.0
        %803 = vmatprep.subr.mxu0 0.0
        %804 = vmatpush1.msra.mxu0 0.0
        %805 = vmatprep.subr.mxu0 0.0
        %806 = vmatpush1.msra.mxu0 0.0
        %807 = vmatprep.subr.mxu0 0.0
        %808 = vmatpush1.msra.mxu0 0.0
        %809 = vmatprep.subr.mxu0 0.0
        %810 = vmatpush1.msra.mxu0 0.0
        %811 = vmatprep.subr.mxu0 0.0
        %812 = vmatpush1.msra.mxu0 0.0
        %813 = vmatprep.subr.mxu0 0.0
        %814 = vmatpush1.msra.mxu0 0.0
        %815 = vmatprep.subr.mxu0 0.0
        %816 = vmatpush1.msra.mxu0 0.0
        %817 = vmatprep.subr.mxu0 0.0
        %818 = vmatpush1.msra.mxu0 0.0
        %819 = vmatprep.subr.mxu0 0.0
        %820 = vmatpush1.msra.mxu0 0.0
        %821 = vmatprep.subr.mxu0 0.0
        %822 = vmatpush1.msra.mxu0 0.0
        %823 = vmatprep.subr.mxu0 0.0
        %824 = vmatpush1.msra.mxu0 0.0
        %825 = vmatprep.subr.mxu0 0.0
        %826 = vmatpush1.msra.mxu0 0.0
        %827 = vmatprep.subr.mxu0 0.0
        %828 = vmatpush1.msra.mxu0 0.0
        %829 = vmatprep.subr.mxu0 0.0
        %830 = vmatpush1.msra.mxu0 0.0
        %831 = vmatprep.subr.mxu0 0.0
        %832 = vmatpush1.msra.mxu0 0.0
        %833 = vmatprep.subr.mxu0 0.0
        %834 = vmatpush1.msra.mxu0 0.0
        %835 = vmatprep.subr.mxu0 0.0
        %836 = vmatpush1.msra.mxu0 0.0
        %837 = vmatprep.subr.mxu0 0.0
        %838 = vmatpush1.msra.mxu0 0.0
        %839 = vmatprep.subr.mxu0 0.0
        %840 = vmatpush1.msra.mxu0 0.0
        %841 = vmatprep.subr.mxu0 0.0
        %842 = vmatpush1.msra.mxu0 0.0
        %843 = vmatprep.subr.mxu0 0.0
        %844 = vmatpush1.msra.mxu0 0.0
        %845 = vmatprep.subr.mxu0 0.0
        %846 = vmatpush1.msra.mxu0 0.0
        %847 = vmatprep.subr.mxu0 0.0
        %848 = vmatpush1.msra.mxu0 0.0
        %849 = vmatprep.subr.mxu0 0.0
        %850 = vmatpush1.msra.mxu0 0.0
        %851 = vmatprep.subr.mxu0 0.0
        %852 = vmatpush1.msra.mxu0 0.0
        %853 = vmatprep.subr.mxu0 0.0
        %854 = vmatpush1.msra.mxu0 0.0
        %855 = vmatprep.subr.mxu0 0.0
        %856 = vmatpush1.msra.mxu0 0.0
        %857 = vmatprep.subr.mxu0 0.0
        %858 = vmatpush1.msra.mxu0 0.0
        %859 = vmatprep.subr.mxu0 0.0
        %860 = vmatpush1.msra.mxu0 0.0
        %861 = vmatprep.subr.mxu0 0.0
        %862 = vmatpush1.msra.mxu0 0.0
        %863 = vmatprep.mubr.f32.mxu0 0.0
        %864 = vmatmul.mubr.f32.gmra.mrb[0].mxu0 %v793
        %v865 = vpop.f32.mrb[0].mxu0
        %v866 = vadd.f32 %v789, %v865
        %v867 = vpop.f32.mrb[0].mxu0
        %868 = vdwg.mxu0
        %vm869 = vcmp.gt.f32.partialorder %v866, 20.0
        %v870 = vmin.f32 %v866, 20.0
        %v871 = vmul.f32 %v870, 1.442695
        %v872 = vpow.pop %v871
        %v873 = vadd.f32 %v872, 1.0
        %v874 = vlog2.pop %v873
        %v875 = vmul.f32 %v874, 0.6931472
        %v876 = vsel %vm869, %v866, %v875
        %877 = vst [vmem:[#allocation2] sm:$0xff] %v876
        %v878 = vmul.f32 %v876, %v584
        %879 = vst [vmem:[#allocation3] sm:$0xff] %v878
        %v880 = vld [vmem:[%s8] sm:$0xff]
        %v881 = vld [vmem:[%s8 + $0x8] sm:$0xff]
        %v882 = vld [vmem:[#allocation2] sm:$0xff]
        %v883 = vld [vmem:[#allocation3] sm:$0xff]
        %v884 = vld [vmem:[#allocation4] sm:$0xff]
        %v885 = vld [vmem:[#allocation5] sm:$0xff]
        %v886 = vlaneseq
        %v887 = vshrl.u32 %v886, 7
        %v888 = vsub.s32 0, %v887
        %v889 = vrot.slane %v884, %v888
        %891 = vbcast.lane.b32.xlu0 %v889, 256
        %v892 = vpop.permute.xlu0 %891
        %s894 = sor.u32 256, 8
        %895 = vbcast.lane.b32.xlu0 %v889, %s894
        %v896 = vpop.permute.xlu0 %895
        %v897 = vlaneseq
        %v898 = vshrl.u32 %v897, 7
        %v899 = vsub.s32 1, %v898
        %v900 = vrot.slane %v884, %v899
        %902 = vbcast.lane.b32.xlu0 %v900, 256
        %v903 = vpop.permute.xlu0 %902
        %s905 = sor.u32 256, 8
        %906 = vbcast.lane.b32.xlu0 %v900, %s905
        %v907 = vpop.permute.xlu0 %906
        %v908 = vlaneseq
        %v909 = vshrl.u32 %v908, 7
        %v910 = vsub.s32 2, %v909
        %v911 = vrot.slane %v884, %v910
        %913 = vbcast.lane.b32.xlu0 %v911, 256
        %v914 = vpop.permute.xlu0 %913
        %s916 = sor.u32 256, 8
        %917 = vbcast.lane.b32.xlu0 %v911, %s916
        %v918 = vpop.permute.xlu0 %917
        %v919 = vlaneseq
        %v920 = vshrl.u32 %v919, 7
        %v921 = vsub.s32 3, %v920
        %v922 = vrot.slane %v884, %v921
        %924 = vbcast.lane.b32.xlu0 %v922, 256
        %v925 = vpop.permute.xlu0 %924
        %s927 = sor.u32 256, 8
        %928 = vbcast.lane.b32.xlu0 %v922, %s927
        %v929 = vpop.permute.xlu0 %928
        %v930 = vlaneseq
        %v931 = vshrl.u32 %v930, 7
        %v932 = vsub.s32 4, %v931
        %v933 = vrot.slane %v884, %v932
        %935 = vbcast.lane.b32.xlu0 %v933, 256
        %v936 = vpop.permute.xlu0 %935
        %s938 = sor.u32 256, 8
        %939 = vbcast.lane.b32.xlu0 %v933, %s938
        %v940 = vpop.permute.xlu0 %939
        %v941 = vlaneseq
        %v942 = vshrl.u32 %v941, 7
        %v943 = vsub.s32 5, %v942
        %v944 = vrot.slane %v884, %v943
        %946 = vbcast.lane.b32.xlu0 %v944, 256
        %v947 = vpop.permute.xlu0 %946
        %s949 = sor.u32 256, 8
        %950 = vbcast.lane.b32.xlu0 %v944, %s949
        %v951 = vpop.permute.xlu0 %950
        %v952 = vlaneseq
        %v953 = vshrl.u32 %v952, 7
        %v954 = vsub.s32 6, %v953
        %v955 = vrot.slane %v884, %v954
        %957 = vbcast.lane.b32.xlu0 %v955, 256
        %v958 = vpop.permute.xlu0 %957
        %s960 = sor.u32 256, 8
        %961 = vbcast.lane.b32.xlu0 %v955, %s960
        %v962 = vpop.permute.xlu0 %961
        %v963 = vlaneseq
        %v964 = vshrl.u32 %v963, 7
        %v965 = vsub.s32 7, %v964
        %v966 = vrot.slane %v884, %v965
        %968 = vbcast.lane.b32.xlu0 %v966, 256
        %v969 = vpop.permute.xlu0 %968
        %s971 = sor.u32 256, 8
        %972 = vbcast.lane.b32.xlu0 %v966, %s971
        %v973 = vpop.permute.xlu0 %972
        %v974 = vlaneseq
        %v975 = vshrl.u32 %v974, 7
        %v976 = vsub.s32 0, %v975
        %v977 = vrot.slane %v885, %v976
        %979 = vbcast.lane.b32.xlu0 %v977, 256
        %v980 = vpop.permute.xlu0 %979
        %s982 = sor.u32 256, 8
        %983 = vbcast.lane.b32.xlu0 %v977, %s982
        %v984 = vpop.permute.xlu0 %983
        %v985 = vlaneseq
        %v986 = vshrl.u32 %v985, 7
        %v987 = vsub.s32 1, %v986
        %v988 = vrot.slane %v885, %v987
        %990 = vbcast.lane.b32.xlu0 %v988, 256
        %v991 = vpop.permute.xlu0 %990
        %s993 = sor.u32 256, 8
        %994 = vbcast.lane.b32.xlu0 %v988, %s993
        %v995 = vpop.permute.xlu0 %994
        %v996 = vlaneseq
        %v997 = vshrl.u32 %v996, 7
        %v998 = vsub.s32 2, %v997
        %v999 = vrot.slane %v885, %v998
        %1001 = vbcast.lane.b32.xlu0 %v999, 256
        %v1002 = vpop.permute.xlu0 %1001
        %s1004 = sor.u32 256, 8
        %1005 = vbcast.lane.b32.xlu0 %v999, %s1004
        %v1006 = vpop.permute.xlu0 %1005
        %v1007 = vlaneseq
        %v1008 = vshrl.u32 %v1007, 7
        %v1009 = vsub.s32 3, %v1008
        %v1010 = vrot.slane %v885, %v1009
        %1012 = vbcast.lane.b32.xlu0 %v1010, 256
        %v1013 = vpop.permute.xlu0 %1012
        %s1015 = sor.u32 256, 8
        %1016 = vbcast.lane.b32.xlu0 %v1010, %s1015
        %v1017 = vpop.permute.xlu0 %1016
        %v1018 = vlaneseq
        %v1019 = vshrl.u32 %v1018, 7
        %v1020 = vsub.s32 4, %v1019
        %v1021 = vrot.slane %v885, %v1020
        %1023 = vbcast.lane.b32.xlu0 %v1021, 256
        %v1024 = vpop.permute.xlu0 %1023
        %s1026 = sor.u32 256, 8
        %1027 = vbcast.lane.b32.xlu0 %v1021, %s1026
        %v1028 = vpop.permute.xlu0 %1027
        %v1029 = vlaneseq
        %v1030 = vshrl.u32 %v1029, 7
        %v1031 = vsub.s32 5, %v1030
        %v1032 = vrot.slane %v885, %v1031
        %1034 = vbcast.lane.b32.xlu0 %v1032, 256
        %v1035 = vpop.permute.xlu0 %1034
        %s1037 = sor.u32 256, 8
        %1038 = vbcast.lane.b32.xlu0 %v1032, %s1037
        %v1039 = vpop.permute.xlu0 %1038
        %v1040 = vlaneseq
        %v1041 = vshrl.u32 %v1040, 7
        %v1042 = vsub.s32 6, %v1041
        %v1043 = vrot.slane %v885, %v1042
        %1045 = vbcast.lane.b32.xlu0 %v1043, 256
        %v1046 = vpop.permute.xlu0 %1045
        %s1048 = sor.u32 256, 8
        %1049 = vbcast.lane.b32.xlu0 %v1043, %s1048
        %v1050 = vpop.permute.xlu0 %1049
        %v1051 = vlaneseq
        %v1052 = vshrl.u32 %v1051, 7
        %v1053 = vsub.s32 7, %v1052
        %v1054 = vrot.slane %v885, %v1053
        %1056 = vbcast.lane.b32.xlu0 %v1054, 256
        %v1057 = vpop.permute.xlu0 %1056
        %s1059 = sor.u32 256, 8
        %1060 = vbcast.lane.b32.xlu0 %v1054, %s1059
        %v1061 = vpop.permute.xlu0 %1060
        %v1062 = vld [vmem:[#allocation7] sm:$0xff]
        %v1063 = vld [vmem:[#allocation7 + $0x8] sm:$0xff]
        %v1064 = vlaneseq
        %v1065 = vshrl.u32 %v1064, 7
        %v1066 = vsub.s32 0, %v1065
        %v1067 = vrot.slane %v882, %v1066
        %v1068 = vmul.f32 %v1067, %v880
        %v1069 = vmul.f32 %v1067, %v881
        %v1070 = vmul.f32 %v1068, 1.442695
        %v1071 = vpow.pop %v1070
        %v1072 = vmul.f32 %v1069, 1.442695
        %v1073 = vpow.pop %v1072
        %v1074 = vlaneseq
        %v1075 = vshrl.u32 %v1074, 7
        %v1076 = vsub.s32 0, %v1075
        %v1077 = vrot.slane %v883, %v1076
        %v1078 = vmul.f32 %v892, %v1077
        %v1079 = vmul.f32 %v896, %v1077
        %v1080 = vmul.f32 %v1062, %v1071
        %v1081 = vmul.f32 %v1063, %v1073
        %v1082 = vadd.f32 %v1080, %v1078
        %v1083 = vadd.f32 %v1081, %v1079
        %v1084 = vmul.f32 %v1082, %v980
        %v1085 = vmul.f32 %v1083, %v984
        %v1086 = vadd.f32 %v1084, %v1085
        %v1087 = vrot.slane %v1086, 4
        %v1088 = vadd.f32 %v1086, %v1087
        %v1089 = vrot.slane %v1088, 2
        %v1090 = vadd.f32 %v1088, %v1089
        %v1091 = vrot.slane %v1090, 1
        %v1092 = vadd.f32 %v1090, %v1091
        %v1093 = vlaneseq
        %v1094 = vshrl.u32 %v1093, 7
        %v1095 = vsub.s32 1, %v1094
        %v1096 = vrot.slane %v882, %v1095
        %v1097 = vmul.f32 %v1096, %v880
        %v1098 = vmul.f32 %v1096, %v881
        %v1099 = vmul.f32 %v1097, 1.442695
        %v1100 = vpow.pop %v1099
        %v1101 = vmul.f32 %v1098, 1.442695
        %v1102 = vpow.pop %v1101
        %v1103 = vlaneseq
        %v1104 = vshrl.u32 %v1103, 7
        %v1105 = vsub.s32 1, %v1104
        %v1106 = vrot.slane %v883, %v1105
        %v1107 = vmul.f32 %v903, %v1106
        %v1108 = vmul.f32 %v907, %v1106
        %v1109 = vmul.f32 %v1082, %v1100
        %v1110 = vmul.f32 %v1083, %v1102
        %v1111 = vadd.f32 %v1109, %v1107
        %v1112 = vadd.f32 %v1110, %v1108
        %v1113 = vmul.f32 %v1111, %v991
        %v1114 = vmul.f32 %v1112, %v995
        %v1115 = vadd.f32 %v1113, %v1114
        %v1116 = vrot.slane %v1115, 4
        %v1117 = vadd.f32 %v1115, %v1116
        %v1118 = vrot.slane %v1117, 2
        %v1119 = vadd.f32 %v1117, %v1118
        %v1120 = vrot.slane %v1119, 1
        %v1121 = vadd.f32 %v1119, %v1120
        %v1122 = vlaneseq
        %v1123 = vshrl.u32 %v1122, 7
        %v1124 = vsub.s32 2, %v1123
        %v1125 = vrot.slane %v882, %v1124
        %v1126 = vmul.f32 %v1125, %v880
        %v1127 = vmul.f32 %v1125, %v881
        %v1128 = vmul.f32 %v1126, 1.442695
        %v1129 = vpow.pop %v1128
        %v1130 = vmul.f32 %v1127, 1.442695
        %v1131 = vpow.pop %v1130
        %v1132 = vlaneseq
        %v1133 = vshrl.u32 %v1132, 7
        %v1134 = vsub.s32 2, %v1133
        %v1135 = vrot.slane %v883, %v1134
        %v1136 = vmul.f32 %v914, %v1135
        %v1137 = vmul.f32 %v918, %v1135
        %v1138 = vmul.f32 %v1111, %v1129
        %v1139 = vmul.f32 %v1112, %v1131
        %v1140 = vadd.f32 %v1138, %v1136
        %v1141 = vadd.f32 %v1139, %v1137
        %v1142 = vmul.f32 %v1140, %v1002
        %v1143 = vmul.f32 %v1141, %v1006
        %v1144 = vadd.f32 %v1142, %v1143
        %v1145 = vrot.slane %v1144, 4
        %v1146 = vadd.f32 %v1144, %v1145
        %v1147 = vrot.slane %v1146, 2
        %v1148 = vadd.f32 %v1146, %v1147
        %v1149 = vrot.slane %v1148, 1
        %v1150 = vadd.f32 %v1148, %v1149
        %v1151 = vlaneseq
        %v1152 = vshrl.u32 %v1151, 7
        %v1153 = vsub.s32 3, %v1152
        %v1154 = vrot.slane %v882, %v1153
        %v1155 = vmul.f32 %v1154, %v880
        %v1156 = vmul.f32 %v1154, %v881
        %v1157 = vmul.f32 %v1155, 1.442695
        %v1158 = vpow.pop %v1157
        %v1159 = vmul.f32 %v1156, 1.442695
        %v1160 = vpow.pop %v1159
        %v1161 = vlaneseq
        %v1162 = vshrl.u32 %v1161, 7
        %v1163 = vsub.s32 3, %v1162
        %v1164 = vrot.slane %v883, %v1163
        %v1165 = vmul.f32 %v925, %v1164
        %v1166 = vmul.f32 %v929, %v1164
        %v1167 = vmul.f32 %v1140, %v1158
        %v1168 = vmul.f32 %v1141, %v1160
        %v1169 = vadd.f32 %v1167, %v1165
        %v1170 = vadd.f32 %v1168, %v1166
        %v1171 = vmul.f32 %v1169, %v1013
        %v1172 = vmul.f32 %v1170, %v1017
        %v1173 = vadd.f32 %v1171, %v1172
        %v1174 = vrot.slane %v1173, 4
        %v1175 = vadd.f32 %v1173, %v1174
        %v1176 = vrot.slane %v1175, 2
        %v1177 = vadd.f32 %v1175, %v1176
        %v1178 = vrot.slane %v1177, 1
        %v1179 = vadd.f32 %v1177, %v1178
        %v1180 = vlaneseq
        %v1181 = vshrl.u32 %v1180, 7
        %v1182 = vsub.s32 4, %v1181
        %v1183 = vrot.slane %v882, %v1182
        %v1184 = vmul.f32 %v1183, %v880
        %v1185 = vmul.f32 %v1183, %v881
        %v1186 = vmul.f32 %v1184, 1.442695
        %v1187 = vpow.pop %v1186
        %v1188 = vmul.f32 %v1185, 1.442695
        %v1189 = vpow.pop %v1188
        %v1190 = vlaneseq
        %v1191 = vshrl.u32 %v1190, 7
        %v1192 = vsub.s32 4, %v1191
        %v1193 = vrot.slane %v883, %v1192
        %v1194 = vmul.f32 %v936, %v1193
        %v1195 = vmul.f32 %v940, %v1193
        %v1196 = vmul.f32 %v1169, %v1187
        %v1197 = vmul.f32 %v1170, %v1189
        %v1198 = vadd.f32 %v1196, %v1194
        %v1199 = vadd.f32 %v1197, %v1195
        %v1200 = vmul.f32 %v1198, %v1024
        %v1201 = vmul.f32 %v1199, %v1028
        %v1202 = vadd.f32 %v1200, %v1201
        %v1203 = vrot.slane %v1202, 4
        %v1204 = vadd.f32 %v1202, %v1203
        %v1205 = vrot.slane %v1204, 2
        %v1206 = vadd.f32 %v1204, %v1205
        %v1207 = vrot.slane %v1206, 1
        %v1208 = vadd.f32 %v1206, %v1207
        %v1209 = vlaneseq
        %v1210 = vshrl.u32 %v1209, 7
        %v1211 = vsub.s32 5, %v1210
        %v1212 = vrot.slane %v882, %v1211
        %v1213 = vmul.f32 %v1212, %v880
        %v1214 = vmul.f32 %v1212, %v881
        %v1215 = vmul.f32 %v1213, 1.442695
        %v1216 = vpow.pop %v1215
        %v1217 = vmul.f32 %v1214, 1.442695
        %v1218 = vpow.pop %v1217
        %v1219 = vlaneseq
        %v1220 = vshrl.u32 %v1219, 7
        %v1221 = vsub.s32 5, %v1220
        %v1222 = vrot.slane %v883, %v1221
        %v1223 = vmul.f32 %v947, %v1222
        %v1224 = vmul.f32 %v951, %v1222
        %v1225 = vmul.f32 %v1198, %v1216
        %v1226 = vmul.f32 %v1199, %v1218
        %v1227 = vadd.f32 %v1225, %v1223
        %v1228 = vadd.f32 %v1226, %v1224
        %v1229 = vmul.f32 %v1227, %v1035
        %v1230 = vmul.f32 %v1228, %v1039
        %v1231 = vadd.f32 %v1229, %v1230
        %v1232 = vrot.slane %v1231, 4
        %v1233 = vadd.f32 %v1231, %v1232
        %v1234 = vrot.slane %v1233, 2
        %v1235 = vadd.f32 %v1233, %v1234
        %v1236 = vrot.slane %v1235, 1
        %v1237 = vadd.f32 %v1235, %v1236
        %v1238 = vlaneseq
        %v1239 = vshrl.u32 %v1238, 7
        %v1240 = vsub.s32 6, %v1239
        %v1241 = vrot.slane %v882, %v1240
        %v1242 = vmul.f32 %v1241, %v880
        %v1243 = vmul.f32 %v1241, %v881
        %v1244 = vmul.f32 %v1242, 1.442695
        %v1245 = vpow.pop %v1244
        %v1246 = vmul.f32 %v1243, 1.442695
        %v1247 = vpow.pop %v1246
        %v1248 = vlaneseq
        %v1249 = vshrl.u32 %v1248, 7
        %v1250 = vsub.s32 6, %v1249
        %v1251 = vrot.slane %v883, %v1250
        %v1252 = vmul.f32 %v958, %v1251
        %v1253 = vmul.f32 %v962, %v1251
        %v1254 = vmul.f32 %v1227, %v1245
        %v1255 = vmul.f32 %v1228, %v1247
        %v1256 = vadd.f32 %v1254, %v1252
        %v1257 = vadd.f32 %v1255, %v1253
        %v1258 = vmul.f32 %v1256, %v1046
        %v1259 = vmul.f32 %v1257, %v1050
        %v1260 = vadd.f32 %v1258, %v1259
        %v1261 = vrot.slane %v1260, 4
        %v1262 = vadd.f32 %v1260, %v1261
        %v1263 = vrot.slane %v1262, 2
        %v1264 = vadd.f32 %v1262, %v1263
        %v1265 = vrot.slane %v1264, 1
        %v1266 = vadd.f32 %v1264, %v1265
        %v1267 = vlaneseq
        %v1268 = vshrl.u32 %v1267, 7
        %v1269 = vsub.s32 7, %v1268
        %v1270 = vrot.slane %v882, %v1269
        %v1271 = vmul.f32 %v1270, %v880
        %v1272 = vmul.f32 %v1270, %v881
        %v1273 = vmul.f32 %v1271, 1.442695
        %v1274 = vpow.pop %v1273
        %v1275 = vmul.f32 %v1272, 1.442695
        %v1276 = vpow.pop %v1275
        %v1277 = vlaneseq
        %v1278 = vshrl.u32 %v1277, 7
        %v1279 = vsub.s32 7, %v1278
        %v1280 = vrot.slane %v883, %v1279
        %v1281 = vmul.f32 %v969, %v1280
        %v1282 = vmul.f32 %v973, %v1280
        %v1283 = vmul.f32 %v1256, %v1274
        %v1284 = vmul.f32 %v1257, %v1276
        %v1285 = vadd.f32 %v1283, %v1281
        %v1286 = vadd.f32 %v1284, %v1282
        %v1287 = vmul.f32 %v1285, %v1057
        %v1288 = vmul.f32 %v1286, %v1061
        %v1289 = vadd.f32 %v1287, %v1288
        %v1290 = vrot.slane %v1289, 4
        %v1291 = vadd.f32 %v1289, %v1290
        %v1292 = vrot.slane %v1291, 2
        %v1293 = vadd.f32 %v1291, %v1292
        %v1294 = vrot.slane %v1293, 1
        %v1295 = vadd.f32 %v1293, %v1294
        %1296 = vst [vmem:[#allocation7] sm:$0xff] %v1285
        %1297 = vst [vmem:[#allocation7 + $0x8] sm:$0xff] %v1286
        %vm1298 = vcmask 1040384
        %v1299 = vsel %vm1298, %v1092, %v1121
        %vm1300 = vcmask 1041408
        %v1301 = vsel %vm1300, %v1299, %v1150
        %v1302 = vsel %vm516, %v1301, %v1179
        %v1303 = vsel %vm795, %v1302, %v1208
        %v1304 = vsel %vm571, %v1303, %v1237
        %v1305 = vsel %vm556, %v1304, %v1266
        %v1306 = vsel %vm541, %v1305, %v1295
        %1307 = vst [vmem:[#allocation6] sm:$0xff] %v1306
        %v1308 = vld [vmem:[#allocation6] sm:$0xff]
        %v1309 = vld [vmem:[%s9] sm:$0x1]
        %v1311 = vlaneseq
        %v1312 = vshrl.u32 %v1311, 7
        %v1313 = vsub.s32 0, %v1312
        %v1314 = vrot.slane %v1309, %v1313
        %v1316 = vmul.f32 %v584, %v1314
        %v1317 = vadd.f32 %v1308, %v1316
        %v1318 = vsub.f32 0.0, %v508
        %v1319 = vmul.f32 %v1318, 1.442695
        %v1320 = vpow.pop %v1319
        %v1321 = vadd.f32 %v1320, 1.0
        %v1322 = vrcp.pop %v1321
        %v1323 = vmul.f32 1.0, %v1322
        %v1324 = vmul.f32 %v508, %v1323
        %v1325 = vmul.f32 %v1317, %v1324
        %v1326 = vpack.c.bf16 %v1325, %v1325
        %v1327 = vld [vmem:[%s10] sm:$0xf]
        %v1328 = vld [vmem:[%s10 + $0x4] sm:$0xf]
        %v1329 = vld [vmem:[%s10 + $0x8] sm:$0xf]
        %v1330 = vld [vmem:[%s10 + $0xc] sm:$0xf]
        %v1331 = vld [vmem:[%s10 + $0x10] sm:$0xf]
        %v1332 = vld [vmem:[%s10 + $0x14] sm:$0xf]
        %v1333 = vld [vmem:[%s10 + $0x18] sm:$0xf]
        %v1334 = vld [vmem:[%s10 + $0x1c] sm:$0xf]
        %v1335 = vld [vmem:[%s10 + $0x20] sm:$0xf]
        %v1336 = vld [vmem:[%s10 + $0x24] sm:$0xf]
        %v1337 = vld [vmem:[%s10 + $0x28] sm:$0xf]
        %v1338 = vld [vmem:[%s10 + $0x2c] sm:$0xf]
        %v1339 = vld [vmem:[%s10 + $0x30] sm:$0xf]
        %v1340 = vld [vmem:[%s10 + $0x34] sm:$0xf]
        %v1341 = vld [vmem:[%s10 + $0x38] sm:$0xf]
        %v1342 = vld [vmem:[%s10 + $0x3c] sm:$0xf]
        %v1359 = vunpack.c.l.b16 %v1327
        %v1360 = vunpack.c.l.b16 %v1328
        %v1361 = vunpack.c.l.b16 %v1329
        %v1362 = vunpack.c.l.b16 %v1330
        %v1363 = vunpack.c.l.b16 %v1331
        %v1364 = vunpack.c.l.b16 %v1332
        %v1365 = vunpack.c.l.b16 %v1333
        %v1366 = vunpack.c.l.b16 %v1334
        %v1367 = vunpack.c.l.b16 %v1335
        %v1368 = vunpack.c.l.b16 %v1336
        %v1369 = vunpack.c.l.b16 %v1337
        %v1370 = vunpack.c.l.b16 %v1338
        %v1371 = vunpack.c.l.b16 %v1339
        %v1372 = vunpack.c.l.b16 %v1340
        %v1373 = vunpack.c.l.b16 %v1341
        %v1374 = vunpack.c.l.b16 %v1342
        %v1375 = vpack.c.b16 %v1360, %v1359
        %v1376 = vpack.c.b16 %v1362, %v1361
        %v1377 = vpack.c.b16 %v1364, %v1363
        %v1378 = vpack.c.b16 %v1366, %v1365
        %v1379 = vpack.c.b16 %v1368, %v1367
        %v1380 = vpack.c.b16 %v1370, %v1369
        %v1381 = vpack.c.b16 %v1372, %v1371
        %v1382 = vpack.c.b16 %v1374, %v1373
        %1391 = vmatprep.subr.bf16.mxu0 0
        %1392 = vmatpush1.bf16.msra.mxu0 %v1375
        %1393 = vmatprep.subr.bf16.mxu0 0
        %1394 = vmatpush1.bf16.msra.mxu0 %v1376
        %1395 = vmatprep.subr.bf16.mxu0 0
        %1396 = vmatpush1.bf16.msra.mxu0 %v1377
        %1397 = vmatprep.subr.bf16.mxu0 0
        %1398 = vmatpush1.bf16.msra.mxu0 %v1378
        %1399 = vmatprep.subr.bf16.mxu0 0
        %1400 = vmatpush1.bf16.msra.mxu0 %v1379
        %1401 = vmatprep.subr.bf16.mxu0 0
        %1402 = vmatpush1.bf16.msra.mxu0 %v1380
        %1403 = vmatprep.subr.bf16.mxu0 0
        %1404 = vmatpush1.bf16.msra.mxu0 %v1381
        %1405 = vmatprep.subr.bf16.mxu0 0
        %1406 = vmatpush1.bf16.msra.mxu0 %v1382
        %1407 = vmatprep.subr.bf16.mxu0 0
        %1408 = vmatpush1.bf16.msra.mxu0 0
        %1409 = vmatprep.subr.bf16.mxu0 0
        %1410 = vmatpush1.bf16.msra.mxu0 0
        %1411 = vmatprep.subr.bf16.mxu0 0
        %1412 = vmatpush1.bf16.msra.mxu0 0
        %1413 = vmatprep.subr.bf16.mxu0 0
        %1414 = vmatpush1.bf16.msra.mxu0 0
        %1415 = vmatprep.subr.bf16.mxu0 0
        %1416 = vmatpush1.bf16.msra.mxu0 0
        %1417 = vmatprep.subr.bf16.mxu0 0
        %1418 = vmatpush1.bf16.msra.mxu0 0
        %1419 = vmatprep.subr.bf16.mxu0 0
        %1420 = vmatpush1.bf16.msra.mxu0 0
        %1421 = vmatprep.subr.bf16.mxu0 0
        %1422 = vmatpush1.bf16.msra.mxu0 0
        %1423 = vmatprep.mubr.bf16.mxu0 0
        %1424 = vmatmul.mubr.bf16.gmra.mrb[0].mxu0 %v1326
        %v1425 = vpop.f32.mrb[0].mxu0
        %v1426 = vadd.f32 0.0, %v1425
        %v1427 = vpop.f32.mrb[0].mxu0
        %v1428 = vpop.f32.mrb[0].mxu0
        %v1429 = vpop.f32.mrb[0].mxu0
        %1430 = vdwg.mxu0
        %1431 = vst.msk [vmem:[%s401] sm:$0xff] %vm467, %v1426
        %s1432 = sand.u32 %s285, 1
        %s1433 = scalar_lea.sflag [#allocation10], %s1432
        %s1434 = sand.u32 %s285, 1
        %s1435 = smul.addr %s1434, 8
        %s1436 = scalar_lea.vmem [#allocation9], %s1435
        // Predicated region
        $region69: #{tpu_custom_call.1} parent=63 // pred_check
          %p1437 = pneg %p295
        $region70: #{tpu_custom_call.1} parent=63 // pred_check_branch
          %1439 = sbr.rel (%p1437) target = $region72
        $region71: #{tpu_custom_call.1} parent=63 // pred_region
          %s1441 = ssub.s32 128, 128
          %1442 = vsyncadd %s1433, %s1441
          %s1443 = smul.addr %s29, 2
          %s1444 = sadd.s32 %s30, %s1443
          %s1445 = smul.addr %s1444, 128
          %s1446 = scalar_lea.hbm %s11, %s1445
          %s1448 = sshll.u32 %s1436, 4
          %s1449 = int_to_ptr.vmem [resolvable:$true] %s1448
          %1451 = dma.vmem_to_hbm [thread:$0]  %s1449, 128, %s1446, %s1433
        $region72: #{tpu_custom_call.1} parent=63 // pred_fallthru
          _
      $region64: #{tpu_custom_call.1} parent=5 // pred_fallthru
        _
      %p1452 = scmp.le.s32.totalorder 2, %s20
      // Predicated region
      $region73: #{tpu_custom_call.1} parent=5 // pred_check
        %p1453 = pneg %p1452
      $region74: #{tpu_custom_call.1} parent=5 // pred_check_branch
        %1455 = sbr.rel (%p1453) target = $region76
      $region75: #{tpu_custom_call.1} parent=5 // pred_region
        %s1456 = ssub.s32 %s20, 2
        // Predicated region
        $region77: #{tpu_custom_call.1} parent=75 // pred_check
          %p1457 = pneg %p301
        $region78: #{tpu_custom_call.1} parent=75 // pred_check_branch
          %1459 = sbr.rel (%p1457) target = $region80
        $region79: #{tpu_custom_call.1} parent=75 // pred_region
          %s1460 = sand.u32 %s286, 1
          %s1461 = scalar_lea.sflag [#allocation10], %s1460
          %s1462 = sand.u32 %s286, 1
          %s1463 = smul.addr %s1462, 8
          %s1464 = scalar_lea.vmem [#allocation9], %s1463
          %1465 = dma.done %s1461, 128
        $region80: #{tpu_custom_call.1} parent=75 // pred_fallthru
          _
      $region76: #{tpu_custom_call.1} parent=5 // pred_fallthru
        _
    $region6: #{tpu_custom_call.1} parent=1 // loop_footer
      %s24 = sadd.s32 1, %s20
    $region7: #{tpu_custom_call.1} parent=1 // loop_footer_branch
      %19 = sbr.rel target = $region3
    $region8: #{tpu_custom_call.1} parent=1 // loop_exit
      _
    %1466 = vsyncpa [#allocation10], 1
    %s1467 = scalar_lea.sflag [#allocation10], 1
    %1468 = vsyncpa %s1467, 1

</llo_original>
